<compile_context>
chip_gen: v7x
topology: tpu7x:2x2x1
jax: 0.10.0
libtpu: 0.0.40
codegen_flags: <defaults>
</compile_context>

<pallas_src>
import functools

import jax
import jax.numpy as jnp
from jax.experimental import pallas as pl
from jax.experimental.pallas import tpu as pltpu

# Keep matmuls in true f32 so the kernel matches the exact reference (review #10:
# drop to default precision / bf16 in production once tolerance allows).
jax.config.update("jax_default_matmul_precision", "highest")


# ----------------------------- Pallas kernel --------------------------------
def _attention_block_kernel(x_ref,
                            wqk_ref, bqk_ref, wv2_ref, nvec_ref,
                            w1t_ref, fb1_ref, w2t_ref, dvec_ref,
                            o_ref, *, eps):
    tb, n, d = x_ref.shape
    m = tb * n

    # ---- weight loads hoisted once per grid step (shared by the whole tile)
    wqk = wqk_ref[...]            # (D, 2*Dl)  fused [Wq^T | Wk^T]
    bqk = bqk_ref[...]            # (1, 2*Dl)  fused [bq | bk]
    wv2 = wv2_ref[...]            # (2*Dl, 2)  col0 -> q-score, col1 -> k-score
    nvec = nvec_ref[...]          # (N, 2)     col0 = idx_i term + b_v, col1 = idx_j term
    w1t = w1t_ref[...]            # (D, H)
    fb1 = fb1_ref[...]            # (1, H)
    w2t = w2t_ref[...]            # (H, D)
    dvec = dvec_ref[...]          # (8, D)     packed [g1, be1, b2, g2, be2, 0, 0, 0]
    g1, be1 = dvec[0:1, :], dvec[1:2, :]
    fb2 = dvec[2:3, :]
    g2, be2 = dvec[3:4, :], dvec[4:5, :]

    def layer_norm(v, g, b):
        mu = jnp.mean(v, axis=-1, keepdims=True)
        c = v - mu
        var = jnp.mean(c * c, axis=-1, keepdims=True)
        return c * jax.lax.rsqrt(var + eps) * g + b

    x3 = x_ref[...]                                  # (TB, N, D)
    x2 = x3.reshape(m, d)                            # flat slab (M, D)

    # ---- fused q/k projection: one batched matmul + one lane-dense tanh (M, 128)
    qkf = jnp.tanh(jnp.dot(x2, wqk, preferred_element_type=jnp.float32) + bqk)

    # ---- per-row / per-col Bahdanau score terms in ONE matmul: (M, 2)
    s2 = jnp.dot(qkf, wv2, preferred_element_type=jnp.float32)
    s3 = s2.reshape(tb, n, 2) + nvec                 # fold one-hot/idx terms + bias

    # ---- logits[b,i,j] = s3[b,i,0] + s3[b,j,1] via batched rank-2 dot:
    #      qa[b,i] = [q_term, 1], kb[b,j] = [1, k_term]  ->  'bid,bjd->bij'
    col = jax.lax.broadcasted_iota(jnp.int32, (tb, n, 2), 2)
    qa = jnp.where(col == 0, s3, 1.0)
    kb = jnp.where(col == 0, 1.0, s3)
    logits = jax.lax.dot_general(qa, kb, (((2,), (2,)), ((0,), (0,))),
                                 preferred_element_type=jnp.float32)   # (TB, N, N)

    # ---- softmax over j
    mx = jnp.max(logits, axis=-1, keepdims=True)
    e = jnp.exp(logits - mx)
    w = e * pl.reciprocal(jnp.sum(e, axis=-1, keepdims=True), approx=False)

    # ---- attention output + residual -> norm1   (batched 'bij,bjd->bid' dot)
    attn = jax.lax.dot_general(w, x3, (((2,), (1,)), ((0,), (0,))),
                               preferred_element_type=jnp.float32)     # (TB, N, D)
    h1 = layer_norm((attn + x3).reshape(m, d), g1, be1)                # (M, D)

    # ---- feed-forward (batched slab matmuls) + residual with the ORIGINAL input -> norm2
    ff = jnp.maximum(jnp.dot(h1, w1t, preferred_element_type=jnp.float32) + fb1, 0.0)
    ff = jnp.dot(ff, w2t, preferred_element_type=jnp.float32) + fb2
    out = layer_norm(ff + x2, g2, be2)

    o_ref[...] = out.reshape(tb, n, d)


# ------------------------------- wrapper -------------------------------------
def attention_block(in_obs, params, *, tile_b=None):
    """in_obs: (B, num_indices, in_dim). Returns (B, num_indices, in_dim)."""
    (w_q, b_q, w_k, b_k, w_v, b_v,
     g1, be1, w1, fb1, w2, fb2, g2, be2) = params
    B, N, D = in_obs.shape
    Dl = w_q.shape[0]                       # latent_dim
    H = w1.shape[0]                         # ff hidden dim (4*D)
    f32 = jnp.float32

    # tile_b: aim for ~256 rows per grid step (MXU alignment on v6e/v7x, and a
    # multiple of 128 for v5e) while keeping >= 2 grid steps for v7x megacore.
    if tile_b is None:
        target = max(1, 256 // max(N, 1))
        tile_b = max(1, min(target, max(1, B // 2)))

    x = in_obs.astype(f32)
    pad = (-B) % tile_b
    if pad:                                 # pad batch so the grid divides evenly
        x = jnp.concatenate([x, jnp.zeros((pad, N, D), f32)], axis=0)
    Bp = x.shape[0]

    # ---- fold the one-hot (eye) contributions + bias into per-index offsets,
    #      and build the fused / packed parameter arrays.
    t1 = jnp.tanh(f32(1.0))
    wv = w_v.reshape(-1).astype(f32)                       # (2*Dl + 2*N,)
    bv = jnp.asarray(b_v, f32).reshape(-1)
    wvq = wv[:Dl]                                          # q-feature weights
    wvk = wv[Dl + N:2 * Dl + N]                            # k-feature weights

    wqk = jnp.concatenate([w_q.T, w_k.T], axis=1).astype(f32)          # (D, 2*Dl)
    bqk = jnp.concatenate([b_q, b_k]).reshape(1, 2 * Dl).astype(f32)   # (1, 2*Dl)

    wv2 = jnp.zeros((2 * Dl, 2), f32)
    wv2 = wv2.at[:Dl, 0].set(wvq).at[Dl:, 1].set(wvk)                  # (2*Dl, 2)

    nvec = jnp.stack([t1 * wv[Dl:Dl + N] + bv[0],                      # idx_i term + bias
                      t1 * wv[2 * Dl + N:]], axis=1)                   # idx_j term -> (N, 2)

    w1t = w1.T.astype(f32)                                             # (D, H)
    fb1r = fb1.reshape(1, H).astype(f32)
    w2t = w2.T.astype(f32)                                             # (H, D)

    dvec = jnp.zeros((8, D), f32)
    dvec = (dvec.at[0].set(g1.astype(f32)).at[1].set(be1.astype(f32))
                 .at[2].set(fb2.astype(f32)).at[3].set(g2.astype(f32))
                 .at[4].set(be2.astype(f32)))                          # (8, D)

    def full(shape):
        return pl.BlockSpec(shape, lambda i: (0, 0))

    out = pl.pallas_call(
        functools.partial(_attention_block_kernel, eps=1e-5),
        out_shape=jax.ShapeDtypeStruct((Bp, N, D), f32),
        grid_spec=pltpu.PrefetchScalarGridSpec(
            num_scalar_prefetch=0,
            grid=(Bp // tile_b,),
            in_specs=[
                pl.BlockSpec((tile_b, N, D), lambda i: (i, 0, 0)),     # x
                full((D, 2 * Dl)),                                     # [Wq^T | Wk^T]
                full((1, 2 * Dl)),                                     # [bq | bk]
                full((2 * Dl, 2)),                                     # score-reduction weights
                full((N, 2)),                                          # per-index offsets
                full((D, H)),                                          # W1^T
                full((1, H)),                                          # b1
                full((H, D)),                                          # W2^T
                full((8, D)),                                          # packed LN / bias vectors
            ],
            out_specs=pl.BlockSpec((tile_b, N, D), lambda i: (i, 0, 0)),
        ),
        compiler_params=pltpu.CompilerParams(
            dimension_semantics=("parallel",)),
    )(x, wqk, bqk, wv2, nvec, w1t, fb1r, w2t, dvec)

    return out[:B]


# --------------------------- pure-JAX reference -------------------------------
def _layer_norm_ref(v, g, b, eps=1e-5):
    mu = jnp.mean(v, axis=-1, keepdims=True)
    var = jnp.mean((v - mu) ** 2, axis=-1, keepdims=True)
    return (v - mu) / jnp.sqrt(var + eps) * g + b


def attention_block_ref(in_obs, params):
    """Literal translation of the PyTorch forward (materializes the big tensor)."""
    (w_q, b_q, w_k, b_k, w_v, b_v,
     g1, be1, w1, fb1, w2, fb2, g2, be2) = params
    B, N, D = in_obs.shape
    x = in_obs.astype(jnp.float32)
    idx = jnp.broadcast_to(jnp.eye(N, dtype=jnp.float32), (B, N, N))
    q = jnp.concatenate([x @ w_q.T + b_q, idx], axis=-1)             # (B, N, Dl+N)
    k = jnp.concatenate([x @ w_k.T + b_k, idx], axis=-1)
    qe = jnp.broadcast_to(q[:, :, None, :], (B, N, N, q.shape[-1]))
    ke = jnp.broadcast_to(k[:, None, :, :], (B, N, N, k.shape[-1]))
    cat = jnp.tanh(jnp.concatenate([qe, ke], axis=-1))                # (B,N,N,2Dl+2N)
    logits = jnp.einsum('bijf,f->bij', cat, w_v.reshape(-1)) + b_v.reshape(())
    wts = jax.nn.softmax(logits, axis=-1)
    attn = jnp.einsum('bij,bjd->bid', wts, x)
    res = _layer_norm_ref(attn + x, g1, be1)
    res = jnp.maximum(res @ w1.T + fb1, 0.0) @ w2.T + fb2
    res = res + x
    return _layer_norm_ref(res, g2, be2)


# --------------------------------- main ---------------------------------------
if __name__ == "__main__":
    N, D = 8, 16                  # num_indices, in_dim
    Dl = 4 * D                    # latent_dim default (in_dim * 4)
    H = 4 * D                     # feed-forward hidden dim

    key = jax.random.PRNGKey(0)
    ks = jax.random.split(key, 16)

    def u(k, shape, fan_in):
        s = 1.0 / float(fan_in) ** 0.5
        return jax.random.uniform(k, shape, jnp.float32, -s, s)

    w_q = u(ks[1], (Dl, D), D);   b_q = u(ks[2], (Dl,), D)
    w_k = u(ks[3], (Dl, D), D);   b_k = u(ks[4], (Dl,), D)
    wv_in = 2 * Dl + 2 * N
    w_v = u(ks[5], (1, wv_in), wv_in)
    b_v = u(ks[6], (1,), wv_in)
    w1 = u(ks[7], (H, D), D);     fb1 = u(ks[8], (H,), D)
    w2 = u(ks[9], (D, H), H);     fb2 = u(ks[10], (D,), H)
    g1 = 1.0 + 0.1 * jax.random.normal(ks[11], (D,), jnp.float32)
    be1 = 0.1 * jax.random.normal(ks[12], (D,), jnp.float32)
    g2 = 1.0 + 0.1 * jax.random.normal(ks[13], (D,), jnp.float32)
    be2 = 0.1 * jax.random.normal(ks[14], (D,), jnp.float32)

    params = (w_q, b_q, w_k, b_k, w_v, b_v,
              g1, be1, w1, fb1, w2, fb2, g2, be2)

    # Small batch: tile_b auto -> 1, grid = 2 (keeps both v7x TensorCores busy).
    B = 2
    in_obs = jax.random.normal(ks[0], (B, N, D), jnp.float32)
    out = jax.block_until_ready(attention_block(in_obs, params))
    ref = attention_block_ref(in_obs, params)
    assert out.shape == (B, N, D), out.shape
    err = float(jnp.max(jnp.abs(out - ref)))
    assert jnp.allclose(out, ref, atol=1e-4, rtol=1e-4), f"small-batch mismatch: {err}"

    # Larger batch: tile_b auto -> 16 (tile_b*N = 128 rows per slab matmul), grid = 2.
    B2 = 32
    in_obs2 = jax.random.normal(ks[15], (B2, N, D), jnp.float32)
    out2 = jax.block_until_ready(attention_block(in_obs2, params))
    ref2 = attention_block_ref(in_obs2, params)
    err2 = float(jnp.max(jnp.abs(out2 - ref2)))
    assert jnp.allclose(out2, ref2, atol=1e-4, rtol=1e-4), f"batched-tile mismatch: {err2}"

    print("KERNEL_OK")
</pallas_src>

<mosaic_0001>
module attributes {stable_mosaic.version = 11 : i64} {
  func.func @_attention_block_kernel(%arg0: i32, %arg1: memref<1x8x16xf32, #tpu.memory_space<vmem>>, %arg2: memref<16x128xf32, #tpu.memory_space<vmem>>, %arg3: memref<1x128xf32, #tpu.memory_space<vmem>>, %arg4: memref<128x2xf32, #tpu.memory_space<vmem>>, %arg5: memref<8x2xf32, #tpu.memory_space<vmem>>, %arg6: memref<16x64xf32, #tpu.memory_space<vmem>>, %arg7: memref<1x64xf32, #tpu.memory_space<vmem>>, %arg8: memref<64x16xf32, #tpu.memory_space<vmem>>, %arg9: memref<8x16xf32, #tpu.memory_space<vmem>>, %arg10: memref<1x8x16xf32, #tpu.memory_space<vmem>>) attributes {dimension_semantics = [#tpu.dimension_semantics<parallel>], iteration_bounds = array<i64: 2>, scalar_prefetch = 0 : i64, scratch_operands = 0 : i64, tpu.core_type = #tpu.core_type<tc>, window_params = [{transform_indices = @transform_0, window_bounds = array<i64: 1, 8, 16>}, {pipeline_mode = #tpu.pipeline_mode<synchronous>, transform_indices = @transform_1, window_bounds = array<i64: 16, 128>}, {pipeline_mode = #tpu.pipeline_mode<synchronous>, transform_indices = @transform_2, window_bounds = array<i64: 1, 128>}, {pipeline_mode = #tpu.pipeline_mode<synchronous>, transform_indices = @transform_3, window_bounds = array<i64: 128, 2>}, {pipeline_mode = #tpu.pipeline_mode<synchronous>, transform_indices = @transform_4, window_bounds = array<i64: 8, 2>}, {pipeline_mode = #tpu.pipeline_mode<synchronous>, transform_indices = @transform_5, window_bounds = array<i64: 16, 64>}, {pipeline_mode = #tpu.pipeline_mode<synchronous>, transform_indices = @transform_6, window_bounds = array<i64: 1, 64>}, {pipeline_mode = #tpu.pipeline_mode<synchronous>, transform_indices = @transform_7, window_bounds = array<i64: 64, 16>}, {pipeline_mode = #tpu.pipeline_mode<synchronous>, transform_indices = @transform_8, window_bounds = array<i64: 8, 16>}, {transform_indices = @transform_9, window_bounds = array<i64: 1, 8, 16>}]} {
    %c0 = arith.constant 0 : index
    %c0_0 = arith.constant 0 : index
    %0 = vector.load %arg2[%c0, %c0_0] : memref<16x128xf32, #tpu.memory_space<vmem>>, vector<16x128xf32>
    %c0_1 = arith.constant 0 : index
    %c0_2 = arith.constant 0 : index
    %1 = vector.load %arg3[%c0_1, %c0_2] : memref<1x128xf32, #tpu.memory_space<vmem>>, vector<1x128xf32>
    %c0_3 = arith.constant 0 : index
    %c0_4 = arith.constant 0 : index
    %2 = vector.load %arg4[%c0_3, %c0_4] : memref<128x2xf32, #tpu.memory_space<vmem>>, vector<128x2xf32>
    %c0_5 = arith.constant 0 : index
    %c0_6 = arith.constant 0 : index
    %3 = vector.load %arg5[%c0_5, %c0_6] : memref<8x2xf32, #tpu.memory_space<vmem>>, vector<8x2xf32>
    %c0_7 = arith.constant 0 : index
    %c0_8 = arith.constant 0 : index
    %4 = vector.load %arg6[%c0_7, %c0_8] : memref<16x64xf32, #tpu.memory_space<vmem>>, vector<16x64xf32>
    %c0_9 = arith.constant 0 : index
    %c0_10 = arith.constant 0 : index
    %5 = vector.load %arg7[%c0_9, %c0_10] : memref<1x64xf32, #tpu.memory_space<vmem>>, vector<1x64xf32>
    %c0_11 = arith.constant 0 : index
    %c0_12 = arith.constant 0 : index
    %6 = vector.load %arg8[%c0_11, %c0_12] : memref<64x16xf32, #tpu.memory_space<vmem>>, vector<64x16xf32>
    %c0_13 = arith.constant 0 : index
    %c0_14 = arith.constant 0 : index
    %7 = vector.load %arg9[%c0_13, %c0_14] : memref<8x16xf32, #tpu.memory_space<vmem>>, vector<8x16xf32>
    %8 = vector.extract_strided_slice %7 {offsets = [0, 0], sizes = [1, 16], strides = [1, 1]} : vector<8x16xf32> to vector<1x16xf32>
    %9 = vector.extract_strided_slice %7 {offsets = [1, 0], sizes = [1, 16], strides = [1, 1]} : vector<8x16xf32> to vector<1x16xf32>
    %10 = vector.extract_strided_slice %7 {offsets = [2, 0], sizes = [1, 16], strides = [1, 1]} : vector<8x16xf32> to vector<1x16xf32>
    %11 = vector.extract_strided_slice %7 {offsets = [3, 0], sizes = [1, 16], strides = [1, 1]} : vector<8x16xf32> to vector<1x16xf32>
    %12 = vector.extract_strided_slice %7 {offsets = [4, 0], sizes = [1, 16], strides = [1, 1]} : vector<8x16xf32> to vector<1x16xf32>
    %c0_15 = arith.constant 0 : index
    %c0_16 = arith.constant 0 : index
    %c0_17 = arith.constant 0 : index
    %13 = vector.load %arg1[%c0_15, %c0_16, %c0_17] : memref<1x8x16xf32, #tpu.memory_space<vmem>>, vector<1x8x16xf32>
    %14 = vector.shape_cast %13 : vector<1x8x16xf32> to vector<8x16xf32>
    %cst = arith.constant dense<0.000000e+00> : vector<8x128xf32>
    %15 = tpu.matmul %14, %0, %cst {dimension_numbers = #tpu.dot_dimension_numbers<[1], [0], [0], [1], [0, 0, 1, 1], [], []>, precision = #tpu.contract_precision<fp32>} : vector<8x16xf32>, vector<16x128xf32>, vector<8x128xf32> -> vector<8x128xf32>
    %16 = vector.broadcast %1 : vector<1x128xf32> to vector<8x128xf32>
    %17 = arith.addf %15, %16 : vector<8x128xf32>
    %18 = math.tanh %17 : vector<8x128xf32>
    %cst_18 = arith.constant dense<0.000000e+00> : vector<8x2xf32>
    %19 = tpu.matmul %18, %2, %cst_18 {dimension_numbers = #tpu.dot_dimension_numbers<[1], [0], [0], [1], [0, 0, 1, 1], [], []>, precision = #tpu.contract_precision<fp32>} : vector<8x128xf32>, vector<128x2xf32>, vector<8x2xf32> -> vector<8x2xf32>
    %20 = vector.shape_cast %19 : vector<8x2xf32> to vector<1x8x2xf32>
    %21 = vector.shape_cast %3 : vector<8x2xf32> to vector<1x8x2xf32>
    %22 = arith.addf %20, %21 : vector<1x8x2xf32>
    %23 = tpu.iota {dimensions = array<i32: 2>} : vector<1x8x2xi32>
    %c0_i32 = arith.constant 0 : i32
    %24 = vector.broadcast %c0_i32 : i32 to vector<1x8x2xi32>
    %25 = arith.cmpi eq, %23, %24 : vector<1x8x2xi32>
    %cst_19 = arith.constant 1.000000e+00 : f32
    %26 = vector.broadcast %cst_19 : f32 to vector<1x8x2xf32>
    %27 = arith.select %25, %22, %26 : vector<1x8x2xi1>, vector<1x8x2xf32>
    %c0_i32_20 = arith.constant 0 : i32
    %28 = vector.broadcast %c0_i32_20 : i32 to vector<1x8x2xi32>
    %29 = arith.cmpi eq, %23, %28 : vector<1x8x2xi32>
    %cst_21 = arith.constant 1.000000e+00 : f32
    %30 = vector.broadcast %cst_21 : f32 to vector<1x8x2xf32>
    %31 = arith.select %29, %30, %22 : vector<1x8x2xi1>, vector<1x8x2xf32>
    %cst_22 = arith.constant dense<0.000000e+00> : vector<1x8x8xf32>
    %32 = tpu.matmul %27, %31, %cst_22 {dimension_numbers = #tpu.dot_dimension_numbers<[2], [2], [1], [1], [0, 0, 0, 1, 1, 1], [0], [0]>, precision = #tpu.contract_precision<fp32>} : vector<1x8x2xf32>, vector<1x8x2xf32>, vector<1x8x8xf32> -> vector<1x8x8xf32>
    %cst_23 = arith.constant dense<0xFF800000> : vector<1x8xf32>
    %33 = vector.multi_reduction <maximumf>, %32, %cst_23 [2] : vector<1x8x8xf32> to vector<1x8xf32>
    %34 = vector.shape_cast %33 : vector<1x8xf32> to vector<1x8x1xf32>
    %35 = vector.broadcast %34 : vector<1x8x1xf32> to vector<1x8x8xf32>
    %36 = arith.subf %32, %35 : vector<1x8x8xf32>
    %37 = math.exp %36 : vector<1x8x8xf32>
    %cst_24 = arith.constant dense<0.000000e+00> : vector<1x8xf32>
    %38 = vector.multi_reduction <add>, %37, %cst_24 [2] : vector<1x8x8xf32> to vector<1x8xf32>
    %39 = vector.shape_cast %38 : vector<1x8xf32> to vector<1x8x1xf32>
    %40 = tpu.reciprocal %39 : vector<1x8x1xf32> -> vector<1x8x1xf32>
    %41 = vector.broadcast %40 : vector<1x8x1xf32> to vector<1x8x8xf32>
    %42 = arith.mulf %37, %41 : vector<1x8x8xf32>
    %cst_25 = arith.constant dense<0.000000e+00> : vector<1x8x16xf32>
    %43 = tpu.matmul %42, %13, %cst_25 {dimension_numbers = #tpu.dot_dimension_numbers<[2], [1], [1], [2], [0, 0, 0, 1, 1, 2], [0], [0]>, precision = #tpu.contract_precision<fp32>} : vector<1x8x8xf32>, vector<1x8x16xf32>, vector<1x8x16xf32> -> vector<1x8x16xf32>
    %44 = arith.addf %43, %13 : vector<1x8x16xf32>
    %45 = vector.shape_cast %44 : vector<1x8x16xf32> to vector<8x16xf32>
    %cst_26 = arith.constant dense<0.000000e+00> : vector<8xf32>
    %46 = vector.multi_reduction <add>, %45, %cst_26 [1] : vector<8x16xf32> to vector<8xf32>
    %47 = vector.shape_cast %46 : vector<8xf32> to vector<8x1xf32>
    %cst_27 = arith.constant 1.600000e+01 : f32
    %48 = vector.broadcast %cst_27 : f32 to vector<8x1xf32>
    %49 = arith.divf %47, %48 : vector<8x1xf32>
    %50 = vector.broadcast %49 : vector<8x1xf32> to vector<8x16xf32>
    %51 = arith.subf %45, %50 : vector<8x16xf32>
    %52 = arith.mulf %51, %51 : vector<8x16xf32>
    %cst_28 = arith.constant dense<0.000000e+00> : vector<8xf32>
    %53 = vector.multi_reduction <add>, %52, %cst_28 [1] : vector<8x16xf32> to vector<8xf32>
    %54 = vector.shape_cast %53 : vector<8xf32> to vector<8x1xf32>
    %cst_29 = arith.constant 1.600000e+01 : f32
    %55 = vector.broadcast %cst_29 : f32 to vector<8x1xf32>
    %56 = arith.divf %54, %55 : vector<8x1xf32>
    %cst_30 = arith.constant 9.99999974E-6 : f32
    %57 = vector.broadcast %cst_30 : f32 to vector<8x1xf32>
    %58 = arith.addf %56, %57 : vector<8x1xf32>
    %59 = math.rsqrt %58 : vector<8x1xf32>
    %60 = vector.broadcast %59 : vector<8x1xf32> to vector<8x16xf32>
    %61 = arith.mulf %51, %60 : vector<8x16xf32>
    %62 = vector.broadcast %8 : vector<1x16xf32> to vector<8x16xf32>
    %63 = arith.mulf %61, %62 : vector<8x16xf32>
    %64 = vector.broadcast %9 : vector<1x16xf32> to vector<8x16xf32>
    %65 = arith.addf %63, %64 : vector<8x16xf32>
    %cst_31 = arith.constant dense<0.000000e+00> : vector<8x64xf32>
    %66 = tpu.matmul %65, %4, %cst_31 {dimension_numbers = #tpu.dot_dimension_numbers<[1], [0], [0], [1], [0, 0, 1, 1], [], []>, precision = #tpu.contract_precision<fp32>} : vector<8x16xf32>, vector<16x64xf32>, vector<8x64xf32> -> vector<8x64xf32>
    %67 = vector.broadcast %5 : vector<1x64xf32> to vector<8x64xf32>
    %68 = arith.addf %66, %67 : vector<8x64xf32>
    %cst_32 = arith.constant 0.000000e+00 : f32
    %69 = vector.broadcast %cst_32 : f32 to vector<8x64xf32>
    %70 = arith.maximumf %68, %69 : vector<8x64xf32>
    %cst_33 = arith.constant dense<0.000000e+00> : vector<8x16xf32>
    %71 = tpu.matmul %70, %6, %cst_33 {dimension_numbers = #tpu.dot_dimension_numbers<[1], [0], [0], [1], [0, 0, 1, 1], [], []>, precision = #tpu.contract_precision<fp32>} : vector<8x64xf32>, vector<64x16xf32>, vector<8x16xf32> -> vector<8x16xf32>
    %72 = vector.broadcast %10 : vector<1x16xf32> to vector<8x16xf32>
    %73 = arith.addf %71, %72 : vector<8x16xf32>
    %74 = arith.addf %73, %14 : vector<8x16xf32>
    %cst_34 = arith.constant dense<0.000000e+00> : vector<8xf32>
    %75 = vector.multi_reduction <add>, %74, %cst_34 [1] : vector<8x16xf32> to vector<8xf32>
    %76 = vector.shape_cast %75 : vector<8xf32> to vector<8x1xf32>
    %cst_35 = arith.constant 1.600000e+01 : f32
    %77 = vector.broadcast %cst_35 : f32 to vector<8x1xf32>
    %78 = arith.divf %76, %77 : vector<8x1xf32>
    %79 = vector.broadcast %78 : vector<8x1xf32> to vector<8x16xf32>
    %80 = arith.subf %74, %79 : vector<8x16xf32>
    %81 = arith.mulf %80, %80 : vector<8x16xf32>
    %cst_36 = arith.constant dense<0.000000e+00> : vector<8xf32>
    %82 = vector.multi_reduction <add>, %81, %cst_36 [1] : vector<8x16xf32> to vector<8xf32>
    %83 = vector.shape_cast %82 : vector<8xf32> to vector<8x1xf32>
    %cst_37 = arith.constant 1.600000e+01 : f32
    %84 = vector.broadcast %cst_37 : f32 to vector<8x1xf32>
    %85 = arith.divf %83, %84 : vector<8x1xf32>
    %cst_38 = arith.constant 9.99999974E-6 : f32
    %86 = vector.broadcast %cst_38 : f32 to vector<8x1xf32>
    %87 = arith.addf %85, %86 : vector<8x1xf32>
    %88 = math.rsqrt %87 : vector<8x1xf32>
    %89 = vector.broadcast %88 : vector<8x1xf32> to vector<8x16xf32>
    %90 = arith.mulf %80, %89 : vector<8x16xf32>
    %91 = vector.broadcast %11 : vector<1x16xf32> to vector<8x16xf32>
    %92 = arith.mulf %90, %91 : vector<8x16xf32>
    %93 = vector.broadcast %12 : vector<1x16xf32> to vector<8x16xf32>
    %94 = arith.addf %92, %93 : vector<8x16xf32>
    %95 = vector.shape_cast %94 : vector<8x16xf32> to vector<1x8x16xf32>
    %c0_39 = arith.constant 0 : index
    %c0_40 = arith.constant 0 : index
    %c0_41 = arith.constant 0 : index
    %96 = vector.load %arg10[%c0_39, %c0_40, %c0_41] : memref<1x8x16xf32, #tpu.memory_space<vmem>>, vector<1x8x16xf32>
    tpu.vector_store %arg10[%c0_39, %c0_40, %c0_41], %95 {strides = array<i32>} : memref<1x8x16xf32, #tpu.memory_space<vmem>>, vector<1x8x16xf32>,
    return
  }
  func.func @transform_0(%arg0: i32) -> (i32, i32, i32) {
    %c0_i32 = arith.constant 0 : i32
    %c0_i32_0 = arith.constant 0 : i32
    %c0_i32_1 = arith.constant 0 : i32
    return %arg0, %c0_i32, %c0_i32_0 : i32, i32, i32
  }
  func.func @transform_1(%arg0: i32) -> (i32, i32) {
    %c0_i32 = arith.constant 0 : i32
    %c0_i32_0 = arith.constant 0 : i32
    %c0_i32_1 = arith.constant 0 : i32
    return %c0_i32, %c0_i32_0 : i32, i32
  }
  func.func @transform_2(%arg0: i32) -> (i32, i32) {
    %c0_i32 = arith.constant 0 : i32
    %c0_i32_0 = arith.constant 0 : i32
    %c0_i32_1 = arith.constant 0 : i32
    return %c0_i32, %c0_i32_0 : i32, i32
  }
  func.func @transform_3(%arg0: i32) -> (i32, i32) {
    %c0_i32 = arith.constant 0 : i32
    %c0_i32_0 = arith.constant 0 : i32
    %c0_i32_1 = arith.constant 0 : i32
    return %c0_i32, %c0_i32_0 : i32, i32
  }
  func.func @transform_4(%arg0: i32) -> (i32, i32) {
    %c0_i32 = arith.constant 0 : i32
    %c0_i32_0 = arith.constant 0 : i32
    %c0_i32_1 = arith.constant 0 : i32
    return %c0_i32, %c0_i32_0 : i32, i32
  }
  func.func @transform_5(%arg0: i32) -> (i32, i32) {
    %c0_i32 = arith.constant 0 : i32
    %c0_i32_0 = arith.constant 0 : i32
    %c0_i32_1 = arith.constant 0 : i32
    return %c0_i32, %c0_i32_0 : i32, i32
  }
  func.func @transform_6(%arg0: i32) -> (i32, i32) {
    %c0_i32 = arith.constant 0 : i32
    %c0_i32_0 = arith.constant 0 : i32
    %c0_i32_1 = arith.constant 0 : i32
    return %c0_i32, %c0_i32_0 : i32, i32
  }
  func.func @transform_7(%arg0: i32) -> (i32, i32) {
    %c0_i32 = arith.constant 0 : i32
    %c0_i32_0 = arith.constant 0 : i32
    %c0_i32_1 = arith.constant 0 : i32
    return %c0_i32, %c0_i32_0 : i32, i32
  }
  func.func @transform_8(%arg0: i32) -> (i32, i32) {
    %c0_i32 = arith.constant 0 : i32
    %c0_i32_0 = arith.constant 0 : i32
    %c0_i32_1 = arith.constant 0 : i32
    return %c0_i32, %c0_i32_0 : i32, i32
  }
  func.func @transform_9(%arg0: i32) -> (i32, i32, i32) {
    %c0_i32 = arith.constant 0 : i32
    %c0_i32_0 = arith.constant 0 : i32
    %c0_i32_1 = arith.constant 0 : i32
    return %arg0, %c0_i32, %c0_i32_0 : i32, i32, i32
  }
}

</mosaic_0001>

<llo_original>
// kernel: tpu_custom_call.1
$region0: #{tpu_custom_call.1}
  #allocation0 [shape = 'u32[]', space=smem, size = 0x4, offset = 0x4, fixed_abs, tag = 'smem constant byte address 0x4 - core index']
  #allocation1 [shape = 'u32[144,128]{1,0:T(1,128)}', space=vmem, size = 0x12000, scoped, tag = 'internal scratch']
  %s0 = inlined_call_operand.vmem [shape: f32[2,8,16], index: 0, kind: input, shape index: {}]
  %s1 = inlined_call_operand.vmem [shape: f32[16,128], index: 1, kind: input, shape index: {}]
  %s2 = inlined_call_operand.vmem [shape: f32[1,128], index: 2, kind: input, shape index: {}]
  %s3 = inlined_call_operand.vmem [shape: f32[128,2], index: 3, kind: input, shape index: {}]
  %s4 = inlined_call_operand.vmem [shape: f32[8,2], index: 4, kind: input, shape index: {}]
  %s5 = inlined_call_operand.vmem [shape: f32[16,64], index: 5, kind: input, shape index: {}]
  %s6 = inlined_call_operand.vmem [shape: f32[1,64], index: 6, kind: input, shape index: {}]
  %s7 = inlined_call_operand.vmem [shape: f32[64,16], index: 7, kind: input, shape index: {}]
  %s8 = inlined_call_operand.vmem [shape: f32[8,16], index: 8, kind: input, shape index: {}]
  %s9 = inlined_call_operand.hbm [shape: f32[2,8,16], index: 9, kind: output, shape index: {}]
  %s10 = sld [smem:[#allocation0]]
  $region69: #{tpu_custom_call.1} parent=0
    _
  %s12 = ssub.s32 1, %s10
  %s13 = scalar_select 0, %s12, %s10
  $region1: #{tpu_custom_call.1} parent=0
    #allocation2 [shape = 'u8[8192]{0}', space=vmem, size = 0x2000, scoped, tag = 'output window, operand 0']
    #allocation3 [shape = 's32[2]{0}', space=sflag, size = 0x8, scoped, tag = 'scoped memory for tpu_custom_call.1']
    %14 = vsyncpa [#allocation3], 0
    %s15 = scalar_lea.sflag [#allocation3], 1
    %16 = vsyncpa %s15, 0
    loop: start=0, step=1, limit=4
    $region2: #{tpu_custom_call.1} parent=1 // loop_pre_header
      _
    $region3: #{tpu_custom_call.1} parent=1 // loop_header
      %s18 = sphi 0, %s22
      %p19 = scmp.ge.s32.totalorder %s18, 4
      %s28 = sphi 0, %s30
      %s31 = sphi 0, %s28
      %s32 = sphi 0, %s31
      %s48 = sphi 0, %s32
      %s52 = sphi 0, %s52
      %s54 = sphi 0, %s52
      %s55 = sphi 0, %s54
      %s69 = sphi 0, %s55
      %s73 = sphi 0, %s73
      %s75 = sphi 0, %s73
      %s76 = sphi 0, %s75
      %s90 = sphi 0, %s76
      %s94 = sphi 0, %s94
      %s96 = sphi 0, %s94
      %s97 = sphi 0, %s96
      %s111 = sphi 0, %s97
      %s115 = sphi 0, %s115
      %s117 = sphi 0, %s115
      %s118 = sphi 0, %s117
      %s132 = sphi 0, %s118
      %s136 = sphi 0, %s136
      %s138 = sphi 0, %s136
      %s139 = sphi 0, %s138
      %s153 = sphi 0, %s139
      %s157 = sphi 0, %s157
      %s159 = sphi 0, %s157
      %s160 = sphi 0, %s159
      %s174 = sphi 0, %s160
      %s178 = sphi 0, %s178
      %s180 = sphi 0, %s178
      %s181 = sphi 0, %s180
      %s195 = sphi 0, %s181
      %s199 = sphi 0, %s199
      %s201 = sphi 0, %s199
      %s202 = sphi 0, %s201
      %s216 = sphi 0, %s202
      %s222 = sphi 0, %s224
      %s225 = sphi 0, %s222
      %s226 = sphi 0, %s225
      %s242 = sphi 0, %s226
    $region4: #{tpu_custom_call.1} parent=1 // loop_header_branch
      %21 = sbr.rel (%p19) target = $region8
    $region5: #{tpu_custom_call.1} parent=1 // loop_body
      %s23 = ssub.s32 %s18, 1
      %s24 = ssub.s32 %s18, 2
      %s25 = sadd.s32 %s18, 1
      %s26 = ssub.s32 %s18, %s25
      %p27 = scmp.eq.s32.totalorder %s26, 0
      %s29 = sadd.s32 %s28, 1
      %s30 = scalar_select %p27, %s28, %s29
      %p33 = pneg %p27
      %p34 = scmp.eq.s32.totalorder %s18, 1
      %p35 = por %p33, %p34
      %p36 = scmp.ne.s32.totalorder %s28, %s31
      %p37 = scmp.eq.s32.totalorder %s18, 0
      %p38 = por %p36, %p37
      %p39 = scmp.ne.s32.totalorder %s28, %s31
      %p40 = scmp.eq.s32.totalorder %s23, 1
      %p41 = por %p39, %p40
      %p42 = scmp.ne.s32.totalorder %s31, %s32
      %p43 = scmp.eq.s32.totalorder %s23, 0
      %p44 = por %p42, %p43
      %p45 = scmp.ne.s32.totalorder %s31, %s32
      %p46 = scmp.eq.s32.totalorder %s24, 1
      %p47 = por %p45, %p46
      %p49 = scmp.ne.s32.totalorder %s32, %s48
      %p50 = scmp.eq.s32.totalorder %s24, 0
      %p51 = por %p49, %p50
      %s53 = sadd.s32 %s52, 1
      %p56 = scmp.eq.s32.totalorder %s18, 1
      %p57 = scmp.ne.s32.totalorder %s52, %s54
      %p58 = scmp.eq.s32.totalorder %s18, 0
      %p59 = por %p57, %p58
      %p60 = scmp.ne.s32.totalorder %s52, %s54
      %p61 = scmp.eq.s32.totalorder %s23, 1
      %p62 = por %p60, %p61
      %p63 = scmp.ne.s32.totalorder %s54, %s55
      %p64 = scmp.eq.s32.totalorder %s23, 0
      %p65 = por %p63, %p64
      %p66 = scmp.ne.s32.totalorder %s54, %s55
      %p67 = scmp.eq.s32.totalorder %s24, 1
      %p68 = por %p66, %p67
      %p70 = scmp.ne.s32.totalorder %s55, %s69
      %p71 = scmp.eq.s32.totalorder %s24, 0
      %p72 = por %p70, %p71
      %s74 = sadd.s32 %s73, 1
      %p77 = scmp.eq.s32.totalorder %s18, 1
      %p78 = scmp.ne.s32.totalorder %s73, %s75
      %p79 = scmp.eq.s32.totalorder %s18, 0
      %p80 = por %p78, %p79
      %p81 = scmp.ne.s32.totalorder %s73, %s75
      %p82 = scmp.eq.s32.totalorder %s23, 1
      %p83 = por %p81, %p82
      %p84 = scmp.ne.s32.totalorder %s75, %s76
      %p85 = scmp.eq.s32.totalorder %s23, 0
      %p86 = por %p84, %p85
      %p87 = scmp.ne.s32.totalorder %s75, %s76
      %p88 = scmp.eq.s32.totalorder %s24, 1
      %p89 = por %p87, %p88
      %p91 = scmp.ne.s32.totalorder %s76, %s90
      %p92 = scmp.eq.s32.totalorder %s24, 0
      %p93 = por %p91, %p92
      %s95 = sadd.s32 %s94, 1
      %p98 = scmp.eq.s32.totalorder %s18, 1
      %p99 = scmp.ne.s32.totalorder %s94, %s96
      %p100 = scmp.eq.s32.totalorder %s18, 0
      %p101 = por %p99, %p100
      %p102 = scmp.ne.s32.totalorder %s94, %s96
      %p103 = scmp.eq.s32.totalorder %s23, 1
      %p104 = por %p102, %p103
      %p105 = scmp.ne.s32.totalorder %s96, %s97
      %p106 = scmp.eq.s32.totalorder %s23, 0
      %p107 = por %p105, %p106
      %p108 = scmp.ne.s32.totalorder %s96, %s97
      %p109 = scmp.eq.s32.totalorder %s24, 1
      %p110 = por %p108, %p109
      %p112 = scmp.ne.s32.totalorder %s97, %s111
      %p113 = scmp.eq.s32.totalorder %s24, 0
      %p114 = por %p112, %p113
      %s116 = sadd.s32 %s115, 1
      %p119 = scmp.eq.s32.totalorder %s18, 1
      %p120 = scmp.ne.s32.totalorder %s115, %s117
      %p121 = scmp.eq.s32.totalorder %s18, 0
      %p122 = por %p120, %p121
      %p123 = scmp.ne.s32.totalorder %s115, %s117
      %p124 = scmp.eq.s32.totalorder %s23, 1
      %p125 = por %p123, %p124
      %p126 = scmp.ne.s32.totalorder %s117, %s118
      %p127 = scmp.eq.s32.totalorder %s23, 0
      %p128 = por %p126, %p127
      %p129 = scmp.ne.s32.totalorder %s117, %s118
      %p130 = scmp.eq.s32.totalorder %s24, 1
      %p131 = por %p129, %p130
      %p133 = scmp.ne.s32.totalorder %s118, %s132
      %p134 = scmp.eq.s32.totalorder %s24, 0
      %p135 = por %p133, %p134
      %s137 = sadd.s32 %s136, 1
      %p140 = scmp.eq.s32.totalorder %s18, 1
      %p141 = scmp.ne.s32.totalorder %s136, %s138
      %p142 = scmp.eq.s32.totalorder %s18, 0
      %p143 = por %p141, %p142
      %p144 = scmp.ne.s32.totalorder %s136, %s138
      %p145 = scmp.eq.s32.totalorder %s23, 1
      %p146 = por %p144, %p145
      %p147 = scmp.ne.s32.totalorder %s138, %s139
      %p148 = scmp.eq.s32.totalorder %s23, 0
      %p149 = por %p147, %p148
      %p150 = scmp.ne.s32.totalorder %s138, %s139
      %p151 = scmp.eq.s32.totalorder %s24, 1
      %p152 = por %p150, %p151
      %p154 = scmp.ne.s32.totalorder %s139, %s153
      %p155 = scmp.eq.s32.totalorder %s24, 0
      %p156 = por %p154, %p155
      %s158 = sadd.s32 %s157, 1
      %p161 = scmp.eq.s32.totalorder %s18, 1
      %p162 = scmp.ne.s32.totalorder %s157, %s159
      %p163 = scmp.eq.s32.totalorder %s18, 0
      %p164 = por %p162, %p163
      %p165 = scmp.ne.s32.totalorder %s157, %s159
      %p166 = scmp.eq.s32.totalorder %s23, 1
      %p167 = por %p165, %p166
      %p168 = scmp.ne.s32.totalorder %s159, %s160
      %p169 = scmp.eq.s32.totalorder %s23, 0
      %p170 = por %p168, %p169
      %p171 = scmp.ne.s32.totalorder %s159, %s160
      %p172 = scmp.eq.s32.totalorder %s24, 1
      %p173 = por %p171, %p172
      %p175 = scmp.ne.s32.totalorder %s160, %s174
      %p176 = scmp.eq.s32.totalorder %s24, 0
      %p177 = por %p175, %p176
      %s179 = sadd.s32 %s178, 1
      %p182 = scmp.eq.s32.totalorder %s18, 1
      %p183 = scmp.ne.s32.totalorder %s178, %s180
      %p184 = scmp.eq.s32.totalorder %s18, 0
      %p185 = por %p183, %p184
      %p186 = scmp.ne.s32.totalorder %s178, %s180
      %p187 = scmp.eq.s32.totalorder %s23, 1
      %p188 = por %p186, %p187
      %p189 = scmp.ne.s32.totalorder %s180, %s181
      %p190 = scmp.eq.s32.totalorder %s23, 0
      %p191 = por %p189, %p190
      %p192 = scmp.ne.s32.totalorder %s180, %s181
      %p193 = scmp.eq.s32.totalorder %s24, 1
      %p194 = por %p192, %p193
      %p196 = scmp.ne.s32.totalorder %s181, %s195
      %p197 = scmp.eq.s32.totalorder %s24, 0
      %p198 = por %p196, %p197
      %s200 = sadd.s32 %s199, 1
      %p203 = scmp.eq.s32.totalorder %s18, 1
      %p204 = scmp.ne.s32.totalorder %s199, %s201
      %p205 = scmp.eq.s32.totalorder %s18, 0
      %p206 = por %p204, %p205
      %p207 = scmp.ne.s32.totalorder %s199, %s201
      %p208 = scmp.eq.s32.totalorder %s23, 1
      %p209 = por %p207, %p208
      %p210 = scmp.ne.s32.totalorder %s201, %s202
      %p211 = scmp.eq.s32.totalorder %s23, 0
      %p212 = por %p210, %p211
      %p213 = scmp.ne.s32.totalorder %s201, %s202
      %p214 = scmp.eq.s32.totalorder %s24, 1
      %p215 = por %p213, %p214
      %p217 = scmp.ne.s32.totalorder %s202, %s216
      %p218 = scmp.eq.s32.totalorder %s24, 0
      %p219 = por %p217, %p218
      %s220 = ssub.s32 %s18, %s25
      %p221 = scmp.eq.s32.totalorder %s220, 0
      %s223 = sadd.s32 %s222, 1
      %s224 = scalar_select %p221, %s222, %s223
      %p227 = pneg %p221
      %p228 = scmp.eq.s32.totalorder %s18, 1
      %p229 = por %p227, %p228
      %p230 = scmp.ne.s32.totalorder %s222, %s225
      %p231 = scmp.eq.s32.totalorder %s18, 0
      %p232 = por %p230, %p231
      %p233 = scmp.ne.s32.totalorder %s222, %s225
      %p234 = scmp.eq.s32.totalorder %s23, 1
      %p235 = por %p233, %p234
      %p236 = scmp.ne.s32.totalorder %s225, %s226
      %p237 = scmp.eq.s32.totalorder %s23, 0
      %p238 = por %p236, %p237
      %p239 = scmp.ne.s32.totalorder %s225, %s226
      %p240 = scmp.eq.s32.totalorder %s24, 1
      %p241 = por %p239, %p240
      %p243 = scmp.ne.s32.totalorder %s226, %s242
      %p244 = scmp.eq.s32.totalorder %s24, 0
      %p245 = por %p243, %p244
      %p246 = scmp.le.s32.totalorder 1, %s18
      %p247 = scmp.lt.s32.totalorder %s18, 3
      %p248 = pnand %p246, %p247
      %p249 = pneg %p248
      // Predicated region
      $region9: #{tpu_custom_call.1} parent=5 // pred_check
        _
      $region10: #{tpu_custom_call.1} parent=5 // pred_check_branch
        %251 = sbr.rel (%p248) target = $region12
      $region11: #{tpu_custom_call.1} parent=5 // pred_region
        %s252 = ssub.s32 %s18, 1
        // Predicated region
        $region13: #{tpu_custom_call.1} parent=11 // pred_check
          %p253 = pneg %p65
        $region14: #{tpu_custom_call.1} parent=11 // pred_check_branch
          %255 = sbr.rel (%p253) target = $region16
        $region15: #{tpu_custom_call.1} parent=11 // pred_region
          _
        $region16: #{tpu_custom_call.1} parent=11 // pred_fallthru
          _
        // Predicated region
        $region17: #{tpu_custom_call.1} parent=11 // pred_check
          %p256 = pneg %p86
        $region18: #{tpu_custom_call.1} parent=11 // pred_check_branch
          %258 = sbr.rel (%p256) target = $region20
        $region19: #{tpu_custom_call.1} parent=11 // pred_region
          _
        $region20: #{tpu_custom_call.1} parent=11 // pred_fallthru
          _
        // Predicated region
        $region21: #{tpu_custom_call.1} parent=11 // pred_check
          %p259 = pneg %p107
        $region22: #{tpu_custom_call.1} parent=11 // pred_check_branch
          %261 = sbr.rel (%p259) target = $region24
        $region23: #{tpu_custom_call.1} parent=11 // pred_region
          _
        $region24: #{tpu_custom_call.1} parent=11 // pred_fallthru
          _
        // Predicated region
        $region25: #{tpu_custom_call.1} parent=11 // pred_check
          %p262 = pneg %p128
        $region26: #{tpu_custom_call.1} parent=11 // pred_check_branch
          %264 = sbr.rel (%p262) target = $region28
        $region27: #{tpu_custom_call.1} parent=11 // pred_region
          _
        $region28: #{tpu_custom_call.1} parent=11 // pred_fallthru
          _
        // Predicated region
        $region29: #{tpu_custom_call.1} parent=11 // pred_check
          %p265 = pneg %p149
        $region30: #{tpu_custom_call.1} parent=11 // pred_check_branch
          %267 = sbr.rel (%p265) target = $region32
        $region31: #{tpu_custom_call.1} parent=11 // pred_region
          _
        $region32: #{tpu_custom_call.1} parent=11 // pred_fallthru
          _
        // Predicated region
        $region33: #{tpu_custom_call.1} parent=11 // pred_check
          %p268 = pneg %p170
        $region34: #{tpu_custom_call.1} parent=11 // pred_check_branch
          %270 = sbr.rel (%p268) target = $region36
        $region35: #{tpu_custom_call.1} parent=11 // pred_region
          _
        $region36: #{tpu_custom_call.1} parent=11 // pred_fallthru
          _
        // Predicated region
        $region37: #{tpu_custom_call.1} parent=11 // pred_check
          %p271 = pneg %p191
        $region38: #{tpu_custom_call.1} parent=11 // pred_check_branch
          %273 = sbr.rel (%p271) target = $region40
        $region39: #{tpu_custom_call.1} parent=11 // pred_region
          _
        $region40: #{tpu_custom_call.1} parent=11 // pred_fallthru
          _
        // Predicated region
        $region41: #{tpu_custom_call.1} parent=11 // pred_check
          %p274 = pneg %p212
        $region42: #{tpu_custom_call.1} parent=11 // pred_check_branch
          %276 = sbr.rel (%p274) target = $region44
        $region43: #{tpu_custom_call.1} parent=11 // pred_region
          _
        $region44: #{tpu_custom_call.1} parent=11 // pred_fallthru
          _
      $region12: #{tpu_custom_call.1} parent=5 // pred_fallthru
        _
      %p277 = scmp.lt.s32.totalorder %s18, 2
      // Predicated region
      $region45: #{tpu_custom_call.1} parent=5 // pred_check
        %p278 = pneg %p277
      $region46: #{tpu_custom_call.1} parent=5 // pred_check_branch
        %280 = sbr.rel (%p278) target = $region48
      $region47: #{tpu_custom_call.1} parent=5 // pred_region
        // Predicated region
        $region49: #{tpu_custom_call.1} parent=47 // pred_check
          %p281 = pneg %p38
        $region50: #{tpu_custom_call.1} parent=47 // pred_check_branch
          %283 = sbr.rel (%p281) target = $region52
        $region51: #{tpu_custom_call.1} parent=47 // pred_region
          %p284 = scmp.lt.s32.totalorder %s18, 1
          %s285 = scalar_select %p284, %s18, 1
          %s286 = smul.addr %s285, 8
          %s287 = scalar_lea.vmem %s0, %s286
        $region52: #{tpu_custom_call.1} parent=47 // pred_fallthru
          _
      $region48: #{tpu_custom_call.1} parent=5 // pred_fallthru
        _
      %p288 = scmp.le.s32.totalorder 1, %s18
      %p289 = scmp.lt.s32.totalorder %s18, 3
      %p290 = pnand %p288, %p289
      %p291 = pneg %p290
      // Predicated region
      $region53: #{tpu_custom_call.1} parent=5 // pred_check
        _
      $region54: #{tpu_custom_call.1} parent=5 // pred_check_branch
        %293 = sbr.rel (%p290) target = $region56
      $region55: #{tpu_custom_call.1} parent=5 // pred_region
        %s294 = ssub.s32 %s18, 1
        %p295 = scmp.lt.s32.totalorder %s23, 1
        %s296 = scalar_select %p295, %s23, 1
        %s297 = smul.addr %s296, 8
        %s298 = scalar_lea.vmem %s0, %s297
        %p299 = pneg %p44
        %p300 = pneg %p41
        %p301 = pneg %p65
        %p302 = pneg %p62
        %p303 = pneg %p86
        %p304 = pneg %p83
        %p305 = pneg %p107
        %p306 = pneg %p104
        %p307 = pneg %p128
        %p308 = pneg %p125
        %p309 = pneg %p149
        %p310 = pneg %p146
        %p311 = pneg %p170
        %p312 = pneg %p167
        %p313 = pneg %p191
        %p314 = pneg %p188
        %p315 = pneg %p212
        %p316 = pneg %p209
        %p317 = pneg %p238
        %p318 = pneg %p235
        %s319 = sand.u32 %s225, 1
        %s320 = scalar_lea.sflag [#allocation3], %s319
        %s321 = sand.u32 %s225, 1
        %s322 = smul.addr %s321, 8
        %s323 = scalar_lea.vmem [#allocation2], %s322
        %p324 = scmp.lt.s32.totalorder %s23, 1
        %s325 = scalar_select %p324, %s23, 1
        %s326 = smul.addr %s325, 8
        %s327 = scalar_lea.vmem %s0, %s326
        %v328 = vld [vmem:[%s1] sm:$0xff]
        %v329 = vld [vmem:[%s1 + $0x8] sm:$0xff]
        %v330 = vld [vmem:[%s2] sm:$0x1]
        %v331 = vld [vmem:[%s3] sm:$0xff]
        %v332 = vld [vmem:[%s3 + $0x8] sm:$0xff]
        %v333 = vld [vmem:[%s3 + $0x10] sm:$0xff]
        %v334 = vld [vmem:[%s3 + $0x18] sm:$0xff]
        %v335 = vld [vmem:[%s3 + $0x20] sm:$0xff]
        %v336 = vld [vmem:[%s3 + $0x28] sm:$0xff]
        %v337 = vld [vmem:[%s3 + $0x30] sm:$0xff]
        %v338 = vld [vmem:[%s3 + $0x38] sm:$0xff]
        %v339 = vld [vmem:[%s3 + $0x40] sm:$0xff]
        %v340 = vld [vmem:[%s3 + $0x48] sm:$0xff]
        %v341 = vld [vmem:[%s3 + $0x50] sm:$0xff]
        %v342 = vld [vmem:[%s3 + $0x58] sm:$0xff]
        %v343 = vld [vmem:[%s3 + $0x60] sm:$0xff]
        %v344 = vld [vmem:[%s3 + $0x68] sm:$0xff]
        %v345 = vld [vmem:[%s3 + $0x70] sm:$0xff]
        %v346 = vld [vmem:[%s3 + $0x78] sm:$0xff]
        %v347 = vld [vmem:[%s4] sm:$0xff]
        %v348 = vld [vmem:[%s5] sm:$0xff]
        %v349 = vld [vmem:[%s5 + $0x8] sm:$0xff]
        %v350 = vld [vmem:[%s6] sm:$0x1]
        %v351 = vld [vmem:[%s7] sm:$0xff]
        %v352 = vld [vmem:[%s7 + $0x8] sm:$0xff]
        %v353 = vld [vmem:[%s7 + $0x10] sm:$0xff]
        %v354 = vld [vmem:[%s7 + $0x18] sm:$0xff]
        %v355 = vld [vmem:[%s7 + $0x20] sm:$0xff]
        %v356 = vld [vmem:[%s7 + $0x28] sm:$0xff]
        %v357 = vld [vmem:[%s7 + $0x30] sm:$0xff]
        %v358 = vld [vmem:[%s7 + $0x38] sm:$0xff]
        %v359 = vld [vmem:[%s8] sm:$0xff]
        %v360 = vld [vmem:[%s327] sm:$0xff]
        %v362 = vlaneseq
        %v363 = vshrl.u32 %v362, 7
        %v364 = vsub.s32 0, %v363
        %v365 = vrot.slane %v330, %v364
        %vm367 = vcmask 130048
        %v369 = vsel %vm367, %v360, 0
        %371 = vmatprep.subr.mxu0 0.0
        %v372 = vand.u32 %v328, 4294901760
        %373 = vmatpush1.msra.mxu0 %v372
        %374 = vmatprep.subr.mxu0 0.0
        %v375 = vand.u32 %v329, 4294901760
        %376 = vmatpush1.msra.mxu0 %v375
        %377 = vmatprep.subr.mxu0 0.0
        %378 = vmatpush1.msra.mxu0 0.0
        %379 = vmatprep.subr.mxu0 0.0
        %380 = vmatpush1.msra.mxu0 0.0
        %381 = vmatprep.subr.mxu0 0.0
        %382 = vmatpush1.msra.mxu0 0.0
        %383 = vmatprep.subr.mxu0 0.0
        %384 = vmatpush1.msra.mxu0 0.0
        %385 = vmatprep.subr.mxu0 0.0
        %386 = vmatpush1.msra.mxu0 0.0
        %387 = vmatprep.subr.mxu0 0.0
        %388 = vmatpush1.msra.mxu0 0.0
        %389 = vmatprep.subr.mxu0 0.0
        %390 = vmatpush1.msra.mxu0 0.0
        %391 = vmatprep.subr.mxu0 0.0
        %392 = vmatpush1.msra.mxu0 0.0
        %393 = vmatprep.subr.mxu0 0.0
        %394 = vmatpush1.msra.mxu0 0.0
        %395 = vmatprep.subr.mxu0 0.0
        %396 = vmatpush1.msra.mxu0 0.0
        %397 = vmatprep.subr.mxu0 0.0
        %398 = vmatpush1.msra.mxu0 0.0
        %399 = vmatprep.subr.mxu0 0.0
        %400 = vmatpush1.msra.mxu0 0.0
        %401 = vmatprep.subr.mxu0 0.0
        %402 = vmatpush1.msra.mxu0 0.0
        %403 = vmatprep.subr.mxu0 0.0
        %404 = vmatpush1.msra.mxu0 0.0
        %405 = vmatprep.subr.mxu0 0.0
        %406 = vmatpush1.msra.mxu0 0.0
        %407 = vmatprep.subr.mxu0 0.0
        %408 = vmatpush1.msra.mxu0 0.0
        %409 = vmatprep.subr.mxu0 0.0
        %410 = vmatpush1.msra.mxu0 0.0
        %411 = vmatprep.subr.mxu0 0.0
        %412 = vmatpush1.msra.mxu0 0.0
        %413 = vmatprep.subr.mxu0 0.0
        %414 = vmatpush1.msra.mxu0 0.0
        %415 = vmatprep.subr.mxu0 0.0
        %416 = vmatpush1.msra.mxu0 0.0
        %417 = vmatprep.subr.mxu0 0.0
        %418 = vmatpush1.msra.mxu0 0.0
        %419 = vmatprep.subr.mxu0 0.0
        %420 = vmatpush1.msra.mxu0 0.0
        %421 = vmatprep.subr.mxu0 0.0
        %422 = vmatpush1.msra.mxu0 0.0
        %423 = vmatprep.subr.mxu0 0.0
        %424 = vmatpush1.msra.mxu0 0.0
        %425 = vmatprep.subr.mxu0 0.0
        %426 = vmatpush1.msra.mxu0 0.0
        %427 = vmatprep.subr.mxu0 0.0
        %428 = vmatpush1.msra.mxu0 0.0
        %429 = vmatprep.subr.mxu0 0.0
        %430 = vmatpush1.msra.mxu0 0.0
        %431 = vmatprep.subr.mxu0 0.0
        %432 = vmatpush1.msra.mxu0 0.0
        %433 = vmatprep.subr.mxu0 0.0
        %434 = vmatpush1.msra.mxu0 0.0
        %435 = vmatprep.subr.mxu0 0.0
        %436 = vmatpush1.msra.mxu0 0.0
        %437 = vmatprep.mubr.f32.mxu0 0.0
        %v438 = vand.u32 %v369, 4294901760
        %v439 = vsub.f32 %v369, %v438
        %v440 = vand.u32 %v439, 4294901760
        %v441 = vsub.f32 %v439, %v440
        %v442 = vand.u32 %v441, 4294901760
        %443 = vmatmul.mubr.f32.gmra.mrb[0].mxu0 %v442
        %v444 = vpop.f32.mrb[0].mxu0
        %v445 = vadd.f32 %v365, %v444
        %v446 = vpop.f32.mrb[0].mxu0
        %447 = vdwg.mxu0
        %448 = vmatprep.subr.mxu0 0.0
        %v449 = vand.u32 %v328, 4294901760
        %v450 = vsub.f32 %v328, %v449
        %v451 = vand.u32 %v450, 4294901760
        %v452 = vsub.f32 %v450, %v451
        %v453 = vand.u32 %v452, 4294901760
        %454 = vmatpush1.msra.mxu0 %v453
        %455 = vmatprep.subr.mxu0 0.0
        %v456 = vand.u32 %v329, 4294901760
        %v457 = vsub.f32 %v329, %v456
        %v458 = vand.u32 %v457, 4294901760
        %v459 = vsub.f32 %v457, %v458
        %v460 = vand.u32 %v459, 4294901760
        %461 = vmatpush1.msra.mxu0 %v460
        %462 = vmatprep.subr.mxu0 0.0
        %463 = vmatpush1.msra.mxu0 0.0
        %464 = vmatprep.subr.mxu0 0.0
        %465 = vmatpush1.msra.mxu0 0.0
        %466 = vmatprep.subr.mxu0 0.0
        %467 = vmatpush1.msra.mxu0 0.0
        %468 = vmatprep.subr.mxu0 0.0
        %469 = vmatpush1.msra.mxu0 0.0
        %470 = vmatprep.subr.mxu0 0.0
        %471 = vmatpush1.msra.mxu0 0.0
        %472 = vmatprep.subr.mxu0 0.0
        %473 = vmatpush1.msra.mxu0 0.0
        %474 = vmatprep.subr.mxu0 0.0
        %475 = vmatpush1.msra.mxu0 0.0
        %476 = vmatprep.subr.mxu0 0.0
        %477 = vmatpush1.msra.mxu0 0.0
        %478 = vmatprep.subr.mxu0 0.0
        %479 = vmatpush1.msra.mxu0 0.0
        %480 = vmatprep.subr.mxu0 0.0
        %481 = vmatpush1.msra.mxu0 0.0
        %482 = vmatprep.subr.mxu0 0.0
        %483 = vmatpush1.msra.mxu0 0.0
        %484 = vmatprep.subr.mxu0 0.0
        %485 = vmatpush1.msra.mxu0 0.0
        %486 = vmatprep.subr.mxu0 0.0
        %487 = vmatpush1.msra.mxu0 0.0
        %488 = vmatprep.subr.mxu0 0.0
        %489 = vmatpush1.msra.mxu0 0.0
        %490 = vmatprep.subr.mxu0 0.0
        %491 = vmatpush1.msra.mxu0 0.0
        %492 = vmatprep.subr.mxu0 0.0
        %493 = vmatpush1.msra.mxu0 0.0
        %494 = vmatprep.subr.mxu0 0.0
        %495 = vmatpush1.msra.mxu0 0.0
        %496 = vmatprep.subr.mxu0 0.0
        %497 = vmatpush1.msra.mxu0 0.0
        %498 = vmatprep.subr.mxu0 0.0
        %499 = vmatpush1.msra.mxu0 0.0
        %500 = vmatprep.subr.mxu0 0.0
        %501 = vmatpush1.msra.mxu0 0.0
        %502 = vmatprep.subr.mxu0 0.0
        %503 = vmatpush1.msra.mxu0 0.0
        %504 = vmatprep.subr.mxu0 0.0
        %505 = vmatpush1.msra.mxu0 0.0
        %506 = vmatprep.subr.mxu0 0.0
        %507 = vmatpush1.msra.mxu0 0.0
        %508 = vmatprep.subr.mxu0 0.0
        %509 = vmatpush1.msra.mxu0 0.0
        %510 = vmatprep.subr.mxu0 0.0
        %511 = vmatpush1.msra.mxu0 0.0
        %512 = vmatprep.subr.mxu0 0.0
        %513 = vmatpush1.msra.mxu0 0.0
        %514 = vmatprep.subr.mxu0 0.0
        %515 = vmatpush1.msra.mxu0 0.0
        %516 = vmatprep.subr.mxu0 0.0
        %517 = vmatpush1.msra.mxu0 0.0
        %518 = vmatprep.subr.mxu0 0.0
        %519 = vmatpush1.msra.mxu0 0.0
        %520 = vmatprep.subr.mxu0 0.0
        %521 = vmatpush1.msra.mxu0 0.0
        %522 = vmatprep.mubr.f32.mxu0 0.0
        %v523 = vand.u32 %v369, 4294901760
        %524 = vmatmul.mubr.f32.gmra.mrb[0].mxu0 %v523
        %v525 = vpop.f32.mrb[0].mxu0
        %v526 = vadd.f32 %v445, %v525
        %v527 = vpop.f32.mrb[0].mxu0
        %528 = vdwg.mxu0
        %529 = vmatprep.subr.mxu0 0.0
        %v530 = vand.u32 %v328, 4294901760
        %v531 = vsub.f32 %v328, %v530
        %532 = vmatpush1.msra.mxu0 %v531
        %533 = vmatprep.subr.mxu0 0.0
        %v534 = vand.u32 %v329, 4294901760
        %v535 = vsub.f32 %v329, %v534
        %536 = vmatpush1.msra.mxu0 %v535
        %537 = vmatprep.subr.mxu0 0.0
        %538 = vmatpush1.msra.mxu0 0.0
        %539 = vmatprep.subr.mxu0 0.0
        %540 = vmatpush1.msra.mxu0 0.0
        %541 = vmatprep.subr.mxu0 0.0
        %542 = vmatpush1.msra.mxu0 0.0
        %543 = vmatprep.subr.mxu0 0.0
        %544 = vmatpush1.msra.mxu0 0.0
        %545 = vmatprep.subr.mxu0 0.0
        %546 = vmatpush1.msra.mxu0 0.0
        %547 = vmatprep.subr.mxu0 0.0
        %548 = vmatpush1.msra.mxu0 0.0
        %549 = vmatprep.subr.mxu0 0.0
        %550 = vmatpush1.msra.mxu0 0.0
        %551 = vmatprep.subr.mxu0 0.0
        %552 = vmatpush1.msra.mxu0 0.0
        %553 = vmatprep.subr.mxu0 0.0
        %554 = vmatpush1.msra.mxu0 0.0
        %555 = vmatprep.subr.mxu0 0.0
        %556 = vmatpush1.msra.mxu0 0.0
        %557 = vmatprep.subr.mxu0 0.0
        %558 = vmatpush1.msra.mxu0 0.0
        %559 = vmatprep.subr.mxu0 0.0
        %560 = vmatpush1.msra.mxu0 0.0
        %561 = vmatprep.subr.mxu0 0.0
        %562 = vmatpush1.msra.mxu0 0.0
        %563 = vmatprep.subr.mxu0 0.0
        %564 = vmatpush1.msra.mxu0 0.0
        %565 = vmatprep.subr.mxu0 0.0
        %566 = vmatpush1.msra.mxu0 0.0
        %567 = vmatprep.subr.mxu0 0.0
        %568 = vmatpush1.msra.mxu0 0.0
        %569 = vmatprep.subr.mxu0 0.0
        %570 = vmatpush1.msra.mxu0 0.0
        %571 = vmatprep.subr.mxu0 0.0
        %572 = vmatpush1.msra.mxu0 0.0
        %573 = vmatprep.subr.mxu0 0.0
        %574 = vmatpush1.msra.mxu0 0.0
        %575 = vmatprep.subr.mxu0 0.0
        %576 = vmatpush1.msra.mxu0 0.0
        %577 = vmatprep.subr.mxu0 0.0
        %578 = vmatpush1.msra.mxu0 0.0
        %579 = vmatprep.subr.mxu0 0.0
        %580 = vmatpush1.msra.mxu0 0.0
        %581 = vmatprep.subr.mxu0 0.0
        %582 = vmatpush1.msra.mxu0 0.0
        %583 = vmatprep.subr.mxu0 0.0
        %584 = vmatpush1.msra.mxu0 0.0
        %585 = vmatprep.subr.mxu0 0.0
        %586 = vmatpush1.msra.mxu0 0.0
        %587 = vmatprep.subr.mxu0 0.0
        %588 = vmatpush1.msra.mxu0 0.0
        %589 = vmatprep.subr.mxu0 0.0
        %590 = vmatpush1.msra.mxu0 0.0
        %591 = vmatprep.subr.mxu0 0.0
        %592 = vmatpush1.msra.mxu0 0.0
        %593 = vmatprep.subr.mxu0 0.0
        %594 = vmatpush1.msra.mxu0 0.0
        %595 = vmatprep.subr.mxu0 0.0
        %596 = vmatpush1.msra.mxu0 0.0
        %597 = vmatprep.mubr.f32.mxu0 0.0
        %v598 = vand.u32 %v369, 4294901760
        %v599 = vsub.f32 %v369, %v598
        %600 = vmatmul.mubr.f32.gmra.mrb[0].mxu0 %v599
        %v601 = vpop.f32.mrb[0].mxu0
        %v602 = vadd.f32 %v526, %v601
        %v603 = vpop.f32.mrb[0].mxu0
        %604 = vdwg.mxu0
        %605 = vmatprep.subr.mxu0 0.0
        %v606 = vand.u32 %v328, 4294901760
        %607 = vmatpush1.msra.mxu0 %v606
        %608 = vmatprep.subr.mxu0 0.0
        %v609 = vand.u32 %v329, 4294901760
        %610 = vmatpush1.msra.mxu0 %v609
        %611 = vmatprep.subr.mxu0 0.0
        %612 = vmatpush1.msra.mxu0 0.0
        %613 = vmatprep.subr.mxu0 0.0
        %614 = vmatpush1.msra.mxu0 0.0
        %615 = vmatprep.subr.mxu0 0.0
        %616 = vmatpush1.msra.mxu0 0.0
        %617 = vmatprep.subr.mxu0 0.0
        %618 = vmatpush1.msra.mxu0 0.0
        %619 = vmatprep.subr.mxu0 0.0
        %620 = vmatpush1.msra.mxu0 0.0
        %621 = vmatprep.subr.mxu0 0.0
        %622 = vmatpush1.msra.mxu0 0.0
        %623 = vmatprep.subr.mxu0 0.0
        %624 = vmatpush1.msra.mxu0 0.0
        %625 = vmatprep.subr.mxu0 0.0
        %626 = vmatpush1.msra.mxu0 0.0
        %627 = vmatprep.subr.mxu0 0.0
        %628 = vmatpush1.msra.mxu0 0.0
        %629 = vmatprep.subr.mxu0 0.0
        %630 = vmatpush1.msra.mxu0 0.0
        %631 = vmatprep.subr.mxu0 0.0
        %632 = vmatpush1.msra.mxu0 0.0
        %633 = vmatprep.subr.mxu0 0.0
        %634 = vmatpush1.msra.mxu0 0.0
        %635 = vmatprep.subr.mxu0 0.0
        %636 = vmatpush1.msra.mxu0 0.0
        %637 = vmatprep.subr.mxu0 0.0
        %638 = vmatpush1.msra.mxu0 0.0
        %639 = vmatprep.subr.mxu0 0.0
        %640 = vmatpush1.msra.mxu0 0.0
        %641 = vmatprep.subr.mxu0 0.0
        %642 = vmatpush1.msra.mxu0 0.0
        %643 = vmatprep.subr.mxu0 0.0
        %644 = vmatpush1.msra.mxu0 0.0
        %645 = vmatprep.subr.mxu0 0.0
        %646 = vmatpush1.msra.mxu0 0.0
        %647 = vmatprep.subr.mxu0 0.0
        %648 = vmatpush1.msra.mxu0 0.0
        %649 = vmatprep.subr.mxu0 0.0
        %650 = vmatpush1.msra.mxu0 0.0
        %651 = vmatprep.subr.mxu0 0.0
        %652 = vmatpush1.msra.mxu0 0.0
        %653 = vmatprep.subr.mxu0 0.0
        %654 = vmatpush1.msra.mxu0 0.0
        %655 = vmatprep.subr.mxu0 0.0
        %656 = vmatpush1.msra.mxu0 0.0
        %657 = vmatprep.subr.mxu0 0.0
        %658 = vmatpush1.msra.mxu0 0.0
        %659 = vmatprep.subr.mxu0 0.0
        %660 = vmatpush1.msra.mxu0 0.0
        %661 = vmatprep.subr.mxu0 0.0
        %662 = vmatpush1.msra.mxu0 0.0
        %663 = vmatprep.subr.mxu0 0.0
        %664 = vmatpush1.msra.mxu0 0.0
        %665 = vmatprep.subr.mxu0 0.0
        %666 = vmatpush1.msra.mxu0 0.0
        %667 = vmatprep.subr.mxu0 0.0
        %668 = vmatpush1.msra.mxu0 0.0
        %669 = vmatprep.subr.mxu0 0.0
        %670 = vmatpush1.msra.mxu0 0.0
        %671 = vmatprep.mubr.f32.mxu0 0.0
        %v672 = vand.u32 %v369, 4294901760
        %v673 = vsub.f32 %v369, %v672
        %v674 = vand.u32 %v673, 4294901760
        %675 = vmatmul.mubr.f32.gmra.mrb[0].mxu0 %v674
        %v676 = vpop.f32.mrb[0].mxu0
        %v677 = vadd.f32 %v602, %v676
        %v678 = vpop.f32.mrb[0].mxu0
        %679 = vdwg.mxu0
        %680 = vmatprep.subr.mxu0 0.0
        %v681 = vand.u32 %v328, 4294901760
        %v682 = vsub.f32 %v328, %v681
        %v683 = vand.u32 %v682, 4294901760
        %684 = vmatpush1.msra.mxu0 %v683
        %685 = vmatprep.subr.mxu0 0.0
        %v686 = vand.u32 %v329, 4294901760
        %v687 = vsub.f32 %v329, %v686
        %v688 = vand.u32 %v687, 4294901760
        %689 = vmatpush1.msra.mxu0 %v688
        %690 = vmatprep.subr.mxu0 0.0
        %691 = vmatpush1.msra.mxu0 0.0
        %692 = vmatprep.subr.mxu0 0.0
        %693 = vmatpush1.msra.mxu0 0.0
        %694 = vmatprep.subr.mxu0 0.0
        %695 = vmatpush1.msra.mxu0 0.0
        %696 = vmatprep.subr.mxu0 0.0
        %697 = vmatpush1.msra.mxu0 0.0
        %698 = vmatprep.subr.mxu0 0.0
        %699 = vmatpush1.msra.mxu0 0.0
        %700 = vmatprep.subr.mxu0 0.0
        %701 = vmatpush1.msra.mxu0 0.0
        %702 = vmatprep.subr.mxu0 0.0
        %703 = vmatpush1.msra.mxu0 0.0
        %704 = vmatprep.subr.mxu0 0.0
        %705 = vmatpush1.msra.mxu0 0.0
        %706 = vmatprep.subr.mxu0 0.0
        %707 = vmatpush1.msra.mxu0 0.0
        %708 = vmatprep.subr.mxu0 0.0
        %709 = vmatpush1.msra.mxu0 0.0
        %710 = vmatprep.subr.mxu0 0.0
        %711 = vmatpush1.msra.mxu0 0.0
        %712 = vmatprep.subr.mxu0 0.0
        %713 = vmatpush1.msra.mxu0 0.0
        %714 = vmatprep.subr.mxu0 0.0
        %715 = vmatpush1.msra.mxu0 0.0
        %716 = vmatprep.subr.mxu0 0.0
        %717 = vmatpush1.msra.mxu0 0.0
        %718 = vmatprep.subr.mxu0 0.0
        %719 = vmatpush1.msra.mxu0 0.0
        %720 = vmatprep.subr.mxu0 0.0
        %721 = vmatpush1.msra.mxu0 0.0
        %722 = vmatprep.subr.mxu0 0.0
        %723 = vmatpush1.msra.mxu0 0.0
        %724 = vmatprep.subr.mxu0 0.0
        %725 = vmatpush1.msra.mxu0 0.0
        %726 = vmatprep.subr.mxu0 0.0
        %727 = vmatpush1.msra.mxu0 0.0
        %728 = vmatprep.subr.mxu0 0.0
        %729 = vmatpush1.msra.mxu0 0.0
        %730 = vmatprep.subr.mxu0 0.0
        %731 = vmatpush1.msra.mxu0 0.0
        %732 = vmatprep.subr.mxu0 0.0
        %733 = vmatpush1.msra.mxu0 0.0
        %734 = vmatprep.subr.mxu0 0.0
        %735 = vmatpush1.msra.mxu0 0.0
        %736 = vmatprep.subr.mxu0 0.0
        %737 = vmatpush1.msra.mxu0 0.0
        %738 = vmatprep.subr.mxu0 0.0
        %739 = vmatpush1.msra.mxu0 0.0
        %740 = vmatprep.subr.mxu0 0.0
        %741 = vmatpush1.msra.mxu0 0.0
        %742 = vmatprep.subr.mxu0 0.0
        %743 = vmatpush1.msra.mxu0 0.0
        %744 = vmatprep.subr.mxu0 0.0
        %745 = vmatpush1.msra.mxu0 0.0
        %746 = vmatprep.subr.mxu0 0.0
        %747 = vmatpush1.msra.mxu0 0.0
        %748 = vmatprep.subr.mxu0 0.0
        %749 = vmatpush1.msra.mxu0 0.0
        %750 = vmatprep.mubr.f32.mxu0 0.0
        %v751 = vand.u32 %v369, 4294901760
        %752 = vmatmul.mubr.f32.gmra.mrb[0].mxu0 %v751
        %v753 = vpop.f32.mrb[0].mxu0
        %v754 = vadd.f32 %v677, %v753
        %v755 = vpop.f32.mrb[0].mxu0
        %756 = vdwg.mxu0
        %757 = vmatprep.subr.mxu0 0.0
        %v758 = vand.u32 %v328, 4294901760
        %759 = vmatpush1.msra.mxu0 %v758
        %760 = vmatprep.subr.mxu0 0.0
        %v761 = vand.u32 %v329, 4294901760
        %762 = vmatpush1.msra.mxu0 %v761
        %763 = vmatprep.subr.mxu0 0.0
        %764 = vmatpush1.msra.mxu0 0.0
        %765 = vmatprep.subr.mxu0 0.0
        %766 = vmatpush1.msra.mxu0 0.0
        %767 = vmatprep.subr.mxu0 0.0
        %768 = vmatpush1.msra.mxu0 0.0
        %769 = vmatprep.subr.mxu0 0.0
        %770 = vmatpush1.msra.mxu0 0.0
        %771 = vmatprep.subr.mxu0 0.0
        %772 = vmatpush1.msra.mxu0 0.0
        %773 = vmatprep.subr.mxu0 0.0
        %774 = vmatpush1.msra.mxu0 0.0
        %775 = vmatprep.subr.mxu0 0.0
        %776 = vmatpush1.msra.mxu0 0.0
        %777 = vmatprep.subr.mxu0 0.0
        %778 = vmatpush1.msra.mxu0 0.0
        %779 = vmatprep.subr.mxu0 0.0
        %780 = vmatpush1.msra.mxu0 0.0
        %781 = vmatprep.subr.mxu0 0.0
        %782 = vmatpush1.msra.mxu0 0.0
        %783 = vmatprep.subr.mxu0 0.0
        %784 = vmatpush1.msra.mxu0 0.0
        %785 = vmatprep.subr.mxu0 0.0
        %786 = vmatpush1.msra.mxu0 0.0
        %787 = vmatprep.subr.mxu0 0.0
        %788 = vmatpush1.msra.mxu0 0.0
        %789 = vmatprep.subr.mxu0 0.0
        %790 = vmatpush1.msra.mxu0 0.0
        %791 = vmatprep.subr.mxu0 0.0
        %792 = vmatpush1.msra.mxu0 0.0
        %793 = vmatprep.subr.mxu0 0.0
        %794 = vmatpush1.msra.mxu0 0.0
        %795 = vmatprep.subr.mxu0 0.0
        %796 = vmatpush1.msra.mxu0 0.0
        %797 = vmatprep.subr.mxu0 0.0
        %798 = vmatpush1.msra.mxu0 0.0
        %799 = vmatprep.subr.mxu0 0.0
        %800 = vmatpush1.msra.mxu0 0.0
        %801 = vmatprep.subr.mxu0 0.0
        %802 = vmatpush1.msra.mxu0 0.0
        %803 = vmatprep.subr.mxu0 0.0
        %804 = vmatpush1.msra.mxu0 0.0
        %805 = vmatprep.subr.mxu0 0.0
        %806 = vmatpush1.msra.mxu0 0.0
        %807 = vmatprep.subr.mxu0 0.0
        %808 = vmatpush1.msra.mxu0 0.0
        %809 = vmatprep.subr.mxu0 0.0
        %810 = vmatpush1.msra.mxu0 0.0
        %811 = vmatprep.subr.mxu0 0.0
        %812 = vmatpush1.msra.mxu0 0.0
        %813 = vmatprep.subr.mxu0 0.0
        %814 = vmatpush1.msra.mxu0 0.0
        %815 = vmatprep.subr.mxu0 0.0
        %816 = vmatpush1.msra.mxu0 0.0
        %817 = vmatprep.subr.mxu0 0.0
        %818 = vmatpush1.msra.mxu0 0.0
        %819 = vmatprep.subr.mxu0 0.0
        %820 = vmatpush1.msra.mxu0 0.0
        %821 = vmatprep.subr.mxu0 0.0
        %822 = vmatpush1.msra.mxu0 0.0
        %823 = vmatprep.mubr.f32.mxu0 0.0
        %v824 = vand.u32 %v369, 4294901760
        %825 = vmatmul.mubr.f32.gmra.mrb[0].mxu0 %v824
        %v826 = vpop.f32.mrb[0].mxu0
        %v827 = vadd.f32 %v754, %v826
        %v828 = vpop.f32.mrb[0].mxu0
        %829 = vdwg.mxu0
        %v830 = vtanh.pop %v827
        %831 = vmatprep.subr.mxu0 0.0
        %v832 = vand.u32 %v331, 4294901760
        %833 = vmatpush1.msra.mxu0 %v832
        %834 = vmatprep.subr.mxu0 0.0
        %v835 = vand.u32 %v332, 4294901760
        %836 = vmatpush1.msra.mxu0 %v835
        %837 = vmatprep.subr.mxu0 0.0
        %v838 = vand.u32 %v333, 4294901760
        %839 = vmatpush1.msra.mxu0 %v838
        %840 = vmatprep.subr.mxu0 0.0
        %v841 = vand.u32 %v334, 4294901760
        %842 = vmatpush1.msra.mxu0 %v841
        %843 = vmatprep.subr.mxu0 0.0
        %v844 = vand.u32 %v335, 4294901760
        %845 = vmatpush1.msra.mxu0 %v844
        %846 = vmatprep.subr.mxu0 0.0
        %v847 = vand.u32 %v336, 4294901760
        %848 = vmatpush1.msra.mxu0 %v847
        %849 = vmatprep.subr.mxu0 0.0
        %v850 = vand.u32 %v337, 4294901760
        %851 = vmatpush1.msra.mxu0 %v850
        %852 = vmatprep.subr.mxu0 0.0
        %v853 = vand.u32 %v338, 4294901760
        %854 = vmatpush1.msra.mxu0 %v853
        %855 = vmatprep.subr.mxu0 0.0
        %v856 = vand.u32 %v339, 4294901760
        %857 = vmatpush1.msra.mxu0 %v856
        %858 = vmatprep.subr.mxu0 0.0
        %v859 = vand.u32 %v340, 4294901760
        %860 = vmatpush1.msra.mxu0 %v859
        %861 = vmatprep.subr.mxu0 0.0
        %v862 = vand.u32 %v341, 4294901760
        %863 = vmatpush1.msra.mxu0 %v862
        %864 = vmatprep.subr.mxu0 0.0
        %v865 = vand.u32 %v342, 4294901760
        %866 = vmatpush1.msra.mxu0 %v865
        %867 = vmatprep.subr.mxu0 0.0
        %v868 = vand.u32 %v343, 4294901760
        %869 = vmatpush1.msra.mxu0 %v868
        %870 = vmatprep.subr.mxu0 0.0
        %v871 = vand.u32 %v344, 4294901760
        %872 = vmatpush1.msra.mxu0 %v871
        %873 = vmatprep.subr.mxu0 0.0
        %v874 = vand.u32 %v345, 4294901760
        %875 = vmatpush1.msra.mxu0 %v874
        %876 = vmatprep.subr.mxu0 0.0
        %v877 = vand.u32 %v346, 4294901760
        %878 = vmatpush1.msra.mxu0 %v877
        %879 = vmatprep.subr.mxu0 0.0
        %880 = vmatpush1.msra.mxu0 0.0
        %881 = vmatprep.subr.mxu0 0.0
        %882 = vmatpush1.msra.mxu0 0.0
        %883 = vmatprep.subr.mxu0 0.0
        %884 = vmatpush1.msra.mxu0 0.0
        %885 = vmatprep.subr.mxu0 0.0
        %886 = vmatpush1.msra.mxu0 0.0
        %887 = vmatprep.subr.mxu0 0.0
        %888 = vmatpush1.msra.mxu0 0.0
        %889 = vmatprep.subr.mxu0 0.0
        %890 = vmatpush1.msra.mxu0 0.0
        %891 = vmatprep.subr.mxu0 0.0
        %892 = vmatpush1.msra.mxu0 0.0
        %893 = vmatprep.subr.mxu0 0.0
        %894 = vmatpush1.msra.mxu0 0.0
        %895 = vmatprep.subr.mxu0 0.0
        %896 = vmatpush1.msra.mxu0 0.0
        %897 = vmatprep.subr.mxu0 0.0
        %898 = vmatpush1.msra.mxu0 0.0
        %899 = vmatprep.subr.mxu0 0.0
        %900 = vmatpush1.msra.mxu0 0.0
        %901 = vmatprep.subr.mxu0 0.0
        %902 = vmatpush1.msra.mxu0 0.0
        %903 = vmatprep.subr.mxu0 0.0
        %904 = vmatpush1.msra.mxu0 0.0
        %905 = vmatprep.subr.mxu0 0.0
        %906 = vmatpush1.msra.mxu0 0.0
        %907 = vmatprep.subr.mxu0 0.0
        %908 = vmatpush1.msra.mxu0 0.0
        %909 = vmatprep.subr.mxu0 0.0
        %910 = vmatpush1.msra.mxu0 0.0
        %911 = vmatprep.mubr.f32.mxu0 0.0
        %v912 = vand.u32 %v830, 4294901760
        %v913 = vsub.f32 %v830, %v912
        %v914 = vand.u32 %v913, 4294901760
        %v915 = vsub.f32 %v913, %v914
        %v916 = vand.u32 %v915, 4294901760
        %917 = vmatmul.mubr.f32.gmra.mrb[0].mxu0 %v916
        %v918 = vpop.f32.mrb[0].mxu0
        %v919 = vadd.f32 0.0, %v918
        %v920 = vpop.f32.mrb[0].mxu0
        %921 = vdwg.mxu0
        %922 = vmatprep.subr.mxu0 0.0
        %v923 = vand.u32 %v331, 4294901760
        %v924 = vsub.f32 %v331, %v923
        %v925 = vand.u32 %v924, 4294901760
        %v926 = vsub.f32 %v924, %v925
        %v927 = vand.u32 %v926, 4294901760
        %928 = vmatpush1.msra.mxu0 %v927
        %929 = vmatprep.subr.mxu0 0.0
        %v930 = vand.u32 %v332, 4294901760
        %v931 = vsub.f32 %v332, %v930
        %v932 = vand.u32 %v931, 4294901760
        %v933 = vsub.f32 %v931, %v932
        %v934 = vand.u32 %v933, 4294901760
        %935 = vmatpush1.msra.mxu0 %v934
        %936 = vmatprep.subr.mxu0 0.0
        %v937 = vand.u32 %v333, 4294901760
        %v938 = vsub.f32 %v333, %v937
        %v939 = vand.u32 %v938, 4294901760
        %v940 = vsub.f32 %v938, %v939
        %v941 = vand.u32 %v940, 4294901760
        %942 = vmatpush1.msra.mxu0 %v941
        %943 = vmatprep.subr.mxu0 0.0
        %v944 = vand.u32 %v334, 4294901760
        %v945 = vsub.f32 %v334, %v944
        %v946 = vand.u32 %v945, 4294901760
        %v947 = vsub.f32 %v945, %v946
        %v948 = vand.u32 %v947, 4294901760
        %949 = vmatpush1.msra.mxu0 %v948
        %950 = vmatprep.subr.mxu0 0.0
        %v951 = vand.u32 %v335, 4294901760
        %v952 = vsub.f32 %v335, %v951
        %v953 = vand.u32 %v952, 4294901760
        %v954 = vsub.f32 %v952, %v953
        %v955 = vand.u32 %v954, 4294901760
        %956 = vmatpush1.msra.mxu0 %v955
        %957 = vmatprep.subr.mxu0 0.0
        %v958 = vand.u32 %v336, 4294901760
        %v959 = vsub.f32 %v336, %v958
        %v960 = vand.u32 %v959, 4294901760
        %v961 = vsub.f32 %v959, %v960
        %v962 = vand.u32 %v961, 4294901760
        %963 = vmatpush1.msra.mxu0 %v962
        %964 = vmatprep.subr.mxu0 0.0
        %v965 = vand.u32 %v337, 4294901760
        %v966 = vsub.f32 %v337, %v965
        %v967 = vand.u32 %v966, 4294901760
        %v968 = vsub.f32 %v966, %v967
        %v969 = vand.u32 %v968, 4294901760
        %970 = vmatpush1.msra.mxu0 %v969
        %971 = vmatprep.subr.mxu0 0.0
        %v972 = vand.u32 %v338, 4294901760
        %v973 = vsub.f32 %v338, %v972
        %v974 = vand.u32 %v973, 4294901760
        %v975 = vsub.f32 %v973, %v974
        %v976 = vand.u32 %v975, 4294901760
        %977 = vmatpush1.msra.mxu0 %v976
        %978 = vmatprep.subr.mxu0 0.0
        %v979 = vand.u32 %v339, 4294901760
        %v980 = vsub.f32 %v339, %v979
        %v981 = vand.u32 %v980, 4294901760
        %v982 = vsub.f32 %v980, %v981
        %v983 = vand.u32 %v982, 4294901760
        %984 = vmatpush1.msra.mxu0 %v983
        %985 = vmatprep.subr.mxu0 0.0
        %v986 = vand.u32 %v340, 4294901760
        %v987 = vsub.f32 %v340, %v986
        %v988 = vand.u32 %v987, 4294901760
        %v989 = vsub.f32 %v987, %v988
        %v990 = vand.u32 %v989, 4294901760
        %991 = vmatpush1.msra.mxu0 %v990
        %992 = vmatprep.subr.mxu0 0.0
        %v993 = vand.u32 %v341, 4294901760
        %v994 = vsub.f32 %v341, %v993
        %v995 = vand.u32 %v994, 4294901760
        %v996 = vsub.f32 %v994, %v995
        %v997 = vand.u32 %v996, 4294901760
        %998 = vmatpush1.msra.mxu0 %v997
        %999 = vmatprep.subr.mxu0 0.0
        %v1000 = vand.u32 %v342, 4294901760
        %v1001 = vsub.f32 %v342, %v1000
        %v1002 = vand.u32 %v1001, 4294901760
        %v1003 = vsub.f32 %v1001, %v1002
        %v1004 = vand.u32 %v1003, 4294901760
        %1005 = vmatpush1.msra.mxu0 %v1004
        %1006 = vmatprep.subr.mxu0 0.0
        %v1007 = vand.u32 %v343, 4294901760
        %v1008 = vsub.f32 %v343, %v1007
        %v1009 = vand.u32 %v1008, 4294901760
        %v1010 = vsub.f32 %v1008, %v1009
        %v1011 = vand.u32 %v1010, 4294901760
        %1012 = vmatpush1.msra.mxu0 %v1011
        %1013 = vmatprep.subr.mxu0 0.0
        %v1014 = vand.u32 %v344, 4294901760
        %v1015 = vsub.f32 %v344, %v1014
        %v1016 = vand.u32 %v1015, 4294901760
        %v1017 = vsub.f32 %v1015, %v1016
        %v1018 = vand.u32 %v1017, 4294901760
        %1019 = vmatpush1.msra.mxu0 %v1018
        %1020 = vmatprep.subr.mxu0 0.0
        %v1021 = vand.u32 %v345, 4294901760
        %v1022 = vsub.f32 %v345, %v1021
        %v1023 = vand.u32 %v1022, 4294901760
        %v1024 = vsub.f32 %v1022, %v1023
        %v1025 = vand.u32 %v1024, 4294901760
        %1026 = vmatpush1.msra.mxu0 %v1025
        %1027 = vmatprep.subr.mxu0 0.0
        %v1028 = vand.u32 %v346, 4294901760
        %v1029 = vsub.f32 %v346, %v1028
        %v1030 = vand.u32 %v1029, 4294901760
        %v1031 = vsub.f32 %v1029, %v1030
        %v1032 = vand.u32 %v1031, 4294901760
        %1033 = vmatpush1.msra.mxu0 %v1032
        %1034 = vmatprep.subr.mxu0 0.0
        %1035 = vmatpush1.msra.mxu0 0.0
        %1036 = vmatprep.subr.mxu0 0.0
        %1037 = vmatpush1.msra.mxu0 0.0
        %1038 = vmatprep.subr.mxu0 0.0
        %1039 = vmatpush1.msra.mxu0 0.0
        %1040 = vmatprep.subr.mxu0 0.0
        %1041 = vmatpush1.msra.mxu0 0.0
        %1042 = vmatprep.subr.mxu0 0.0
        %1043 = vmatpush1.msra.mxu0 0.0
        %1044 = vmatprep.subr.mxu0 0.0
        %1045 = vmatpush1.msra.mxu0 0.0
        %1046 = vmatprep.subr.mxu0 0.0
        %1047 = vmatpush1.msra.mxu0 0.0
        %1048 = vmatprep.subr.mxu0 0.0
        %1049 = vmatpush1.msra.mxu0 0.0
        %1050 = vmatprep.subr.mxu0 0.0
        %1051 = vmatpush1.msra.mxu0 0.0
        %1052 = vmatprep.subr.mxu0 0.0
        %1053 = vmatpush1.msra.mxu0 0.0
        %1054 = vmatprep.subr.mxu0 0.0
        %1055 = vmatpush1.msra.mxu0 0.0
        %1056 = vmatprep.subr.mxu0 0.0
        %1057 = vmatpush1.msra.mxu0 0.0
        %1058 = vmatprep.subr.mxu0 0.0
        %1059 = vmatpush1.msra.mxu0 0.0
        %1060 = vmatprep.subr.mxu0 0.0
        %1061 = vmatpush1.msra.mxu0 0.0
        %1062 = vmatprep.subr.mxu0 0.0
        %1063 = vmatpush1.msra.mxu0 0.0
        %1064 = vmatprep.subr.mxu0 0.0
        %1065 = vmatpush1.msra.mxu0 0.0
        %1066 = vmatprep.mubr.f32.mxu0 0.0
        %v1067 = vand.u32 %v830, 4294901760
        %1068 = vmatmul.mubr.f32.gmra.mrb[0].mxu0 %v1067
        %v1069 = vpop.f32.mrb[0].mxu0
        %v1070 = vadd.f32 %v919, %v1069
        %v1071 = vpop.f32.mrb[0].mxu0
        %1072 = vdwg.mxu0
        %1073 = vmatprep.subr.mxu0 0.0
        %v1074 = vand.u32 %v331, 4294901760
        %v1075 = vsub.f32 %v331, %v1074
        %1076 = vmatpush1.msra.mxu0 %v1075
        %1077 = vmatprep.subr.mxu0 0.0
        %v1078 = vand.u32 %v332, 4294901760
        %v1079 = vsub.f32 %v332, %v1078
        %1080 = vmatpush1.msra.mxu0 %v1079
        %1081 = vmatprep.subr.mxu0 0.0
        %v1082 = vand.u32 %v333, 4294901760
        %v1083 = vsub.f32 %v333, %v1082
        %1084 = vmatpush1.msra.mxu0 %v1083
        %1085 = vmatprep.subr.mxu0 0.0
        %v1086 = vand.u32 %v334, 4294901760
        %v1087 = vsub.f32 %v334, %v1086
        %1088 = vmatpush1.msra.mxu0 %v1087
        %1089 = vmatprep.subr.mxu0 0.0
        %v1090 = vand.u32 %v335, 4294901760
        %v1091 = vsub.f32 %v335, %v1090
        %1092 = vmatpush1.msra.mxu0 %v1091
        %1093 = vmatprep.subr.mxu0 0.0
        %v1094 = vand.u32 %v336, 4294901760
        %v1095 = vsub.f32 %v336, %v1094
        %1096 = vmatpush1.msra.mxu0 %v1095
        %1097 = vmatprep.subr.mxu0 0.0
        %v1098 = vand.u32 %v337, 4294901760
        %v1099 = vsub.f32 %v337, %v1098
        %1100 = vmatpush1.msra.mxu0 %v1099
        %1101 = vmatprep.subr.mxu0 0.0
        %v1102 = vand.u32 %v338, 4294901760
        %v1103 = vsub.f32 %v338, %v1102
        %1104 = vmatpush1.msra.mxu0 %v1103
        %1105 = vmatprep.subr.mxu0 0.0
        %v1106 = vand.u32 %v339, 4294901760
        %v1107 = vsub.f32 %v339, %v1106
        %1108 = vmatpush1.msra.mxu0 %v1107
        %1109 = vmatprep.subr.mxu0 0.0
        %v1110 = vand.u32 %v340, 4294901760
        %v1111 = vsub.f32 %v340, %v1110
        %1112 = vmatpush1.msra.mxu0 %v1111
        %1113 = vmatprep.subr.mxu0 0.0
        %v1114 = vand.u32 %v341, 4294901760
        %v1115 = vsub.f32 %v341, %v1114
        %1116 = vmatpush1.msra.mxu0 %v1115
        %1117 = vmatprep.subr.mxu0 0.0
        %v1118 = vand.u32 %v342, 4294901760
        %v1119 = vsub.f32 %v342, %v1118
        %1120 = vmatpush1.msra.mxu0 %v1119
        %1121 = vmatprep.subr.mxu0 0.0
        %v1122 = vand.u32 %v343, 4294901760
        %v1123 = vsub.f32 %v343, %v1122
        %1124 = vmatpush1.msra.mxu0 %v1123
        %1125 = vmatprep.subr.mxu0 0.0
        %v1126 = vand.u32 %v344, 4294901760
        %v1127 = vsub.f32 %v344, %v1126
        %1128 = vmatpush1.msra.mxu0 %v1127
        %1129 = vmatprep.subr.mxu0 0.0
        %v1130 = vand.u32 %v345, 4294901760
        %v1131 = vsub.f32 %v345, %v1130
        %1132 = vmatpush1.msra.mxu0 %v1131
        %1133 = vmatprep.subr.mxu0 0.0
        %v1134 = vand.u32 %v346, 4294901760
        %v1135 = vsub.f32 %v346, %v1134
        %1136 = vmatpush1.msra.mxu0 %v1135
        %1137 = vmatprep.subr.mxu0 0.0
        %1138 = vmatpush1.msra.mxu0 0.0
        %1139 = vmatprep.subr.mxu0 0.0
        %1140 = vmatpush1.msra.mxu0 0.0
        %1141 = vmatprep.subr.mxu0 0.0
        %1142 = vmatpush1.msra.mxu0 0.0
        %1143 = vmatprep.subr.mxu0 0.0
        %1144 = vmatpush1.msra.mxu0 0.0
        %1145 = vmatprep.subr.mxu0 0.0
        %1146 = vmatpush1.msra.mxu0 0.0
        %1147 = vmatprep.subr.mxu0 0.0
        %1148 = vmatpush1.msra.mxu0 0.0
        %1149 = vmatprep.subr.mxu0 0.0
        %1150 = vmatpush1.msra.mxu0 0.0
        %1151 = vmatprep.subr.mxu0 0.0
        %1152 = vmatpush1.msra.mxu0 0.0
        %1153 = vmatprep.subr.mxu0 0.0
        %1154 = vmatpush1.msra.mxu0 0.0
        %1155 = vmatprep.subr.mxu0 0.0
        %1156 = vmatpush1.msra.mxu0 0.0
        %1157 = vmatprep.subr.mxu0 0.0
        %1158 = vmatpush1.msra.mxu0 0.0
        %1159 = vmatprep.subr.mxu0 0.0
        %1160 = vmatpush1.msra.mxu0 0.0
        %1161 = vmatprep.subr.mxu0 0.0
        %1162 = vmatpush1.msra.mxu0 0.0
        %1163 = vmatprep.subr.mxu0 0.0
        %1164 = vmatpush1.msra.mxu0 0.0
        %1165 = vmatprep.subr.mxu0 0.0
        %1166 = vmatpush1.msra.mxu0 0.0
        %1167 = vmatprep.subr.mxu0 0.0
        %1168 = vmatpush1.msra.mxu0 0.0
        %1169 = vmatprep.mubr.f32.mxu0 0.0
        %v1170 = vand.u32 %v830, 4294901760
        %v1171 = vsub.f32 %v830, %v1170
        %1172 = vmatmul.mubr.f32.gmra.mrb[0].mxu0 %v1171
        %v1173 = vpop.f32.mrb[0].mxu0
        %v1174 = vadd.f32 %v1070, %v1173
        %v1175 = vpop.f32.mrb[0].mxu0
        %1176 = vdwg.mxu0
        %1177 = vmatprep.subr.mxu0 0.0
        %v1178 = vand.u32 %v331, 4294901760
        %1179 = vmatpush1.msra.mxu0 %v1178
        %1180 = vmatprep.subr.mxu0 0.0
        %v1181 = vand.u32 %v332, 4294901760
        %1182 = vmatpush1.msra.mxu0 %v1181
        %1183 = vmatprep.subr.mxu0 0.0
        %v1184 = vand.u32 %v333, 4294901760
        %1185 = vmatpush1.msra.mxu0 %v1184
        %1186 = vmatprep.subr.mxu0 0.0
        %v1187 = vand.u32 %v334, 4294901760
        %1188 = vmatpush1.msra.mxu0 %v1187
        %1189 = vmatprep.subr.mxu0 0.0
        %v1190 = vand.u32 %v335, 4294901760
        %1191 = vmatpush1.msra.mxu0 %v1190
        %1192 = vmatprep.subr.mxu0 0.0
        %v1193 = vand.u32 %v336, 4294901760
        %1194 = vmatpush1.msra.mxu0 %v1193
        %1195 = vmatprep.subr.mxu0 0.0
        %v1196 = vand.u32 %v337, 4294901760
        %1197 = vmatpush1.msra.mxu0 %v1196
        %1198 = vmatprep.subr.mxu0 0.0
        %v1199 = vand.u32 %v338, 4294901760
        %1200 = vmatpush1.msra.mxu0 %v1199
        %1201 = vmatprep.subr.mxu0 0.0
        %v1202 = vand.u32 %v339, 4294901760
        %1203 = vmatpush1.msra.mxu0 %v1202
        %1204 = vmatprep.subr.mxu0 0.0
        %v1205 = vand.u32 %v340, 4294901760
        %1206 = vmatpush1.msra.mxu0 %v1205
        %1207 = vmatprep.subr.mxu0 0.0
        %v1208 = vand.u32 %v341, 4294901760
        %1209 = vmatpush1.msra.mxu0 %v1208
        %1210 = vmatprep.subr.mxu0 0.0
        %v1211 = vand.u32 %v342, 4294901760
        %1212 = vmatpush1.msra.mxu0 %v1211
        %1213 = vmatprep.subr.mxu0 0.0
        %v1214 = vand.u32 %v343, 4294901760
        %1215 = vmatpush1.msra.mxu0 %v1214
        %1216 = vmatprep.subr.mxu0 0.0
        %v1217 = vand.u32 %v344, 4294901760
        %1218 = vmatpush1.msra.mxu0 %v1217
        %1219 = vmatprep.subr.mxu0 0.0
        %v1220 = vand.u32 %v345, 4294901760
        %1221 = vmatpush1.msra.mxu0 %v1220
        %1222 = vmatprep.subr.mxu0 0.0
        %v1223 = vand.u32 %v346, 4294901760
        %1224 = vmatpush1.msra.mxu0 %v1223
        %1225 = vmatprep.subr.mxu0 0.0
        %1226 = vmatpush1.msra.mxu0 0.0
        %1227 = vmatprep.subr.mxu0 0.0
        %1228 = vmatpush1.msra.mxu0 0.0
        %1229 = vmatprep.subr.mxu0 0.0
        %1230 = vmatpush1.msra.mxu0 0.0
        %1231 = vmatprep.subr.mxu0 0.0
        %1232 = vmatpush1.msra.mxu0 0.0
        %1233 = vmatprep.subr.mxu0 0.0
        %1234 = vmatpush1.msra.mxu0 0.0
        %1235 = vmatprep.subr.mxu0 0.0
        %1236 = vmatpush1.msra.mxu0 0.0
        %1237 = vmatprep.subr.mxu0 0.0
        %1238 = vmatpush1.msra.mxu0 0.0
        %1239 = vmatprep.subr.mxu0 0.0
        %1240 = vmatpush1.msra.mxu0 0.0
        %1241 = vmatprep.subr.mxu0 0.0
        %1242 = vmatpush1.msra.mxu0 0.0
        %1243 = vmatprep.subr.mxu0 0.0
        %1244 = vmatpush1.msra.mxu0 0.0
        %1245 = vmatprep.subr.mxu0 0.0
        %1246 = vmatpush1.msra.mxu0 0.0
        %1247 = vmatprep.subr.mxu0 0.0
        %1248 = vmatpush1.msra.mxu0 0.0
        %1249 = vmatprep.subr.mxu0 0.0
        %1250 = vmatpush1.msra.mxu0 0.0
        %1251 = vmatprep.subr.mxu0 0.0
        %1252 = vmatpush1.msra.mxu0 0.0
        %1253 = vmatprep.subr.mxu0 0.0
        %1254 = vmatpush1.msra.mxu0 0.0
        %1255 = vmatprep.subr.mxu0 0.0
        %1256 = vmatpush1.msra.mxu0 0.0
        %1257 = vmatprep.mubr.f32.mxu0 0.0
        %v1258 = vand.u32 %v830, 4294901760
        %v1259 = vsub.f32 %v830, %v1258
        %v1260 = vand.u32 %v1259, 4294901760
        %1261 = vmatmul.mubr.f32.gmra.mrb[0].mxu0 %v1260
        %v1262 = vpop.f32.mrb[0].mxu0
        %v1263 = vadd.f32 %v1174, %v1262
        %v1264 = vpop.f32.mrb[0].mxu0
        %1265 = vdwg.mxu0
        %1266 = vmatprep.subr.mxu0 0.0
        %v1267 = vand.u32 %v331, 4294901760
        %v1268 = vsub.f32 %v331, %v1267
        %v1269 = vand.u32 %v1268, 4294901760
        %1270 = vmatpush1.msra.mxu0 %v1269
        %1271 = vmatprep.subr.mxu0 0.0
        %v1272 = vand.u32 %v332, 4294901760
        %v1273 = vsub.f32 %v332, %v1272
        %v1274 = vand.u32 %v1273, 4294901760
        %1275 = vmatpush1.msra.mxu0 %v1274
        %1276 = vmatprep.subr.mxu0 0.0
        %v1277 = vand.u32 %v333, 4294901760
        %v1278 = vsub.f32 %v333, %v1277
        %v1279 = vand.u32 %v1278, 4294901760
        %1280 = vmatpush1.msra.mxu0 %v1279
        %1281 = vmatprep.subr.mxu0 0.0
        %v1282 = vand.u32 %v334, 4294901760
        %v1283 = vsub.f32 %v334, %v1282
        %v1284 = vand.u32 %v1283, 4294901760
        %1285 = vmatpush1.msra.mxu0 %v1284
        %1286 = vmatprep.subr.mxu0 0.0
        %v1287 = vand.u32 %v335, 4294901760
        %v1288 = vsub.f32 %v335, %v1287
        %v1289 = vand.u32 %v1288, 4294901760
        %1290 = vmatpush1.msra.mxu0 %v1289
        %1291 = vmatprep.subr.mxu0 0.0
        %v1292 = vand.u32 %v336, 4294901760
        %v1293 = vsub.f32 %v336, %v1292
        %v1294 = vand.u32 %v1293, 4294901760
        %1295 = vmatpush1.msra.mxu0 %v1294
        %1296 = vmatprep.subr.mxu0 0.0
        %v1297 = vand.u32 %v337, 4294901760
        %v1298 = vsub.f32 %v337, %v1297
        %v1299 = vand.u32 %v1298, 4294901760
        %1300 = vmatpush1.msra.mxu0 %v1299
        %1301 = vmatprep.subr.mxu0 0.0
        %v1302 = vand.u32 %v338, 4294901760
        %v1303 = vsub.f32 %v338, %v1302
        %v1304 = vand.u32 %v1303, 4294901760
        %1305 = vmatpush1.msra.mxu0 %v1304
        %1306 = vmatprep.subr.mxu0 0.0
        %v1307 = vand.u32 %v339, 4294901760
        %v1308 = vsub.f32 %v339, %v1307
        %v1309 = vand.u32 %v1308, 4294901760
        %1310 = vmatpush1.msra.mxu0 %v1309
        %1311 = vmatprep.subr.mxu0 0.0
        %v1312 = vand.u32 %v340, 4294901760
        %v1313 = vsub.f32 %v340, %v1312
        %v1314 = vand.u32 %v1313, 4294901760
        %1315 = vmatpush1.msra.mxu0 %v1314
        %1316 = vmatprep.subr.mxu0 0.0
        %v1317 = vand.u32 %v341, 4294901760
        %v1318 = vsub.f32 %v341, %v1317
        %v1319 = vand.u32 %v1318, 4294901760
        %1320 = vmatpush1.msra.mxu0 %v1319
        %1321 = vmatprep.subr.mxu0 0.0
        %v1322 = vand.u32 %v342, 4294901760
        %v1323 = vsub.f32 %v342, %v1322
        %v1324 = vand.u32 %v1323, 4294901760
        %1325 = vmatpush1.msra.mxu0 %v1324
        %1326 = vmatprep.subr.mxu0 0.0
        %v1327 = vand.u32 %v343, 4294901760
        %v1328 = vsub.f32 %v343, %v1327
        %v1329 = vand.u32 %v1328, 4294901760
        %1330 = vmatpush1.msra.mxu0 %v1329
        %1331 = vmatprep.subr.mxu0 0.0
        %v1332 = vand.u32 %v344, 4294901760
        %v1333 = vsub.f32 %v344, %v1332
        %v1334 = vand.u32 %v1333, 4294901760
        %1335 = vmatpush1.msra.mxu0 %v1334
        %1336 = vmatprep.subr.mxu0 0.0
        %v1337 = vand.u32 %v345, 4294901760
        %v1338 = vsub.f32 %v345, %v1337
        %v1339 = vand.u32 %v1338, 4294901760
        %1340 = vmatpush1.msra.mxu0 %v1339
        %1341 = vmatprep.subr.mxu0 0.0
        %v1342 = vand.u32 %v346, 4294901760
        %v1343 = vsub.f32 %v346, %v1342
        %v1344 = vand.u32 %v1343, 4294901760
        %1345 = vmatpush1.msra.mxu0 %v1344
        %1346 = vmatprep.subr.mxu0 0.0
        %1347 = vmatpush1.msra.mxu0 0.0
        %1348 = vmatprep.subr.mxu0 0.0
        %1349 = vmatpush1.msra.mxu0 0.0
        %1350 = vmatprep.subr.mxu0 0.0
        %1351 = vmatpush1.msra.mxu0 0.0
        %1352 = vmatprep.subr.mxu0 0.0
        %1353 = vmatpush1.msra.mxu0 0.0
        %1354 = vmatprep.subr.mxu0 0.0
        %1355 = vmatpush1.msra.mxu0 0.0
        %1356 = vmatprep.subr.mxu0 0.0
        %1357 = vmatpush1.msra.mxu0 0.0
        %1358 = vmatprep.subr.mxu0 0.0
        %1359 = vmatpush1.msra.mxu0 0.0
        %1360 = vmatprep.subr.mxu0 0.0
        %1361 = vmatpush1.msra.mxu0 0.0
        %1362 = vmatprep.subr.mxu0 0.0
        %1363 = vmatpush1.msra.mxu0 0.0
        %1364 = vmatprep.subr.mxu0 0.0
        %1365 = vmatpush1.msra.mxu0 0.0
        %1366 = vmatprep.subr.mxu0 0.0
        %1367 = vmatpush1.msra.mxu0 0.0
        %1368 = vmatprep.subr.mxu0 0.0
        %1369 = vmatpush1.msra.mxu0 0.0
        %1370 = vmatprep.subr.mxu0 0.0
        %1371 = vmatpush1.msra.mxu0 0.0
        %1372 = vmatprep.subr.mxu0 0.0
        %1373 = vmatpush1.msra.mxu0 0.0
        %1374 = vmatprep.subr.mxu0 0.0
        %1375 = vmatpush1.msra.mxu0 0.0
        %1376 = vmatprep.subr.mxu0 0.0
        %1377 = vmatpush1.msra.mxu0 0.0
        %1378 = vmatprep.mubr.f32.mxu0 0.0
        %v1379 = vand.u32 %v830, 4294901760
        %1380 = vmatmul.mubr.f32.gmra.mrb[0].mxu0 %v1379
        %v1381 = vpop.f32.mrb[0].mxu0
        %v1382 = vadd.f32 %v1263, %v1381
        %v1383 = vpop.f32.mrb[0].mxu0
        %1384 = vdwg.mxu0
        %1385 = vmatprep.subr.mxu0 0.0
        %v1386 = vand.u32 %v331, 4294901760
        %1387 = vmatpush1.msra.mxu0 %v1386
        %1388 = vmatprep.subr.mxu0 0.0
        %v1389 = vand.u32 %v332, 4294901760
        %1390 = vmatpush1.msra.mxu0 %v1389
        %1391 = vmatprep.subr.mxu0 0.0
        %v1392 = vand.u32 %v333, 4294901760
        %1393 = vmatpush1.msra.mxu0 %v1392
        %1394 = vmatprep.subr.mxu0 0.0
        %v1395 = vand.u32 %v334, 4294901760
        %1396 = vmatpush1.msra.mxu0 %v1395
        %1397 = vmatprep.subr.mxu0 0.0
        %v1398 = vand.u32 %v335, 4294901760
        %1399 = vmatpush1.msra.mxu0 %v1398
        %1400 = vmatprep.subr.mxu0 0.0
        %v1401 = vand.u32 %v336, 4294901760
        %1402 = vmatpush1.msra.mxu0 %v1401
        %1403 = vmatprep.subr.mxu0 0.0
        %v1404 = vand.u32 %v337, 4294901760
        %1405 = vmatpush1.msra.mxu0 %v1404
        %1406 = vmatprep.subr.mxu0 0.0
        %v1407 = vand.u32 %v338, 4294901760
        %1408 = vmatpush1.msra.mxu0 %v1407
        %1409 = vmatprep.subr.mxu0 0.0
        %v1410 = vand.u32 %v339, 4294901760
        %1411 = vmatpush1.msra.mxu0 %v1410
        %1412 = vmatprep.subr.mxu0 0.0
        %v1413 = vand.u32 %v340, 4294901760
        %1414 = vmatpush1.msra.mxu0 %v1413
        %1415 = vmatprep.subr.mxu0 0.0
        %v1416 = vand.u32 %v341, 4294901760
        %1417 = vmatpush1.msra.mxu0 %v1416
        %1418 = vmatprep.subr.mxu0 0.0
        %v1419 = vand.u32 %v342, 4294901760
        %1420 = vmatpush1.msra.mxu0 %v1419
        %1421 = vmatprep.subr.mxu0 0.0
        %v1422 = vand.u32 %v343, 4294901760
        %1423 = vmatpush1.msra.mxu0 %v1422
        %1424 = vmatprep.subr.mxu0 0.0
        %v1425 = vand.u32 %v344, 4294901760
        %1426 = vmatpush1.msra.mxu0 %v1425
        %1427 = vmatprep.subr.mxu0 0.0
        %v1428 = vand.u32 %v345, 4294901760
        %1429 = vmatpush1.msra.mxu0 %v1428
        %1430 = vmatprep.subr.mxu0 0.0
        %v1431 = vand.u32 %v346, 4294901760
        %1432 = vmatpush1.msra.mxu0 %v1431
        %1433 = vmatprep.subr.mxu0 0.0
        %1434 = vmatpush1.msra.mxu0 0.0
        %1435 = vmatprep.subr.mxu0 0.0
        %1436 = vmatpush1.msra.mxu0 0.0
        %1437 = vmatprep.subr.mxu0 0.0
        %1438 = vmatpush1.msra.mxu0 0.0
        %1439 = vmatprep.subr.mxu0 0.0
        %1440 = vmatpush1.msra.mxu0 0.0
        %1441 = vmatprep.subr.mxu0 0.0
        %1442 = vmatpush1.msra.mxu0 0.0
        %1443 = vmatprep.subr.mxu0 0.0
        %1444 = vmatpush1.msra.mxu0 0.0
        %1445 = vmatprep.subr.mxu0 0.0
        %1446 = vmatpush1.msra.mxu0 0.0
        %1447 = vmatprep.subr.mxu0 0.0
        %1448 = vmatpush1.msra.mxu0 0.0
        %1449 = vmatprep.subr.mxu0 0.0
        %1450 = vmatpush1.msra.mxu0 0.0
        %1451 = vmatprep.subr.mxu0 0.0
        %1452 = vmatpush1.msra.mxu0 0.0
        %1453 = vmatprep.subr.mxu0 0.0
        %1454 = vmatpush1.msra.mxu0 0.0
        %1455 = vmatprep.subr.mxu0 0.0
        %1456 = vmatpush1.msra.mxu0 0.0
        %1457 = vmatprep.subr.mxu0 0.0
        %1458 = vmatpush1.msra.mxu0 0.0
        %1459 = vmatprep.subr.mxu0 0.0
        %1460 = vmatpush1.msra.mxu0 0.0
        %1461 = vmatprep.subr.mxu0 0.0
        %1462 = vmatpush1.msra.mxu0 0.0
        %1463 = vmatprep.subr.mxu0 0.0
        %1464 = vmatpush1.msra.mxu0 0.0
        %1465 = vmatprep.mubr.f32.mxu0 0.0
        %v1466 = vand.u32 %v830, 4294901760
        %1467 = vmatmul.mubr.f32.gmra.mrb[0].mxu0 %v1466
        %v1468 = vpop.f32.mrb[0].mxu0
        %v1469 = vadd.f32 %v1382, %v1468
        %v1470 = vpop.f32.mrb[0].mxu0
        %1471 = vdwg.mxu0
        %v1472 = vadd.f32 %v1469, %v347
        %v1473 = vlaneseq
        %v1474 = vand.u32 %v1473, 127
        %vm1475 = vcmp.eq.s32.totalorder %v1474, 0
        %v1476 = vsel %vm1475, %v1472, 1.0
        %v1477 = vsel %vm1475, 1.0, %v1472
        %vm1478 = vcmask 15360
        %v1480 = vsel %vm1478, %v1476, 0
        %v1483 = vsel %vm1478, %v1477, 0
        %1485 = vmatprep.subr.mxu0 0.0
        %v1486 = vand.u32 %v1483, 4294901760
        %1487 = vmatpush1.xpose.msra.mxu0 %v1486
        %1488 = vmatprep.subr.mxu0 0.0
        %1489 = vmatpush1.xpose.msra.mxu0 0.0
        %1490 = vmatprep.subr.mxu0 0.0
        %1491 = vmatpush1.xpose.msra.mxu0 0.0
        %1492 = vmatprep.subr.mxu0 0.0
        %1493 = vmatpush1.xpose.msra.mxu0 0.0
        %1494 = vmatprep.subr.mxu0 0.0
        %1495 = vmatpush1.xpose.msra.mxu0 0.0
        %1496 = vmatprep.subr.mxu0 0.0
        %1497 = vmatpush1.xpose.msra.mxu0 0.0
        %1498 = vmatprep.subr.mxu0 0.0
        %1499 = vmatpush1.xpose.msra.mxu0 0.0
        %1500 = vmatprep.subr.mxu0 0.0
        %1501 = vmatpush1.xpose.msra.mxu0 0.0
        %1502 = vmatprep.subr.mxu0 0.0
        %1503 = vmatpush1.xpose.msra.mxu0 0.0
        %1504 = vmatprep.subr.mxu0 0.0
        %1505 = vmatpush1.xpose.msra.mxu0 0.0
        %1506 = vmatprep.subr.mxu0 0.0
        %1507 = vmatpush1.xpose.msra.mxu0 0.0
        %1508 = vmatprep.subr.mxu0 0.0
        %1509 = vmatpush1.xpose.msra.mxu0 0.0
        %1510 = vmatprep.subr.mxu0 0.0
        %1511 = vmatpush1.xpose.msra.mxu0 0.0
        %1512 = vmatprep.subr.mxu0 0.0
        %1513 = vmatpush1.xpose.msra.mxu0 0.0
        %1514 = vmatprep.subr.mxu0 0.0
        %1515 = vmatpush1.xpose.msra.mxu0 0.0
        %1516 = vmatprep.subr.mxu0 0.0
        %1517 = vmatpush1.xpose.msra.mxu0 0.0
        %1518 = vmatprep.subr.mxu0 0.0
        %1519 = vmatpush1.xpose.msra.mxu0 0.0
        %1520 = vmatprep.subr.mxu0 0.0
        %1521 = vmatpush1.xpose.msra.mxu0 0.0
        %1522 = vmatprep.subr.mxu0 0.0
        %1523 = vmatpush1.xpose.msra.mxu0 0.0
        %1524 = vmatprep.subr.mxu0 0.0
        %1525 = vmatpush1.xpose.msra.mxu0 0.0
        %1526 = vmatprep.subr.mxu0 0.0
        %1527 = vmatpush1.xpose.msra.mxu0 0.0
        %1528 = vmatprep.subr.mxu0 0.0
        %1529 = vmatpush1.xpose.msra.mxu0 0.0
        %1530 = vmatprep.subr.mxu0 0.0
        %1531 = vmatpush1.xpose.msra.mxu0 0.0
        %1532 = vmatprep.subr.mxu0 0.0
        %1533 = vmatpush1.xpose.msra.mxu0 0.0
        %1534 = vmatprep.subr.mxu0 0.0
        %1535 = vmatpush1.xpose.msra.mxu0 0.0
        %1536 = vmatprep.subr.mxu0 0.0
        %1537 = vmatpush1.xpose.msra.mxu0 0.0
        %1538 = vmatprep.subr.mxu0 0.0
        %1539 = vmatpush1.xpose.msra.mxu0 0.0
        %1540 = vmatprep.subr.mxu0 0.0
        %1541 = vmatpush1.xpose.msra.mxu0 0.0
        %1542 = vmatprep.subr.mxu0 0.0
        %1543 = vmatpush1.xpose.msra.mxu0 0.0
        %1544 = vmatprep.subr.mxu0 0.0
        %1545 = vmatpush1.xpose.msra.mxu0 0.0
        %1546 = vmatprep.subr.mxu0 0.0
        %1547 = vmatpush1.xpose.msra.mxu0 0.0
        %1548 = vmatprep.subr.mxu0 0.0
        %1549 = vmatpush1.xpose.msra.mxu0 0.0
        %1550 = vmatprep.mubr.f32.mxu0 0.0
        %v1551 = vand.u32 %v1480, 4294901760
        %v1552 = vsub.f32 %v1480, %v1551
        %v1553 = vand.u32 %v1552, 4294901760
        %v1554 = vsub.f32 %v1552, %v1553
        %v1555 = vand.u32 %v1554, 4294901760
        %1556 = vmatmul.mubr.f32.gmra.mrb[0].mxu0 %v1555
        %v1557 = vpop.f32.mrb[0].mxu0
        %v1558 = vadd.f32 0.0, %v1557
        %v1559 = vpop.f32.mrb[0].mxu0
        %1560 = vdwg.mxu0
        %1561 = vmatprep.subr.mxu0 0.0
        %v1562 = vand.u32 %v1483, 4294901760
        %v1563 = vsub.f32 %v1483, %v1562
        %v1564 = vand.u32 %v1563, 4294901760
        %v1565 = vsub.f32 %v1563, %v1564
        %v1566 = vand.u32 %v1565, 4294901760
        %1567 = vmatpush1.xpose.msra.mxu0 %v1566
        %1568 = vmatprep.subr.mxu0 0.0
        %1569 = vmatpush1.xpose.msra.mxu0 0.0
        %1570 = vmatprep.subr.mxu0 0.0
        %1571 = vmatpush1.xpose.msra.mxu0 0.0
        %1572 = vmatprep.subr.mxu0 0.0
        %1573 = vmatpush1.xpose.msra.mxu0 0.0
        %1574 = vmatprep.subr.mxu0 0.0
        %1575 = vmatpush1.xpose.msra.mxu0 0.0
        %1576 = vmatprep.subr.mxu0 0.0
        %1577 = vmatpush1.xpose.msra.mxu0 0.0
        %1578 = vmatprep.subr.mxu0 0.0
        %1579 = vmatpush1.xpose.msra.mxu0 0.0
        %1580 = vmatprep.subr.mxu0 0.0
        %1581 = vmatpush1.xpose.msra.mxu0 0.0
        %1582 = vmatprep.subr.mxu0 0.0
        %1583 = vmatpush1.xpose.msra.mxu0 0.0
        %1584 = vmatprep.subr.mxu0 0.0
        %1585 = vmatpush1.xpose.msra.mxu0 0.0
        %1586 = vmatprep.subr.mxu0 0.0
        %1587 = vmatpush1.xpose.msra.mxu0 0.0
        %1588 = vmatprep.subr.mxu0 0.0
        %1589 = vmatpush1.xpose.msra.mxu0 0.0
        %1590 = vmatprep.subr.mxu0 0.0
        %1591 = vmatpush1.xpose.msra.mxu0 0.0
        %1592 = vmatprep.subr.mxu0 0.0
        %1593 = vmatpush1.xpose.msra.mxu0 0.0
        %1594 = vmatprep.subr.mxu0 0.0
        %1595 = vmatpush1.xpose.msra.mxu0 0.0
        %1596 = vmatprep.subr.mxu0 0.0
        %1597 = vmatpush1.xpose.msra.mxu0 0.0
        %1598 = vmatprep.subr.mxu0 0.0
        %1599 = vmatpush1.xpose.msra.mxu0 0.0
        %1600 = vmatprep.subr.mxu0 0.0
        %1601 = vmatpush1.xpose.msra.mxu0 0.0
        %1602 = vmatprep.subr.mxu0 0.0
        %1603 = vmatpush1.xpose.msra.mxu0 0.0
        %1604 = vmatprep.subr.mxu0 0.0
        %1605 = vmatpush1.xpose.msra.mxu0 0.0
        %1606 = vmatprep.subr.mxu0 0.0
        %1607 = vmatpush1.xpose.msra.mxu0 0.0
        %1608 = vmatprep.subr.mxu0 0.0
        %1609 = vmatpush1.xpose.msra.mxu0 0.0
        %1610 = vmatprep.subr.mxu0 0.0
        %1611 = vmatpush1.xpose.msra.mxu0 0.0
        %1612 = vmatprep.subr.mxu0 0.0
        %1613 = vmatpush1.xpose.msra.mxu0 0.0
        %1614 = vmatprep.subr.mxu0 0.0
        %1615 = vmatpush1.xpose.msra.mxu0 0.0
        %1616 = vmatprep.subr.mxu0 0.0
        %1617 = vmatpush1.xpose.msra.mxu0 0.0
        %1618 = vmatprep.subr.mxu0 0.0
        %1619 = vmatpush1.xpose.msra.mxu0 0.0
        %1620 = vmatprep.subr.mxu0 0.0
        %1621 = vmatpush1.xpose.msra.mxu0 0.0
        %1622 = vmatprep.subr.mxu0 0.0
        %1623 = vmatpush1.xpose.msra.mxu0 0.0
        %1624 = vmatprep.subr.mxu0 0.0
        %1625 = vmatpush1.xpose.msra.mxu0 0.0
        %1626 = vmatprep.subr.mxu0 0.0
        %1627 = vmatpush1.xpose.msra.mxu0 0.0
        %1628 = vmatprep.subr.mxu0 0.0
        %1629 = vmatpush1.xpose.msra.mxu0 0.0
        %1630 = vmatprep.mubr.f32.mxu0 0.0
        %v1631 = vand.u32 %v1480, 4294901760
        %1632 = vmatmul.mubr.f32.gmra.mrb[0].mxu0 %v1631
        %v1633 = vpop.f32.mrb[0].mxu0
        %v1634 = vadd.f32 %v1558, %v1633
        %v1635 = vpop.f32.mrb[0].mxu0
        %1636 = vdwg.mxu0
        %1637 = vmatprep.subr.mxu0 0.0
        %v1638 = vand.u32 %v1483, 4294901760
        %v1639 = vsub.f32 %v1483, %v1638
        %1640 = vmatpush1.xpose.msra.mxu0 %v1639
        %1641 = vmatprep.subr.mxu0 0.0
        %1642 = vmatpush1.xpose.msra.mxu0 0.0
        %1643 = vmatprep.subr.mxu0 0.0
        %1644 = vmatpush1.xpose.msra.mxu0 0.0
        %1645 = vmatprep.subr.mxu0 0.0
        %1646 = vmatpush1.xpose.msra.mxu0 0.0
        %1647 = vmatprep.subr.mxu0 0.0
        %1648 = vmatpush1.xpose.msra.mxu0 0.0
        %1649 = vmatprep.subr.mxu0 0.0
        %1650 = vmatpush1.xpose.msra.mxu0 0.0
        %1651 = vmatprep.subr.mxu0 0.0
        %1652 = vmatpush1.xpose.msra.mxu0 0.0
        %1653 = vmatprep.subr.mxu0 0.0
        %1654 = vmatpush1.xpose.msra.mxu0 0.0
        %1655 = vmatprep.subr.mxu0 0.0
        %1656 = vmatpush1.xpose.msra.mxu0 0.0
        %1657 = vmatprep.subr.mxu0 0.0
        %1658 = vmatpush1.xpose.msra.mxu0 0.0
        %1659 = vmatprep.subr.mxu0 0.0
        %1660 = vmatpush1.xpose.msra.mxu0 0.0
        %1661 = vmatprep.subr.mxu0 0.0
        %1662 = vmatpush1.xpose.msra.mxu0 0.0
        %1663 = vmatprep.subr.mxu0 0.0
        %1664 = vmatpush1.xpose.msra.mxu0 0.0
        %1665 = vmatprep.subr.mxu0 0.0
        %1666 = vmatpush1.xpose.msra.mxu0 0.0
        %1667 = vmatprep.subr.mxu0 0.0
        %1668 = vmatpush1.xpose.msra.mxu0 0.0
        %1669 = vmatprep.subr.mxu0 0.0
        %1670 = vmatpush1.xpose.msra.mxu0 0.0
        %1671 = vmatprep.subr.mxu0 0.0
        %1672 = vmatpush1.xpose.msra.mxu0 0.0
        %1673 = vmatprep.subr.mxu0 0.0
        %1674 = vmatpush1.xpose.msra.mxu0 0.0
        %1675 = vmatprep.subr.mxu0 0.0
        %1676 = vmatpush1.xpose.msra.mxu0 0.0
        %1677 = vmatprep.subr.mxu0 0.0
        %1678 = vmatpush1.xpose.msra.mxu0 0.0
        %1679 = vmatprep.subr.mxu0 0.0
        %1680 = vmatpush1.xpose.msra.mxu0 0.0
        %1681 = vmatprep.subr.mxu0 0.0
        %1682 = vmatpush1.xpose.msra.mxu0 0.0
        %1683 = vmatprep.subr.mxu0 0.0
        %1684 = vmatpush1.xpose.msra.mxu0 0.0
        %1685 = vmatprep.subr.mxu0 0.0
        %1686 = vmatpush1.xpose.msra.mxu0 0.0
        %1687 = vmatprep.subr.mxu0 0.0
        %1688 = vmatpush1.xpose.msra.mxu0 0.0
        %1689 = vmatprep.subr.mxu0 0.0
        %1690 = vmatpush1.xpose.msra.mxu0 0.0
        %1691 = vmatprep.subr.mxu0 0.0
        %1692 = vmatpush1.xpose.msra.mxu0 0.0
        %1693 = vmatprep.subr.mxu0 0.0
        %1694 = vmatpush1.xpose.msra.mxu0 0.0
        %1695 = vmatprep.subr.mxu0 0.0
        %1696 = vmatpush1.xpose.msra.mxu0 0.0
        %1697 = vmatprep.subr.mxu0 0.0
        %1698 = vmatpush1.xpose.msra.mxu0 0.0
        %1699 = vmatprep.subr.mxu0 0.0
        %1700 = vmatpush1.xpose.msra.mxu0 0.0
        %1701 = vmatprep.subr.mxu0 0.0
        %1702 = vmatpush1.xpose.msra.mxu0 0.0
        %1703 = vmatprep.mubr.f32.mxu0 0.0
        %v1704 = vand.u32 %v1480, 4294901760
        %v1705 = vsub.f32 %v1480, %v1704
        %1706 = vmatmul.mubr.f32.gmra.mrb[0].mxu0 %v1705
        %v1707 = vpop.f32.mrb[0].mxu0
        %v1708 = vadd.f32 %v1634, %v1707
        %v1709 = vpop.f32.mrb[0].mxu0
        %1710 = vdwg.mxu0
        %1711 = vmatprep.subr.mxu0 0.0
        %v1712 = vand.u32 %v1483, 4294901760
        %1713 = vmatpush1.xpose.msra.mxu0 %v1712
        %1714 = vmatprep.subr.mxu0 0.0
        %1715 = vmatpush1.xpose.msra.mxu0 0.0
        %1716 = vmatprep.subr.mxu0 0.0
        %1717 = vmatpush1.xpose.msra.mxu0 0.0
        %1718 = vmatprep.subr.mxu0 0.0
        %1719 = vmatpush1.xpose.msra.mxu0 0.0
        %1720 = vmatprep.subr.mxu0 0.0
        %1721 = vmatpush1.xpose.msra.mxu0 0.0
        %1722 = vmatprep.subr.mxu0 0.0
        %1723 = vmatpush1.xpose.msra.mxu0 0.0
        %1724 = vmatprep.subr.mxu0 0.0
        %1725 = vmatpush1.xpose.msra.mxu0 0.0
        %1726 = vmatprep.subr.mxu0 0.0
        %1727 = vmatpush1.xpose.msra.mxu0 0.0
        %1728 = vmatprep.subr.mxu0 0.0
        %1729 = vmatpush1.xpose.msra.mxu0 0.0
        %1730 = vmatprep.subr.mxu0 0.0
        %1731 = vmatpush1.xpose.msra.mxu0 0.0
        %1732 = vmatprep.subr.mxu0 0.0
        %1733 = vmatpush1.xpose.msra.mxu0 0.0
        %1734 = vmatprep.subr.mxu0 0.0
        %1735 = vmatpush1.xpose.msra.mxu0 0.0
        %1736 = vmatprep.subr.mxu0 0.0
        %1737 = vmatpush1.xpose.msra.mxu0 0.0
        %1738 = vmatprep.subr.mxu0 0.0
        %1739 = vmatpush1.xpose.msra.mxu0 0.0
        %1740 = vmatprep.subr.mxu0 0.0
        %1741 = vmatpush1.xpose.msra.mxu0 0.0
        %1742 = vmatprep.subr.mxu0 0.0
        %1743 = vmatpush1.xpose.msra.mxu0 0.0
        %1744 = vmatprep.subr.mxu0 0.0
        %1745 = vmatpush1.xpose.msra.mxu0 0.0
        %1746 = vmatprep.subr.mxu0 0.0
        %1747 = vmatpush1.xpose.msra.mxu0 0.0
        %1748 = vmatprep.subr.mxu0 0.0
        %1749 = vmatpush1.xpose.msra.mxu0 0.0
        %1750 = vmatprep.subr.mxu0 0.0
        %1751 = vmatpush1.xpose.msra.mxu0 0.0
        %1752 = vmatprep.subr.mxu0 0.0
        %1753 = vmatpush1.xpose.msra.mxu0 0.0
        %1754 = vmatprep.subr.mxu0 0.0
        %1755 = vmatpush1.xpose.msra.mxu0 0.0
        %1756 = vmatprep.subr.mxu0 0.0
        %1757 = vmatpush1.xpose.msra.mxu0 0.0
        %1758 = vmatprep.subr.mxu0 0.0
        %1759 = vmatpush1.xpose.msra.mxu0 0.0
        %1760 = vmatprep.subr.mxu0 0.0
        %1761 = vmatpush1.xpose.msra.mxu0 0.0
        %1762 = vmatprep.subr.mxu0 0.0
        %1763 = vmatpush1.xpose.msra.mxu0 0.0
        %1764 = vmatprep.subr.mxu0 0.0
        %1765 = vmatpush1.xpose.msra.mxu0 0.0
        %1766 = vmatprep.subr.mxu0 0.0
        %1767 = vmatpush1.xpose.msra.mxu0 0.0
        %1768 = vmatprep.subr.mxu0 0.0
        %1769 = vmatpush1.xpose.msra.mxu0 0.0
        %1770 = vmatprep.subr.mxu0 0.0
        %1771 = vmatpush1.xpose.msra.mxu0 0.0
        %1772 = vmatprep.subr.mxu0 0.0
        %1773 = vmatpush1.xpose.msra.mxu0 0.0
        %1774 = vmatprep.subr.mxu0 0.0
        %1775 = vmatpush1.xpose.msra.mxu0 0.0
        %1776 = vmatprep.mubr.f32.mxu0 0.0
        %v1777 = vand.u32 %v1480, 4294901760
        %v1778 = vsub.f32 %v1480, %v1777
        %v1779 = vand.u32 %v1778, 4294901760
        %1780 = vmatmul.mubr.f32.gmra.mrb[0].mxu0 %v1779
        %v1781 = vpop.f32.mrb[0].mxu0
        %v1782 = vadd.f32 %v1708, %v1781
        %v1783 = vpop.f32.mrb[0].mxu0
        %1784 = vdwg.mxu0
        %1785 = vmatprep.subr.mxu0 0.0
        %v1786 = vand.u32 %v1483, 4294901760
        %v1787 = vsub.f32 %v1483, %v1786
        %v1788 = vand.u32 %v1787, 4294901760
        %1789 = vmatpush1.xpose.msra.mxu0 %v1788
        %1790 = vmatprep.subr.mxu0 0.0
        %1791 = vmatpush1.xpose.msra.mxu0 0.0
        %1792 = vmatprep.subr.mxu0 0.0
        %1793 = vmatpush1.xpose.msra.mxu0 0.0
        %1794 = vmatprep.subr.mxu0 0.0
        %1795 = vmatpush1.xpose.msra.mxu0 0.0
        %1796 = vmatprep.subr.mxu0 0.0
        %1797 = vmatpush1.xpose.msra.mxu0 0.0
        %1798 = vmatprep.subr.mxu0 0.0
        %1799 = vmatpush1.xpose.msra.mxu0 0.0
        %1800 = vmatprep.subr.mxu0 0.0
        %1801 = vmatpush1.xpose.msra.mxu0 0.0
        %1802 = vmatprep.subr.mxu0 0.0
        %1803 = vmatpush1.xpose.msra.mxu0 0.0
        %1804 = vmatprep.subr.mxu0 0.0
        %1805 = vmatpush1.xpose.msra.mxu0 0.0
        %1806 = vmatprep.subr.mxu0 0.0
        %1807 = vmatpush1.xpose.msra.mxu0 0.0
        %1808 = vmatprep.subr.mxu0 0.0
        %1809 = vmatpush1.xpose.msra.mxu0 0.0
        %1810 = vmatprep.subr.mxu0 0.0
        %1811 = vmatpush1.xpose.msra.mxu0 0.0
        %1812 = vmatprep.subr.mxu0 0.0
        %1813 = vmatpush1.xpose.msra.mxu0 0.0
        %1814 = vmatprep.subr.mxu0 0.0
        %1815 = vmatpush1.xpose.msra.mxu0 0.0
        %1816 = vmatprep.subr.mxu0 0.0
        %1817 = vmatpush1.xpose.msra.mxu0 0.0
        %1818 = vmatprep.subr.mxu0 0.0
        %1819 = vmatpush1.xpose.msra.mxu0 0.0
        %1820 = vmatprep.subr.mxu0 0.0
        %1821 = vmatpush1.xpose.msra.mxu0 0.0
        %1822 = vmatprep.subr.mxu0 0.0
        %1823 = vmatpush1.xpose.msra.mxu0 0.0
        %1824 = vmatprep.subr.mxu0 0.0
        %1825 = vmatpush1.xpose.msra.mxu0 0.0
        %1826 = vmatprep.subr.mxu0 0.0
        %1827 = vmatpush1.xpose.msra.mxu0 0.0
        %1828 = vmatprep.subr.mxu0 0.0
        %1829 = vmatpush1.xpose.msra.mxu0 0.0
        %1830 = vmatprep.subr.mxu0 0.0
        %1831 = vmatpush1.xpose.msra.mxu0 0.0
        %1832 = vmatprep.subr.mxu0 0.0
        %1833 = vmatpush1.xpose.msra.mxu0 0.0
        %1834 = vmatprep.subr.mxu0 0.0
        %1835 = vmatpush1.xpose.msra.mxu0 0.0
        %1836 = vmatprep.subr.mxu0 0.0
        %1837 = vmatpush1.xpose.msra.mxu0 0.0
        %1838 = vmatprep.subr.mxu0 0.0
        %1839 = vmatpush1.xpose.msra.mxu0 0.0
        %1840 = vmatprep.subr.mxu0 0.0
        %1841 = vmatpush1.xpose.msra.mxu0 0.0
        %1842 = vmatprep.subr.mxu0 0.0
        %1843 = vmatpush1.xpose.msra.mxu0 0.0
        %1844 = vmatprep.subr.mxu0 0.0
        %1845 = vmatpush1.xpose.msra.mxu0 0.0
        %1846 = vmatprep.subr.mxu0 0.0
        %1847 = vmatpush1.xpose.msra.mxu0 0.0
        %1848 = vmatprep.subr.mxu0 0.0
        %1849 = vmatpush1.xpose.msra.mxu0 0.0
        %1850 = vmatprep.subr.mxu0 0.0
        %1851 = vmatpush1.xpose.msra.mxu0 0.0
        %1852 = vmatprep.mubr.f32.mxu0 0.0
        %v1853 = vand.u32 %v1480, 4294901760
        %1854 = vmatmul.mubr.f32.gmra.mrb[0].mxu0 %v1853
        %v1855 = vpop.f32.mrb[0].mxu0
        %v1856 = vadd.f32 %v1782, %v1855
        %v1857 = vpop.f32.mrb[0].mxu0
        %1858 = vdwg.mxu0
        %1859 = vmatprep.subr.mxu0 0.0
        %v1860 = vand.u32 %v1483, 4294901760
        %1861 = vmatpush1.xpose.msra.mxu0 %v1860
        %1862 = vmatprep.subr.mxu0 0.0
        %1863 = vmatpush1.xpose.msra.mxu0 0.0
        %1864 = vmatprep.subr.mxu0 0.0
        %1865 = vmatpush1.xpose.msra.mxu0 0.0
        %1866 = vmatprep.subr.mxu0 0.0
        %1867 = vmatpush1.xpose.msra.mxu0 0.0
        %1868 = vmatprep.subr.mxu0 0.0
        %1869 = vmatpush1.xpose.msra.mxu0 0.0
        %1870 = vmatprep.subr.mxu0 0.0
        %1871 = vmatpush1.xpose.msra.mxu0 0.0
        %1872 = vmatprep.subr.mxu0 0.0
        %1873 = vmatpush1.xpose.msra.mxu0 0.0
        %1874 = vmatprep.subr.mxu0 0.0
        %1875 = vmatpush1.xpose.msra.mxu0 0.0
        %1876 = vmatprep.subr.mxu0 0.0
        %1877 = vmatpush1.xpose.msra.mxu0 0.0
        %1878 = vmatprep.subr.mxu0 0.0
        %1879 = vmatpush1.xpose.msra.mxu0 0.0
        %1880 = vmatprep.subr.mxu0 0.0
        %1881 = vmatpush1.xpose.msra.mxu0 0.0
        %1882 = vmatprep.subr.mxu0 0.0
        %1883 = vmatpush1.xpose.msra.mxu0 0.0
        %1884 = vmatprep.subr.mxu0 0.0
        %1885 = vmatpush1.xpose.msra.mxu0 0.0
        %1886 = vmatprep.subr.mxu0 0.0
        %1887 = vmatpush1.xpose.msra.mxu0 0.0
        %1888 = vmatprep.subr.mxu0 0.0
        %1889 = vmatpush1.xpose.msra.mxu0 0.0
        %1890 = vmatprep.subr.mxu0 0.0
        %1891 = vmatpush1.xpose.msra.mxu0 0.0
        %1892 = vmatprep.subr.mxu0 0.0
        %1893 = vmatpush1.xpose.msra.mxu0 0.0
        %1894 = vmatprep.subr.mxu0 0.0
        %1895 = vmatpush1.xpose.msra.mxu0 0.0
        %1896 = vmatprep.subr.mxu0 0.0
        %1897 = vmatpush1.xpose.msra.mxu0 0.0
        %1898 = vmatprep.subr.mxu0 0.0
        %1899 = vmatpush1.xpose.msra.mxu0 0.0
        %1900 = vmatprep.subr.mxu0 0.0
        %1901 = vmatpush1.xpose.msra.mxu0 0.0
        %1902 = vmatprep.subr.mxu0 0.0
        %1903 = vmatpush1.xpose.msra.mxu0 0.0
        %1904 = vmatprep.subr.mxu0 0.0
        %1905 = vmatpush1.xpose.msra.mxu0 0.0
        %1906 = vmatprep.subr.mxu0 0.0
        %1907 = vmatpush1.xpose.msra.mxu0 0.0
        %1908 = vmatprep.subr.mxu0 0.0
        %1909 = vmatpush1.xpose.msra.mxu0 0.0
        %1910 = vmatprep.subr.mxu0 0.0
        %1911 = vmatpush1.xpose.msra.mxu0 0.0
        %1912 = vmatprep.subr.mxu0 0.0
        %1913 = vmatpush1.xpose.msra.mxu0 0.0
        %1914 = vmatprep.subr.mxu0 0.0
        %1915 = vmatpush1.xpose.msra.mxu0 0.0
        %1916 = vmatprep.subr.mxu0 0.0
        %1917 = vmatpush1.xpose.msra.mxu0 0.0
        %1918 = vmatprep.subr.mxu0 0.0
        %1919 = vmatpush1.xpose.msra.mxu0 0.0
        %1920 = vmatprep.subr.mxu0 0.0
        %1921 = vmatpush1.xpose.msra.mxu0 0.0
        %1922 = vmatprep.subr.mxu0 0.0
        %1923 = vmatpush1.xpose.msra.mxu0 0.0
        %1924 = vmatprep.mubr.f32.mxu0 0.0
        %v1925 = vand.u32 %v1480, 4294901760
        %1926 = vmatmul.mubr.f32.gmra.mrb[0].mxu0 %v1925
        %v1927 = vpop.f32.mrb[0].mxu0
        %v1928 = vadd.f32 %v1856, %v1927
        %v1929 = vpop.f32.mrb[0].mxu0
        %1930 = vdwg.mxu0
        %vm1931 = vcmask 64512
        %v1932 = vsel %vm1931, %v1928, -inf
        %1933 = vmax.xlane.f32.xlu0 %v1932
        %v1934 = vpop.xlane.xlu0 %1933
        %v1935 = vsub.f32 %v1928, %v1934
        %v1936 = vmul.f32 %v1935, 1.442695
        %v1937 = vpow.pop %v1936
        %v1938 = vsel %vm1931, %v1937, 0.0
        %1939 = vadd.xlane.f32.xlu0 %v1938
        %v1940 = vpop.xlane.xlu0 %1939
        %v1941 = vrcp.pop %v1940
        %v1942 = vmul.f32 %v1937, %v1941
        %v1944 = vsel %vm1931, %v1942, 0
        %1946 = vmatprep.subr.mxu0 0.0
        %v1947 = vand.u32 %v360, 4294901760
        %1948 = vmatpush1.msra.mxu0 %v1947
        %1949 = vmatprep.subr.mxu0 0.0
        %1950 = vmatpush1.msra.mxu0 0.0
        %1951 = vmatprep.subr.mxu0 0.0
        %1952 = vmatpush1.msra.mxu0 0.0
        %1953 = vmatprep.subr.mxu0 0.0
        %1954 = vmatpush1.msra.mxu0 0.0
        %1955 = vmatprep.subr.mxu0 0.0
        %1956 = vmatpush1.msra.mxu0 0.0
        %1957 = vmatprep.subr.mxu0 0.0
        %1958 = vmatpush1.msra.mxu0 0.0
        %1959 = vmatprep.subr.mxu0 0.0
        %1960 = vmatpush1.msra.mxu0 0.0
        %1961 = vmatprep.subr.mxu0 0.0
        %1962 = vmatpush1.msra.mxu0 0.0
        %1963 = vmatprep.subr.mxu0 0.0
        %1964 = vmatpush1.msra.mxu0 0.0
        %1965 = vmatprep.subr.mxu0 0.0
        %1966 = vmatpush1.msra.mxu0 0.0
        %1967 = vmatprep.subr.mxu0 0.0
        %1968 = vmatpush1.msra.mxu0 0.0
        %1969 = vmatprep.subr.mxu0 0.0
        %1970 = vmatpush1.msra.mxu0 0.0
        %1971 = vmatprep.subr.mxu0 0.0
        %1972 = vmatpush1.msra.mxu0 0.0
        %1973 = vmatprep.subr.mxu0 0.0
        %1974 = vmatpush1.msra.mxu0 0.0
        %1975 = vmatprep.subr.mxu0 0.0
        %1976 = vmatpush1.msra.mxu0 0.0
        %1977 = vmatprep.subr.mxu0 0.0
        %1978 = vmatpush1.msra.mxu0 0.0
        %1979 = vmatprep.subr.mxu0 0.0
        %1980 = vmatpush1.msra.mxu0 0.0
        %1981 = vmatprep.subr.mxu0 0.0
        %1982 = vmatpush1.msra.mxu0 0.0
        %1983 = vmatprep.subr.mxu0 0.0
        %1984 = vmatpush1.msra.mxu0 0.0
        %1985 = vmatprep.subr.mxu0 0.0
        %1986 = vmatpush1.msra.mxu0 0.0
        %1987 = vmatprep.subr.mxu0 0.0
        %1988 = vmatpush1.msra.mxu0 0.0
        %1989 = vmatprep.subr.mxu0 0.0
        %1990 = vmatpush1.msra.mxu0 0.0
        %1991 = vmatprep.subr.mxu0 0.0
        %1992 = vmatpush1.msra.mxu0 0.0
        %1993 = vmatprep.subr.mxu0 0.0
        %1994 = vmatpush1.msra.mxu0 0.0
        %1995 = vmatprep.subr.mxu0 0.0
        %1996 = vmatpush1.msra.mxu0 0.0
        %1997 = vmatprep.subr.mxu0 0.0
        %1998 = vmatpush1.msra.mxu0 0.0
        %1999 = vmatprep.subr.mxu0 0.0
        %2000 = vmatpush1.msra.mxu0 0.0
        %2001 = vmatprep.subr.mxu0 0.0
        %2002 = vmatpush1.msra.mxu0 0.0
        %2003 = vmatprep.subr.mxu0 0.0
        %2004 = vmatpush1.msra.mxu0 0.0
        %2005 = vmatprep.subr.mxu0 0.0
        %2006 = vmatpush1.msra.mxu0 0.0
        %2007 = vmatprep.subr.mxu0 0.0
        %2008 = vmatpush1.msra.mxu0 0.0
        %2009 = vmatprep.subr.mxu0 0.0
        %2010 = vmatpush1.msra.mxu0 0.0
        %2011 = vmatprep.mubr.f32.mxu0 0.0
        %v2012 = vand.u32 %v1944, 4294901760
        %v2013 = vsub.f32 %v1944, %v2012
        %v2014 = vand.u32 %v2013, 4294901760
        %v2015 = vsub.f32 %v2013, %v2014
        %v2016 = vand.u32 %v2015, 4294901760
        %2017 = vmatmul.mubr.f32.gmra.mrb[0].mxu0 %v2016
        %v2018 = vpop.f32.mrb[0].mxu0
        %v2019 = vadd.f32 %v360, %v2018
        %v2020 = vpop.f32.mrb[0].mxu0
        %2021 = vdwg.mxu0
        %2022 = vmatprep.subr.mxu0 0.0
        %v2023 = vand.u32 %v360, 4294901760
        %v2024 = vsub.f32 %v360, %v2023
        %v2025 = vand.u32 %v2024, 4294901760
        %v2026 = vsub.f32 %v2024, %v2025
        %v2027 = vand.u32 %v2026, 4294901760
        %2028 = vmatpush1.msra.mxu0 %v2027
        %2029 = vmatprep.subr.mxu0 0.0
        %2030 = vmatpush1.msra.mxu0 0.0
        %2031 = vmatprep.subr.mxu0 0.0
        %2032 = vmatpush1.msra.mxu0 0.0
        %2033 = vmatprep.subr.mxu0 0.0
        %2034 = vmatpush1.msra.mxu0 0.0
        %2035 = vmatprep.subr.mxu0 0.0
        %2036 = vmatpush1.msra.mxu0 0.0
        %2037 = vmatprep.subr.mxu0 0.0
        %2038 = vmatpush1.msra.mxu0 0.0
        %2039 = vmatprep.subr.mxu0 0.0
        %2040 = vmatpush1.msra.mxu0 0.0
        %2041 = vmatprep.subr.mxu0 0.0
        %2042 = vmatpush1.msra.mxu0 0.0
        %2043 = vmatprep.subr.mxu0 0.0
        %2044 = vmatpush1.msra.mxu0 0.0
        %2045 = vmatprep.subr.mxu0 0.0
        %2046 = vmatpush1.msra.mxu0 0.0
        %2047 = vmatprep.subr.mxu0 0.0
        %2048 = vmatpush1.msra.mxu0 0.0
        %2049 = vmatprep.subr.mxu0 0.0
        %2050 = vmatpush1.msra.mxu0 0.0
        %2051 = vmatprep.subr.mxu0 0.0
        %2052 = vmatpush1.msra.mxu0 0.0
        %2053 = vmatprep.subr.mxu0 0.0
        %2054 = vmatpush1.msra.mxu0 0.0
        %2055 = vmatprep.subr.mxu0 0.0
        %2056 = vmatpush1.msra.mxu0 0.0
        %2057 = vmatprep.subr.mxu0 0.0
        %2058 = vmatpush1.msra.mxu0 0.0
        %2059 = vmatprep.subr.mxu0 0.0
        %2060 = vmatpush1.msra.mxu0 0.0
        %2061 = vmatprep.subr.mxu0 0.0
        %2062 = vmatpush1.msra.mxu0 0.0
        %2063 = vmatprep.subr.mxu0 0.0
        %2064 = vmatpush1.msra.mxu0 0.0
        %2065 = vmatprep.subr.mxu0 0.0
        %2066 = vmatpush1.msra.mxu0 0.0
        %2067 = vmatprep.subr.mxu0 0.0
        %2068 = vmatpush1.msra.mxu0 0.0
        %2069 = vmatprep.subr.mxu0 0.0
        %2070 = vmatpush1.msra.mxu0 0.0
        %2071 = vmatprep.subr.mxu0 0.0
        %2072 = vmatpush1.msra.mxu0 0.0
        %2073 = vmatprep.subr.mxu0 0.0
        %2074 = vmatpush1.msra.mxu0 0.0
        %2075 = vmatprep.subr.mxu0 0.0
        %2076 = vmatpush1.msra.mxu0 0.0
        %2077 = vmatprep.subr.mxu0 0.0
        %2078 = vmatpush1.msra.mxu0 0.0
        %2079 = vmatprep.subr.mxu0 0.0
        %2080 = vmatpush1.msra.mxu0 0.0
        %2081 = vmatprep.subr.mxu0 0.0
        %2082 = vmatpush1.msra.mxu0 0.0
        %2083 = vmatprep.subr.mxu0 0.0
        %2084 = vmatpush1.msra.mxu0 0.0
        %2085 = vmatprep.subr.mxu0 0.0
        %2086 = vmatpush1.msra.mxu0 0.0
        %2087 = vmatprep.subr.mxu0 0.0
        %2088 = vmatpush1.msra.mxu0 0.0
        %2089 = vmatprep.subr.mxu0 0.0
        %2090 = vmatpush1.msra.mxu0 0.0
        %2091 = vmatprep.mubr.f32.mxu0 0.0
        %v2092 = vand.u32 %v1944, 4294901760
        %2093 = vmatmul.mubr.f32.gmra.mrb[0].mxu0 %v2092
        %v2094 = vpop.f32.mrb[0].mxu0
        %v2095 = vadd.f32 %v2019, %v2094
        %v2096 = vpop.f32.mrb[0].mxu0
        %2097 = vdwg.mxu0
        %2098 = vmatprep.subr.mxu0 0.0
        %v2099 = vand.u32 %v360, 4294901760
        %v2100 = vsub.f32 %v360, %v2099
        %2101 = vmatpush1.msra.mxu0 %v2100
        %2102 = vmatprep.subr.mxu0 0.0
        %2103 = vmatpush1.msra.mxu0 0.0
        %2104 = vmatprep.subr.mxu0 0.0
        %2105 = vmatpush1.msra.mxu0 0.0
        %2106 = vmatprep.subr.mxu0 0.0
        %2107 = vmatpush1.msra.mxu0 0.0
        %2108 = vmatprep.subr.mxu0 0.0
        %2109 = vmatpush1.msra.mxu0 0.0
        %2110 = vmatprep.subr.mxu0 0.0
        %2111 = vmatpush1.msra.mxu0 0.0
        %2112 = vmatprep.subr.mxu0 0.0
        %2113 = vmatpush1.msra.mxu0 0.0
        %2114 = vmatprep.subr.mxu0 0.0
        %2115 = vmatpush1.msra.mxu0 0.0
        %2116 = vmatprep.subr.mxu0 0.0
        %2117 = vmatpush1.msra.mxu0 0.0
        %2118 = vmatprep.subr.mxu0 0.0
        %2119 = vmatpush1.msra.mxu0 0.0
        %2120 = vmatprep.subr.mxu0 0.0
        %2121 = vmatpush1.msra.mxu0 0.0
        %2122 = vmatprep.subr.mxu0 0.0
        %2123 = vmatpush1.msra.mxu0 0.0
        %2124 = vmatprep.subr.mxu0 0.0
        %2125 = vmatpush1.msra.mxu0 0.0
        %2126 = vmatprep.subr.mxu0 0.0
        %2127 = vmatpush1.msra.mxu0 0.0
        %2128 = vmatprep.subr.mxu0 0.0
        %2129 = vmatpush1.msra.mxu0 0.0
        %2130 = vmatprep.subr.mxu0 0.0
        %2131 = vmatpush1.msra.mxu0 0.0
        %2132 = vmatprep.subr.mxu0 0.0
        %2133 = vmatpush1.msra.mxu0 0.0
        %2134 = vmatprep.subr.mxu0 0.0
        %2135 = vmatpush1.msra.mxu0 0.0
        %2136 = vmatprep.subr.mxu0 0.0
        %2137 = vmatpush1.msra.mxu0 0.0
        %2138 = vmatprep.subr.mxu0 0.0
        %2139 = vmatpush1.msra.mxu0 0.0
        %2140 = vmatprep.subr.mxu0 0.0
        %2141 = vmatpush1.msra.mxu0 0.0
        %2142 = vmatprep.subr.mxu0 0.0
        %2143 = vmatpush1.msra.mxu0 0.0
        %2144 = vmatprep.subr.mxu0 0.0
        %2145 = vmatpush1.msra.mxu0 0.0
        %2146 = vmatprep.subr.mxu0 0.0
        %2147 = vmatpush1.msra.mxu0 0.0
        %2148 = vmatprep.subr.mxu0 0.0
        %2149 = vmatpush1.msra.mxu0 0.0
        %2150 = vmatprep.subr.mxu0 0.0
        %2151 = vmatpush1.msra.mxu0 0.0
        %2152 = vmatprep.subr.mxu0 0.0
        %2153 = vmatpush1.msra.mxu0 0.0
        %2154 = vmatprep.subr.mxu0 0.0
        %2155 = vmatpush1.msra.mxu0 0.0
        %2156 = vmatprep.subr.mxu0 0.0
        %2157 = vmatpush1.msra.mxu0 0.0
        %2158 = vmatprep.subr.mxu0 0.0
        %2159 = vmatpush1.msra.mxu0 0.0
        %2160 = vmatprep.subr.mxu0 0.0
        %2161 = vmatpush1.msra.mxu0 0.0
        %2162 = vmatprep.subr.mxu0 0.0
        %2163 = vmatpush1.msra.mxu0 0.0
        %2164 = vmatprep.mubr.f32.mxu0 0.0
        %v2165 = vand.u32 %v1944, 4294901760
        %v2166 = vsub.f32 %v1944, %v2165
        %2167 = vmatmul.mubr.f32.gmra.mrb[0].mxu0 %v2166
        %v2168 = vpop.f32.mrb[0].mxu0
        %v2169 = vadd.f32 %v2095, %v2168
        %v2170 = vpop.f32.mrb[0].mxu0
        %2171 = vdwg.mxu0
        %2172 = vmatprep.subr.mxu0 0.0
        %v2173 = vand.u32 %v360, 4294901760
        %2174 = vmatpush1.msra.mxu0 %v2173
        %2175 = vmatprep.subr.mxu0 0.0
        %2176 = vmatpush1.msra.mxu0 0.0
        %2177 = vmatprep.subr.mxu0 0.0
        %2178 = vmatpush1.msra.mxu0 0.0
        %2179 = vmatprep.subr.mxu0 0.0
        %2180 = vmatpush1.msra.mxu0 0.0
        %2181 = vmatprep.subr.mxu0 0.0
        %2182 = vmatpush1.msra.mxu0 0.0
        %2183 = vmatprep.subr.mxu0 0.0
        %2184 = vmatpush1.msra.mxu0 0.0
        %2185 = vmatprep.subr.mxu0 0.0
        %2186 = vmatpush1.msra.mxu0 0.0
        %2187 = vmatprep.subr.mxu0 0.0
        %2188 = vmatpush1.msra.mxu0 0.0
        %2189 = vmatprep.subr.mxu0 0.0
        %2190 = vmatpush1.msra.mxu0 0.0
        %2191 = vmatprep.subr.mxu0 0.0
        %2192 = vmatpush1.msra.mxu0 0.0
        %2193 = vmatprep.subr.mxu0 0.0
        %2194 = vmatpush1.msra.mxu0 0.0
        %2195 = vmatprep.subr.mxu0 0.0
        %2196 = vmatpush1.msra.mxu0 0.0
        %2197 = vmatprep.subr.mxu0 0.0
        %2198 = vmatpush1.msra.mxu0 0.0
        %2199 = vmatprep.subr.mxu0 0.0
        %2200 = vmatpush1.msra.mxu0 0.0
        %2201 = vmatprep.subr.mxu0 0.0
        %2202 = vmatpush1.msra.mxu0 0.0
        %2203 = vmatprep.subr.mxu0 0.0
        %2204 = vmatpush1.msra.mxu0 0.0
        %2205 = vmatprep.subr.mxu0 0.0
        %2206 = vmatpush1.msra.mxu0 0.0
        %2207 = vmatprep.subr.mxu0 0.0
        %2208 = vmatpush1.msra.mxu0 0.0
        %2209 = vmatprep.subr.mxu0 0.0
        %2210 = vmatpush1.msra.mxu0 0.0
        %2211 = vmatprep.subr.mxu0 0.0
        %2212 = vmatpush1.msra.mxu0 0.0
        %2213 = vmatprep.subr.mxu0 0.0
        %2214 = vmatpush1.msra.mxu0 0.0
        %2215 = vmatprep.subr.mxu0 0.0
        %2216 = vmatpush1.msra.mxu0 0.0
        %2217 = vmatprep.subr.mxu0 0.0
        %2218 = vmatpush1.msra.mxu0 0.0
        %2219 = vmatprep.subr.mxu0 0.0
        %2220 = vmatpush1.msra.mxu0 0.0
        %2221 = vmatprep.subr.mxu0 0.0
        %2222 = vmatpush1.msra.mxu0 0.0
        %2223 = vmatprep.subr.mxu0 0.0
        %2224 = vmatpush1.msra.mxu0 0.0
        %2225 = vmatprep.subr.mxu0 0.0
        %2226 = vmatpush1.msra.mxu0 0.0
        %2227 = vmatprep.subr.mxu0 0.0
        %2228 = vmatpush1.msra.mxu0 0.0
        %2229 = vmatprep.subr.mxu0 0.0
        %2230 = vmatpush1.msra.mxu0 0.0
        %2231 = vmatprep.subr.mxu0 0.0
        %2232 = vmatpush1.msra.mxu0 0.0
        %2233 = vmatprep.subr.mxu0 0.0
        %2234 = vmatpush1.msra.mxu0 0.0
        %2235 = vmatprep.subr.mxu0 0.0
        %2236 = vmatpush1.msra.mxu0 0.0
        %2237 = vmatprep.mubr.f32.mxu0 0.0
        %v2238 = vand.u32 %v1944, 4294901760
        %v2239 = vsub.f32 %v1944, %v2238
        %v2240 = vand.u32 %v2239, 4294901760
        %2241 = vmatmul.mubr.f32.gmra.mrb[0].mxu0 %v2240
        %v2242 = vpop.f32.mrb[0].mxu0
        %v2243 = vadd.f32 %v2169, %v2242
        %v2244 = vpop.f32.mrb[0].mxu0
        %2245 = vdwg.mxu0
        %2246 = vmatprep.subr.mxu0 0.0
        %v2247 = vand.u32 %v360, 4294901760
        %v2248 = vsub.f32 %v360, %v2247
        %v2249 = vand.u32 %v2248, 4294901760
        %2250 = vmatpush1.msra.mxu0 %v2249
        %2251 = vmatprep.subr.mxu0 0.0
        %2252 = vmatpush1.msra.mxu0 0.0
        %2253 = vmatprep.subr.mxu0 0.0
        %2254 = vmatpush1.msra.mxu0 0.0
        %2255 = vmatprep.subr.mxu0 0.0
        %2256 = vmatpush1.msra.mxu0 0.0
        %2257 = vmatprep.subr.mxu0 0.0
        %2258 = vmatpush1.msra.mxu0 0.0
        %2259 = vmatprep.subr.mxu0 0.0
        %2260 = vmatpush1.msra.mxu0 0.0
        %2261 = vmatprep.subr.mxu0 0.0
        %2262 = vmatpush1.msra.mxu0 0.0
        %2263 = vmatprep.subr.mxu0 0.0
        %2264 = vmatpush1.msra.mxu0 0.0
        %2265 = vmatprep.subr.mxu0 0.0
        %2266 = vmatpush1.msra.mxu0 0.0
        %2267 = vmatprep.subr.mxu0 0.0
        %2268 = vmatpush1.msra.mxu0 0.0
        %2269 = vmatprep.subr.mxu0 0.0
        %2270 = vmatpush1.msra.mxu0 0.0
        %2271 = vmatprep.subr.mxu0 0.0
        %2272 = vmatpush1.msra.mxu0 0.0
        %2273 = vmatprep.subr.mxu0 0.0
        %2274 = vmatpush1.msra.mxu0 0.0
        %2275 = vmatprep.subr.mxu0 0.0
        %2276 = vmatpush1.msra.mxu0 0.0
        %2277 = vmatprep.subr.mxu0 0.0
        %2278 = vmatpush1.msra.mxu0 0.0
        %2279 = vmatprep.subr.mxu0 0.0
        %2280 = vmatpush1.msra.mxu0 0.0
        %2281 = vmatprep.subr.mxu0 0.0
        %2282 = vmatpush1.msra.mxu0 0.0
        %2283 = vmatprep.subr.mxu0 0.0
        %2284 = vmatpush1.msra.mxu0 0.0
        %2285 = vmatprep.subr.mxu0 0.0
        %2286 = vmatpush1.msra.mxu0 0.0
        %2287 = vmatprep.subr.mxu0 0.0
        %2288 = vmatpush1.msra.mxu0 0.0
        %2289 = vmatprep.subr.mxu0 0.0
        %2290 = vmatpush1.msra.mxu0 0.0
        %2291 = vmatprep.subr.mxu0 0.0
        %2292 = vmatpush1.msra.mxu0 0.0
        %2293 = vmatprep.subr.mxu0 0.0
        %2294 = vmatpush1.msra.mxu0 0.0
        %2295 = vmatprep.subr.mxu0 0.0
        %2296 = vmatpush1.msra.mxu0 0.0
        %2297 = vmatprep.subr.mxu0 0.0
        %2298 = vmatpush1.msra.mxu0 0.0
        %2299 = vmatprep.subr.mxu0 0.0
        %2300 = vmatpush1.msra.mxu0 0.0
        %2301 = vmatprep.subr.mxu0 0.0
        %2302 = vmatpush1.msra.mxu0 0.0
        %2303 = vmatprep.subr.mxu0 0.0
        %2304 = vmatpush1.msra.mxu0 0.0
        %2305 = vmatprep.subr.mxu0 0.0
        %2306 = vmatpush1.msra.mxu0 0.0
        %2307 = vmatprep.subr.mxu0 0.0
        %2308 = vmatpush1.msra.mxu0 0.0
        %2309 = vmatprep.subr.mxu0 0.0
        %2310 = vmatpush1.msra.mxu0 0.0
        %2311 = vmatprep.subr.mxu0 0.0
        %2312 = vmatpush1.msra.mxu0 0.0
        %2313 = vmatprep.mubr.f32.mxu0 0.0
        %v2314 = vand.u32 %v1944, 4294901760
        %2315 = vmatmul.mubr.f32.gmra.mrb[0].mxu0 %v2314
        %v2316 = vpop.f32.mrb[0].mxu0
        %v2317 = vadd.f32 %v2243, %v2316
        %v2318 = vpop.f32.mrb[0].mxu0
        %2319 = vdwg.mxu0
        %2320 = vmatprep.subr.mxu0 0.0
        %v2321 = vand.u32 %v360, 4294901760
        %2322 = vmatpush1.msra.mxu0 %v2321
        %2323 = vmatprep.subr.mxu0 0.0
        %2324 = vmatpush1.msra.mxu0 0.0
        %2325 = vmatprep.subr.mxu0 0.0
        %2326 = vmatpush1.msra.mxu0 0.0
        %2327 = vmatprep.subr.mxu0 0.0
        %2328 = vmatpush1.msra.mxu0 0.0
        %2329 = vmatprep.subr.mxu0 0.0
        %2330 = vmatpush1.msra.mxu0 0.0
        %2331 = vmatprep.subr.mxu0 0.0
        %2332 = vmatpush1.msra.mxu0 0.0
        %2333 = vmatprep.subr.mxu0 0.0
        %2334 = vmatpush1.msra.mxu0 0.0
        %2335 = vmatprep.subr.mxu0 0.0
        %2336 = vmatpush1.msra.mxu0 0.0
        %2337 = vmatprep.subr.mxu0 0.0
        %2338 = vmatpush1.msra.mxu0 0.0
        %2339 = vmatprep.subr.mxu0 0.0
        %2340 = vmatpush1.msra.mxu0 0.0
        %2341 = vmatprep.subr.mxu0 0.0
        %2342 = vmatpush1.msra.mxu0 0.0
        %2343 = vmatprep.subr.mxu0 0.0
        %2344 = vmatpush1.msra.mxu0 0.0
        %2345 = vmatprep.subr.mxu0 0.0
        %2346 = vmatpush1.msra.mxu0 0.0
        %2347 = vmatprep.subr.mxu0 0.0
        %2348 = vmatpush1.msra.mxu0 0.0
        %2349 = vmatprep.subr.mxu0 0.0
        %2350 = vmatpush1.msra.mxu0 0.0
        %2351 = vmatprep.subr.mxu0 0.0
        %2352 = vmatpush1.msra.mxu0 0.0
        %2353 = vmatprep.subr.mxu0 0.0
        %2354 = vmatpush1.msra.mxu0 0.0
        %2355 = vmatprep.subr.mxu0 0.0
        %2356 = vmatpush1.msra.mxu0 0.0
        %2357 = vmatprep.subr.mxu0 0.0
        %2358 = vmatpush1.msra.mxu0 0.0
        %2359 = vmatprep.subr.mxu0 0.0
        %2360 = vmatpush1.msra.mxu0 0.0
        %2361 = vmatprep.subr.mxu0 0.0
        %2362 = vmatpush1.msra.mxu0 0.0
        %2363 = vmatprep.subr.mxu0 0.0
        %2364 = vmatpush1.msra.mxu0 0.0
        %2365 = vmatprep.subr.mxu0 0.0
        %2366 = vmatpush1.msra.mxu0 0.0
        %2367 = vmatprep.subr.mxu0 0.0
        %2368 = vmatpush1.msra.mxu0 0.0
        %2369 = vmatprep.subr.mxu0 0.0
        %2370 = vmatpush1.msra.mxu0 0.0
        %2371 = vmatprep.subr.mxu0 0.0
        %2372 = vmatpush1.msra.mxu0 0.0
        %2373 = vmatprep.subr.mxu0 0.0
        %2374 = vmatpush1.msra.mxu0 0.0
        %2375 = vmatprep.subr.mxu0 0.0
        %2376 = vmatpush1.msra.mxu0 0.0
        %2377 = vmatprep.subr.mxu0 0.0
        %2378 = vmatpush1.msra.mxu0 0.0
        %2379 = vmatprep.subr.mxu0 0.0
        %2380 = vmatpush1.msra.mxu0 0.0
        %2381 = vmatprep.subr.mxu0 0.0
        %2382 = vmatpush1.msra.mxu0 0.0
        %2383 = vmatprep.subr.mxu0 0.0
        %2384 = vmatpush1.msra.mxu0 0.0
        %2385 = vmatprep.mubr.f32.mxu0 0.0
        %v2386 = vand.u32 %v1944, 4294901760
        %2387 = vmatmul.mubr.f32.gmra.mrb[0].mxu0 %v2386
        %v2388 = vpop.f32.mrb[0].mxu0
        %v2389 = vadd.f32 %v2317, %v2388
        %v2390 = vpop.f32.mrb[0].mxu0
        %2391 = vdwg.mxu0
        %v2392 = vsel %vm367, %v2389, 0.0
        %2393 = vadd.xlane.f32.xlu0 %v2392
        %v2394 = vpop.xlane.xlu0 %2393
        %v2395 = vrcp.pop 16.0
        %v2396 = vmul.f32 %v2394, %v2395
        %v2397 = vsub.f32 %v2389, %v2396
        %v2398 = vmul.f32 %v2397, %v2397
        %v2399 = vsel %vm367, %v2398, 0.0
        %2400 = vadd.xlane.f32.xlu0 %v2399
        %v2401 = vpop.xlane.xlu0 %2400
        %v2402 = vmul.f32 %v2401, %v2395
        %v2403 = vadd.f32 %v2402, 1e-05
        %v2404 = vrsqrt.pop %v2403
        %v2405 = vmul.f32 %v2397, %v2404
        %v2406 = vlaneseq
        %v2407 = vshrl.u32 %v2406, 7
        %v2408 = vsub.s32 0, %v2407
        %v2409 = vrot.slane %v359, %v2408
        %v2410 = vmul.f32 %v2405, %v2409
        %v2411 = vlaneseq
        %v2412 = vshrl.u32 %v2411, 7
        %v2413 = vsub.s32 1, %v2412
        %v2414 = vrot.slane %v359, %v2413
        %v2415 = vadd.f32 %v2410, %v2414
        %v2417 = vlaneseq
        %v2418 = vshrl.u32 %v2417, 7
        %v2419 = vsub.s32 0, %v2418
        %v2420 = vrot.slane %v350, %v2419
        %v2423 = vsel %vm367, %v2415, 0
        %2425 = vmatprep.subr.mxu0 0.0
        %v2426 = vand.u32 %v348, 4294901760
        %2427 = vmatpush1.msra.mxu0 %v2426
        %2428 = vmatprep.subr.mxu0 0.0
        %v2429 = vand.u32 %v349, 4294901760
        %2430 = vmatpush1.msra.mxu0 %v2429
        %2431 = vmatprep.subr.mxu0 0.0
        %2432 = vmatpush1.msra.mxu0 0.0
        %2433 = vmatprep.subr.mxu0 0.0
        %2434 = vmatpush1.msra.mxu0 0.0
        %2435 = vmatprep.subr.mxu0 0.0
        %2436 = vmatpush1.msra.mxu0 0.0
        %2437 = vmatprep.subr.mxu0 0.0
        %2438 = vmatpush1.msra.mxu0 0.0
        %2439 = vmatprep.subr.mxu0 0.0
        %2440 = vmatpush1.msra.mxu0 0.0
        %2441 = vmatprep.subr.mxu0 0.0
        %2442 = vmatpush1.msra.mxu0 0.0
        %2443 = vmatprep.subr.mxu0 0.0
        %2444 = vmatpush1.msra.mxu0 0.0
        %2445 = vmatprep.subr.mxu0 0.0
        %2446 = vmatpush1.msra.mxu0 0.0
        %2447 = vmatprep.subr.mxu0 0.0
        %2448 = vmatpush1.msra.mxu0 0.0
        %2449 = vmatprep.subr.mxu0 0.0
        %2450 = vmatpush1.msra.mxu0 0.0
        %2451 = vmatprep.subr.mxu0 0.0
        %2452 = vmatpush1.msra.mxu0 0.0
        %2453 = vmatprep.subr.mxu0 0.0
        %2454 = vmatpush1.msra.mxu0 0.0
        %2455 = vmatprep.subr.mxu0 0.0
        %2456 = vmatpush1.msra.mxu0 0.0
        %2457 = vmatprep.subr.mxu0 0.0
        %2458 = vmatpush1.msra.mxu0 0.0
        %2459 = vmatprep.subr.mxu0 0.0
        %2460 = vmatpush1.msra.mxu0 0.0
        %2461 = vmatprep.subr.mxu0 0.0
        %2462 = vmatpush1.msra.mxu0 0.0
        %2463 = vmatprep.subr.mxu0 0.0
        %2464 = vmatpush1.msra.mxu0 0.0
        %2465 = vmatprep.subr.mxu0 0.0
        %2466 = vmatpush1.msra.mxu0 0.0
        %2467 = vmatprep.subr.mxu0 0.0
        %2468 = vmatpush1.msra.mxu0 0.0
        %2469 = vmatprep.subr.mxu0 0.0
        %2470 = vmatpush1.msra.mxu0 0.0
        %2471 = vmatprep.subr.mxu0 0.0
        %2472 = vmatpush1.msra.mxu0 0.0
        %2473 = vmatprep.subr.mxu0 0.0
        %2474 = vmatpush1.msra.mxu0 0.0
        %2475 = vmatprep.subr.mxu0 0.0
        %2476 = vmatpush1.msra.mxu0 0.0
        %2477 = vmatprep.subr.mxu0 0.0
        %2478 = vmatpush1.msra.mxu0 0.0
        %2479 = vmatprep.subr.mxu0 0.0
        %2480 = vmatpush1.msra.mxu0 0.0
        %2481 = vmatprep.subr.mxu0 0.0
        %2482 = vmatpush1.msra.mxu0 0.0
        %2483 = vmatprep.subr.mxu0 0.0
        %2484 = vmatpush1.msra.mxu0 0.0
        %2485 = vmatprep.subr.mxu0 0.0
        %2486 = vmatpush1.msra.mxu0 0.0
        %2487 = vmatprep.subr.mxu0 0.0
        %2488 = vmatpush1.msra.mxu0 0.0
        %2489 = vmatprep.subr.mxu0 0.0
        %2490 = vmatpush1.msra.mxu0 0.0
        %2491 = vmatprep.mubr.f32.mxu0 0.0
        %v2492 = vand.u32 %v2423, 4294901760
        %v2493 = vsub.f32 %v2423, %v2492
        %v2494 = vand.u32 %v2493, 4294901760
        %v2495 = vsub.f32 %v2493, %v2494
        %v2496 = vand.u32 %v2495, 4294901760
        %2497 = vmatmul.mubr.f32.gmra.mrb[0].mxu0 %v2496
        %v2498 = vpop.f32.mrb[0].mxu0
        %v2499 = vadd.f32 %v2420, %v2498
        %v2500 = vpop.f32.mrb[0].mxu0
        %2501 = vdwg.mxu0
        %2502 = vmatprep.subr.mxu0 0.0
        %v2503 = vand.u32 %v348, 4294901760
        %v2504 = vsub.f32 %v348, %v2503
        %v2505 = vand.u32 %v2504, 4294901760
        %v2506 = vsub.f32 %v2504, %v2505
        %v2507 = vand.u32 %v2506, 4294901760
        %2508 = vmatpush1.msra.mxu0 %v2507
        %2509 = vmatprep.subr.mxu0 0.0
        %v2510 = vand.u32 %v349, 4294901760
        %v2511 = vsub.f32 %v349, %v2510
        %v2512 = vand.u32 %v2511, 4294901760
        %v2513 = vsub.f32 %v2511, %v2512
        %v2514 = vand.u32 %v2513, 4294901760
        %2515 = vmatpush1.msra.mxu0 %v2514
        %2516 = vmatprep.subr.mxu0 0.0
        %2517 = vmatpush1.msra.mxu0 0.0
        %2518 = vmatprep.subr.mxu0 0.0
        %2519 = vmatpush1.msra.mxu0 0.0
        %2520 = vmatprep.subr.mxu0 0.0
        %2521 = vmatpush1.msra.mxu0 0.0
        %2522 = vmatprep.subr.mxu0 0.0
        %2523 = vmatpush1.msra.mxu0 0.0
        %2524 = vmatprep.subr.mxu0 0.0
        %2525 = vmatpush1.msra.mxu0 0.0
        %2526 = vmatprep.subr.mxu0 0.0
        %2527 = vmatpush1.msra.mxu0 0.0
        %2528 = vmatprep.subr.mxu0 0.0
        %2529 = vmatpush1.msra.mxu0 0.0
        %2530 = vmatprep.subr.mxu0 0.0
        %2531 = vmatpush1.msra.mxu0 0.0
        %2532 = vmatprep.subr.mxu0 0.0
        %2533 = vmatpush1.msra.mxu0 0.0
        %2534 = vmatprep.subr.mxu0 0.0
        %2535 = vmatpush1.msra.mxu0 0.0
        %2536 = vmatprep.subr.mxu0 0.0
        %2537 = vmatpush1.msra.mxu0 0.0
        %2538 = vmatprep.subr.mxu0 0.0
        %2539 = vmatpush1.msra.mxu0 0.0
        %2540 = vmatprep.subr.mxu0 0.0
        %2541 = vmatpush1.msra.mxu0 0.0
        %2542 = vmatprep.subr.mxu0 0.0
        %2543 = vmatpush1.msra.mxu0 0.0
        %2544 = vmatprep.subr.mxu0 0.0
        %2545 = vmatpush1.msra.mxu0 0.0
        %2546 = vmatprep.subr.mxu0 0.0
        %2547 = vmatpush1.msra.mxu0 0.0
        %2548 = vmatprep.subr.mxu0 0.0
        %2549 = vmatpush1.msra.mxu0 0.0
        %2550 = vmatprep.subr.mxu0 0.0
        %2551 = vmatpush1.msra.mxu0 0.0
        %2552 = vmatprep.subr.mxu0 0.0
        %2553 = vmatpush1.msra.mxu0 0.0
        %2554 = vmatprep.subr.mxu0 0.0
        %2555 = vmatpush1.msra.mxu0 0.0
        %2556 = vmatprep.subr.mxu0 0.0
        %2557 = vmatpush1.msra.mxu0 0.0
        %2558 = vmatprep.subr.mxu0 0.0
        %2559 = vmatpush1.msra.mxu0 0.0
        %2560 = vmatprep.subr.mxu0 0.0
        %2561 = vmatpush1.msra.mxu0 0.0
        %2562 = vmatprep.subr.mxu0 0.0
        %2563 = vmatpush1.msra.mxu0 0.0
        %2564 = vmatprep.subr.mxu0 0.0
        %2565 = vmatpush1.msra.mxu0 0.0
        %2566 = vmatprep.subr.mxu0 0.0
        %2567 = vmatpush1.msra.mxu0 0.0
        %2568 = vmatprep.subr.mxu0 0.0
        %2569 = vmatpush1.msra.mxu0 0.0
        %2570 = vmatprep.subr.mxu0 0.0
        %2571 = vmatpush1.msra.mxu0 0.0
        %2572 = vmatprep.subr.mxu0 0.0
        %2573 = vmatpush1.msra.mxu0 0.0
        %2574 = vmatprep.subr.mxu0 0.0
        %2575 = vmatpush1.msra.mxu0 0.0
        %2576 = vmatprep.mubr.f32.mxu0 0.0
        %v2577 = vand.u32 %v2423, 4294901760
        %2578 = vmatmul.mubr.f32.gmra.mrb[0].mxu0 %v2577
        %v2579 = vpop.f32.mrb[0].mxu0
        %v2580 = vadd.f32 %v2499, %v2579
        %v2581 = vpop.f32.mrb[0].mxu0
        %2582 = vdwg.mxu0
        %2583 = vmatprep.subr.mxu0 0.0
        %v2584 = vand.u32 %v348, 4294901760
        %v2585 = vsub.f32 %v348, %v2584
        %2586 = vmatpush1.msra.mxu0 %v2585
        %2587 = vmatprep.subr.mxu0 0.0
        %v2588 = vand.u32 %v349, 4294901760
        %v2589 = vsub.f32 %v349, %v2588
        %2590 = vmatpush1.msra.mxu0 %v2589
        %2591 = vmatprep.subr.mxu0 0.0
        %2592 = vmatpush1.msra.mxu0 0.0
        %2593 = vmatprep.subr.mxu0 0.0
        %2594 = vmatpush1.msra.mxu0 0.0
        %2595 = vmatprep.subr.mxu0 0.0
        %2596 = vmatpush1.msra.mxu0 0.0
        %2597 = vmatprep.subr.mxu0 0.0
        %2598 = vmatpush1.msra.mxu0 0.0
        %2599 = vmatprep.subr.mxu0 0.0
        %2600 = vmatpush1.msra.mxu0 0.0
        %2601 = vmatprep.subr.mxu0 0.0
        %2602 = vmatpush1.msra.mxu0 0.0
        %2603 = vmatprep.subr.mxu0 0.0
        %2604 = vmatpush1.msra.mxu0 0.0
        %2605 = vmatprep.subr.mxu0 0.0
        %2606 = vmatpush1.msra.mxu0 0.0
        %2607 = vmatprep.subr.mxu0 0.0
        %2608 = vmatpush1.msra.mxu0 0.0
        %2609 = vmatprep.subr.mxu0 0.0
        %2610 = vmatpush1.msra.mxu0 0.0
        %2611 = vmatprep.subr.mxu0 0.0
        %2612 = vmatpush1.msra.mxu0 0.0
        %2613 = vmatprep.subr.mxu0 0.0
        %2614 = vmatpush1.msra.mxu0 0.0
        %2615 = vmatprep.subr.mxu0 0.0
        %2616 = vmatpush1.msra.mxu0 0.0
        %2617 = vmatprep.subr.mxu0 0.0
        %2618 = vmatpush1.msra.mxu0 0.0
        %2619 = vmatprep.subr.mxu0 0.0
        %2620 = vmatpush1.msra.mxu0 0.0
        %2621 = vmatprep.subr.mxu0 0.0
        %2622 = vmatpush1.msra.mxu0 0.0
        %2623 = vmatprep.subr.mxu0 0.0
        %2624 = vmatpush1.msra.mxu0 0.0
        %2625 = vmatprep.subr.mxu0 0.0
        %2626 = vmatpush1.msra.mxu0 0.0
        %2627 = vmatprep.subr.mxu0 0.0
        %2628 = vmatpush1.msra.mxu0 0.0
        %2629 = vmatprep.subr.mxu0 0.0
        %2630 = vmatpush1.msra.mxu0 0.0
        %2631 = vmatprep.subr.mxu0 0.0
        %2632 = vmatpush1.msra.mxu0 0.0
        %2633 = vmatprep.subr.mxu0 0.0
        %2634 = vmatpush1.msra.mxu0 0.0
        %2635 = vmatprep.subr.mxu0 0.0
        %2636 = vmatpush1.msra.mxu0 0.0
        %2637 = vmatprep.subr.mxu0 0.0
        %2638 = vmatpush1.msra.mxu0 0.0
        %2639 = vmatprep.subr.mxu0 0.0
        %2640 = vmatpush1.msra.mxu0 0.0
        %2641 = vmatprep.subr.mxu0 0.0
        %2642 = vmatpush1.msra.mxu0 0.0
        %2643 = vmatprep.subr.mxu0 0.0
        %2644 = vmatpush1.msra.mxu0 0.0
        %2645 = vmatprep.subr.mxu0 0.0
        %2646 = vmatpush1.msra.mxu0 0.0
        %2647 = vmatprep.subr.mxu0 0.0
        %2648 = vmatpush1.msra.mxu0 0.0
        %2649 = vmatprep.subr.mxu0 0.0
        %2650 = vmatpush1.msra.mxu0 0.0
        %2651 = vmatprep.mubr.f32.mxu0 0.0
        %v2652 = vand.u32 %v2423, 4294901760
        %v2653 = vsub.f32 %v2423, %v2652
        %2654 = vmatmul.mubr.f32.gmra.mrb[0].mxu0 %v2653
        %v2655 = vpop.f32.mrb[0].mxu0
        %v2656 = vadd.f32 %v2580, %v2655
        %v2657 = vpop.f32.mrb[0].mxu0
        %2658 = vdwg.mxu0
        %2659 = vmatprep.subr.mxu0 0.0
        %v2660 = vand.u32 %v348, 4294901760
        %2661 = vmatpush1.msra.mxu0 %v2660
        %2662 = vmatprep.subr.mxu0 0.0
        %v2663 = vand.u32 %v349, 4294901760
        %2664 = vmatpush1.msra.mxu0 %v2663
        %2665 = vmatprep.subr.mxu0 0.0
        %2666 = vmatpush1.msra.mxu0 0.0
        %2667 = vmatprep.subr.mxu0 0.0
        %2668 = vmatpush1.msra.mxu0 0.0
        %2669 = vmatprep.subr.mxu0 0.0
        %2670 = vmatpush1.msra.mxu0 0.0
        %2671 = vmatprep.subr.mxu0 0.0
        %2672 = vmatpush1.msra.mxu0 0.0
        %2673 = vmatprep.subr.mxu0 0.0
        %2674 = vmatpush1.msra.mxu0 0.0
        %2675 = vmatprep.subr.mxu0 0.0
        %2676 = vmatpush1.msra.mxu0 0.0
        %2677 = vmatprep.subr.mxu0 0.0
        %2678 = vmatpush1.msra.mxu0 0.0
        %2679 = vmatprep.subr.mxu0 0.0
        %2680 = vmatpush1.msra.mxu0 0.0
        %2681 = vmatprep.subr.mxu0 0.0
        %2682 = vmatpush1.msra.mxu0 0.0
        %2683 = vmatprep.subr.mxu0 0.0
        %2684 = vmatpush1.msra.mxu0 0.0
        %2685 = vmatprep.subr.mxu0 0.0
        %2686 = vmatpush1.msra.mxu0 0.0
        %2687 = vmatprep.subr.mxu0 0.0
        %2688 = vmatpush1.msra.mxu0 0.0
        %2689 = vmatprep.subr.mxu0 0.0
        %2690 = vmatpush1.msra.mxu0 0.0
        %2691 = vmatprep.subr.mxu0 0.0
        %2692 = vmatpush1.msra.mxu0 0.0
        %2693 = vmatprep.subr.mxu0 0.0
        %2694 = vmatpush1.msra.mxu0 0.0
        %2695 = vmatprep.subr.mxu0 0.0
        %2696 = vmatpush1.msra.mxu0 0.0
        %2697 = vmatprep.subr.mxu0 0.0
        %2698 = vmatpush1.msra.mxu0 0.0
        %2699 = vmatprep.subr.mxu0 0.0
        %2700 = vmatpush1.msra.mxu0 0.0
        %2701 = vmatprep.subr.mxu0 0.0
        %2702 = vmatpush1.msra.mxu0 0.0
        %2703 = vmatprep.subr.mxu0 0.0
        %2704 = vmatpush1.msra.mxu0 0.0
        %2705 = vmatprep.subr.mxu0 0.0
        %2706 = vmatpush1.msra.mxu0 0.0
        %2707 = vmatprep.subr.mxu0 0.0
        %2708 = vmatpush1.msra.mxu0 0.0
        %2709 = vmatprep.subr.mxu0 0.0
        %2710 = vmatpush1.msra.mxu0 0.0
        %2711 = vmatprep.subr.mxu0 0.0
        %2712 = vmatpush1.msra.mxu0 0.0
        %2713 = vmatprep.subr.mxu0 0.0
        %2714 = vmatpush1.msra.mxu0 0.0
        %2715 = vmatprep.subr.mxu0 0.0
        %2716 = vmatpush1.msra.mxu0 0.0
        %2717 = vmatprep.subr.mxu0 0.0
        %2718 = vmatpush1.msra.mxu0 0.0
        %2719 = vmatprep.subr.mxu0 0.0
        %2720 = vmatpush1.msra.mxu0 0.0
        %2721 = vmatprep.subr.mxu0 0.0
        %2722 = vmatpush1.msra.mxu0 0.0
        %2723 = vmatprep.subr.mxu0 0.0
        %2724 = vmatpush1.msra.mxu0 0.0
        %2725 = vmatprep.mubr.f32.mxu0 0.0
        %v2726 = vand.u32 %v2423, 4294901760
        %v2727 = vsub.f32 %v2423, %v2726
        %v2728 = vand.u32 %v2727, 4294901760
        %2729 = vmatmul.mubr.f32.gmra.mrb[0].mxu0 %v2728
        %v2730 = vpop.f32.mrb[0].mxu0
        %v2731 = vadd.f32 %v2656, %v2730
        %v2732 = vpop.f32.mrb[0].mxu0
        %2733 = vdwg.mxu0
        %2734 = vmatprep.subr.mxu0 0.0
        %v2735 = vand.u32 %v348, 4294901760
        %v2736 = vsub.f32 %v348, %v2735
        %v2737 = vand.u32 %v2736, 4294901760
        %2738 = vmatpush1.msra.mxu0 %v2737
        %2739 = vmatprep.subr.mxu0 0.0
        %v2740 = vand.u32 %v349, 4294901760
        %v2741 = vsub.f32 %v349, %v2740
        %v2742 = vand.u32 %v2741, 4294901760
        %2743 = vmatpush1.msra.mxu0 %v2742
        %2744 = vmatprep.subr.mxu0 0.0
        %2745 = vmatpush1.msra.mxu0 0.0
        %2746 = vmatprep.subr.mxu0 0.0
        %2747 = vmatpush1.msra.mxu0 0.0
        %2748 = vmatprep.subr.mxu0 0.0
        %2749 = vmatpush1.msra.mxu0 0.0
        %2750 = vmatprep.subr.mxu0 0.0
        %2751 = vmatpush1.msra.mxu0 0.0
        %2752 = vmatprep.subr.mxu0 0.0
        %2753 = vmatpush1.msra.mxu0 0.0
        %2754 = vmatprep.subr.mxu0 0.0
        %2755 = vmatpush1.msra.mxu0 0.0
        %2756 = vmatprep.subr.mxu0 0.0
        %2757 = vmatpush1.msra.mxu0 0.0
        %2758 = vmatprep.subr.mxu0 0.0
        %2759 = vmatpush1.msra.mxu0 0.0
        %2760 = vmatprep.subr.mxu0 0.0
        %2761 = vmatpush1.msra.mxu0 0.0
        %2762 = vmatprep.subr.mxu0 0.0
        %2763 = vmatpush1.msra.mxu0 0.0
        %2764 = vmatprep.subr.mxu0 0.0
        %2765 = vmatpush1.msra.mxu0 0.0
        %2766 = vmatprep.subr.mxu0 0.0
        %2767 = vmatpush1.msra.mxu0 0.0
        %2768 = vmatprep.subr.mxu0 0.0
        %2769 = vmatpush1.msra.mxu0 0.0
        %2770 = vmatprep.subr.mxu0 0.0
        %2771 = vmatpush1.msra.mxu0 0.0
        %2772 = vmatprep.subr.mxu0 0.0
        %2773 = vmatpush1.msra.mxu0 0.0
        %2774 = vmatprep.subr.mxu0 0.0
        %2775 = vmatpush1.msra.mxu0 0.0
        %2776 = vmatprep.subr.mxu0 0.0
        %2777 = vmatpush1.msra.mxu0 0.0
        %2778 = vmatprep.subr.mxu0 0.0
        %2779 = vmatpush1.msra.mxu0 0.0
        %2780 = vmatprep.subr.mxu0 0.0
        %2781 = vmatpush1.msra.mxu0 0.0
        %2782 = vmatprep.subr.mxu0 0.0
        %2783 = vmatpush1.msra.mxu0 0.0
        %2784 = vmatprep.subr.mxu0 0.0
        %2785 = vmatpush1.msra.mxu0 0.0
        %2786 = vmatprep.subr.mxu0 0.0
        %2787 = vmatpush1.msra.mxu0 0.0
        %2788 = vmatprep.subr.mxu0 0.0
        %2789 = vmatpush1.msra.mxu0 0.0
        %2790 = vmatprep.subr.mxu0 0.0
        %2791 = vmatpush1.msra.mxu0 0.0
        %2792 = vmatprep.subr.mxu0 0.0
        %2793 = vmatpush1.msra.mxu0 0.0
        %2794 = vmatprep.subr.mxu0 0.0
        %2795 = vmatpush1.msra.mxu0 0.0
        %2796 = vmatprep.subr.mxu0 0.0
        %2797 = vmatpush1.msra.mxu0 0.0
        %2798 = vmatprep.subr.mxu0 0.0
        %2799 = vmatpush1.msra.mxu0 0.0
        %2800 = vmatprep.subr.mxu0 0.0
        %2801 = vmatpush1.msra.mxu0 0.0
        %2802 = vmatprep.subr.mxu0 0.0
        %2803 = vmatpush1.msra.mxu0 0.0
        %2804 = vmatprep.mubr.f32.mxu0 0.0
        %v2805 = vand.u32 %v2423, 4294901760
        %2806 = vmatmul.mubr.f32.gmra.mrb[0].mxu0 %v2805
        %v2807 = vpop.f32.mrb[0].mxu0
        %v2808 = vadd.f32 %v2731, %v2807
        %v2809 = vpop.f32.mrb[0].mxu0
        %2810 = vdwg.mxu0
        %2811 = vmatprep.subr.mxu0 0.0
        %v2812 = vand.u32 %v348, 4294901760
        %2813 = vmatpush1.msra.mxu0 %v2812
        %2814 = vmatprep.subr.mxu0 0.0
        %v2815 = vand.u32 %v349, 4294901760
        %2816 = vmatpush1.msra.mxu0 %v2815
        %2817 = vmatprep.subr.mxu0 0.0
        %2818 = vmatpush1.msra.mxu0 0.0
        %2819 = vmatprep.subr.mxu0 0.0
        %2820 = vmatpush1.msra.mxu0 0.0
        %2821 = vmatprep.subr.mxu0 0.0
        %2822 = vmatpush1.msra.mxu0 0.0
        %2823 = vmatprep.subr.mxu0 0.0
        %2824 = vmatpush1.msra.mxu0 0.0
        %2825 = vmatprep.subr.mxu0 0.0
        %2826 = vmatpush1.msra.mxu0 0.0
        %2827 = vmatprep.subr.mxu0 0.0
        %2828 = vmatpush1.msra.mxu0 0.0
        %2829 = vmatprep.subr.mxu0 0.0
        %2830 = vmatpush1.msra.mxu0 0.0
        %2831 = vmatprep.subr.mxu0 0.0
        %2832 = vmatpush1.msra.mxu0 0.0
        %2833 = vmatprep.subr.mxu0 0.0
        %2834 = vmatpush1.msra.mxu0 0.0
        %2835 = vmatprep.subr.mxu0 0.0
        %2836 = vmatpush1.msra.mxu0 0.0
        %2837 = vmatprep.subr.mxu0 0.0
        %2838 = vmatpush1.msra.mxu0 0.0
        %2839 = vmatprep.subr.mxu0 0.0
        %2840 = vmatpush1.msra.mxu0 0.0
        %2841 = vmatprep.subr.mxu0 0.0
        %2842 = vmatpush1.msra.mxu0 0.0
        %2843 = vmatprep.subr.mxu0 0.0
        %2844 = vmatpush1.msra.mxu0 0.0
        %2845 = vmatprep.subr.mxu0 0.0
        %2846 = vmatpush1.msra.mxu0 0.0
        %2847 = vmatprep.subr.mxu0 0.0
        %2848 = vmatpush1.msra.mxu0 0.0
        %2849 = vmatprep.subr.mxu0 0.0
        %2850 = vmatpush1.msra.mxu0 0.0
        %2851 = vmatprep.subr.mxu0 0.0
        %2852 = vmatpush1.msra.mxu0 0.0
        %2853 = vmatprep.subr.mxu0 0.0
        %2854 = vmatpush1.msra.mxu0 0.0
        %2855 = vmatprep.subr.mxu0 0.0
        %2856 = vmatpush1.msra.mxu0 0.0
        %2857 = vmatprep.subr.mxu0 0.0
        %2858 = vmatpush1.msra.mxu0 0.0
        %2859 = vmatprep.subr.mxu0 0.0
        %2860 = vmatpush1.msra.mxu0 0.0
        %2861 = vmatprep.subr.mxu0 0.0
        %2862 = vmatpush1.msra.mxu0 0.0
        %2863 = vmatprep.subr.mxu0 0.0
        %2864 = vmatpush1.msra.mxu0 0.0
        %2865 = vmatprep.subr.mxu0 0.0
        %2866 = vmatpush1.msra.mxu0 0.0
        %2867 = vmatprep.subr.mxu0 0.0
        %2868 = vmatpush1.msra.mxu0 0.0
        %2869 = vmatprep.subr.mxu0 0.0
        %2870 = vmatpush1.msra.mxu0 0.0
        %2871 = vmatprep.subr.mxu0 0.0
        %2872 = vmatpush1.msra.mxu0 0.0
        %2873 = vmatprep.subr.mxu0 0.0
        %2874 = vmatpush1.msra.mxu0 0.0
        %2875 = vmatprep.subr.mxu0 0.0
        %2876 = vmatpush1.msra.mxu0 0.0
        %2877 = vmatprep.mubr.f32.mxu0 0.0
        %v2878 = vand.u32 %v2423, 4294901760
        %2879 = vmatmul.mubr.f32.gmra.mrb[0].mxu0 %v2878
        %v2880 = vpop.f32.mrb[0].mxu0
        %v2881 = vadd.f32 %v2808, %v2880
        %v2882 = vpop.f32.mrb[0].mxu0
        %2883 = vdwg.mxu0
        %v2884 = vmax.f32 %v2881, 0.0
        %v2885 = vlaneseq
        %v2886 = vshrl.u32 %v2885, 7
        %v2887 = vsub.s32 2, %v2886
        %v2888 = vrot.slane %v359, %v2887
        %vm2889 = vcmask 523264
        %v2891 = vsel %vm2889, %v2884, 0
        %2893 = vmatprep.subr.mxu0 0.0
        %v2894 = vand.u32 %v351, 4294901760
        %2895 = vmatpush1.msra.mxu0 %v2894
        %2896 = vmatprep.subr.mxu0 0.0
        %v2897 = vand.u32 %v352, 4294901760
        %2898 = vmatpush1.msra.mxu0 %v2897
        %2899 = vmatprep.subr.mxu0 0.0
        %v2900 = vand.u32 %v353, 4294901760
        %2901 = vmatpush1.msra.mxu0 %v2900
        %2902 = vmatprep.subr.mxu0 0.0
        %v2903 = vand.u32 %v354, 4294901760
        %2904 = vmatpush1.msra.mxu0 %v2903
        %2905 = vmatprep.subr.mxu0 0.0
        %v2906 = vand.u32 %v355, 4294901760
        %2907 = vmatpush1.msra.mxu0 %v2906
        %2908 = vmatprep.subr.mxu0 0.0
        %v2909 = vand.u32 %v356, 4294901760
        %2910 = vmatpush1.msra.mxu0 %v2909
        %2911 = vmatprep.subr.mxu0 0.0
        %v2912 = vand.u32 %v357, 4294901760
        %2913 = vmatpush1.msra.mxu0 %v2912
        %2914 = vmatprep.subr.mxu0 0.0
        %v2915 = vand.u32 %v358, 4294901760
        %2916 = vmatpush1.msra.mxu0 %v2915
        %2917 = vmatprep.subr.mxu0 0.0
        %2918 = vmatpush1.msra.mxu0 0.0
        %2919 = vmatprep.subr.mxu0 0.0
        %2920 = vmatpush1.msra.mxu0 0.0
        %2921 = vmatprep.subr.mxu0 0.0
        %2922 = vmatpush1.msra.mxu0 0.0
        %2923 = vmatprep.subr.mxu0 0.0
        %2924 = vmatpush1.msra.mxu0 0.0
        %2925 = vmatprep.subr.mxu0 0.0
        %2926 = vmatpush1.msra.mxu0 0.0
        %2927 = vmatprep.subr.mxu0 0.0
        %2928 = vmatpush1.msra.mxu0 0.0
        %2929 = vmatprep.subr.mxu0 0.0
        %2930 = vmatpush1.msra.mxu0 0.0
        %2931 = vmatprep.subr.mxu0 0.0
        %2932 = vmatpush1.msra.mxu0 0.0
        %2933 = vmatprep.subr.mxu0 0.0
        %2934 = vmatpush1.msra.mxu0 0.0
        %2935 = vmatprep.subr.mxu0 0.0
        %2936 = vmatpush1.msra.mxu0 0.0
        %2937 = vmatprep.subr.mxu0 0.0
        %2938 = vmatpush1.msra.mxu0 0.0
        %2939 = vmatprep.subr.mxu0 0.0
        %2940 = vmatpush1.msra.mxu0 0.0
        %2941 = vmatprep.subr.mxu0 0.0
        %2942 = vmatpush1.msra.mxu0 0.0
        %2943 = vmatprep.subr.mxu0 0.0
        %2944 = vmatpush1.msra.mxu0 0.0
        %2945 = vmatprep.subr.mxu0 0.0
        %2946 = vmatpush1.msra.mxu0 0.0
        %2947 = vmatprep.subr.mxu0 0.0
        %2948 = vmatpush1.msra.mxu0 0.0
        %2949 = vmatprep.subr.mxu0 0.0
        %2950 = vmatpush1.msra.mxu0 0.0
        %2951 = vmatprep.subr.mxu0 0.0
        %2952 = vmatpush1.msra.mxu0 0.0
        %2953 = vmatprep.subr.mxu0 0.0
        %2954 = vmatpush1.msra.mxu0 0.0
        %2955 = vmatprep.subr.mxu0 0.0
        %2956 = vmatpush1.msra.mxu0 0.0
        %2957 = vmatprep.subr.mxu0 0.0
        %2958 = vmatpush1.msra.mxu0 0.0
        %2959 = vmatprep.subr.mxu0 0.0
        %2960 = vmatpush1.msra.mxu0 0.0
        %2961 = vmatprep.subr.mxu0 0.0
        %2962 = vmatpush1.msra.mxu0 0.0
        %2963 = vmatprep.subr.mxu0 0.0
        %2964 = vmatpush1.msra.mxu0 0.0
        %2965 = vmatprep.mubr.f32.mxu0 0.0
        %v2966 = vand.u32 %v2891, 4294901760
        %v2967 = vsub.f32 %v2891, %v2966
        %v2968 = vand.u32 %v2967, 4294901760
        %v2969 = vsub.f32 %v2967, %v2968
        %v2970 = vand.u32 %v2969, 4294901760
        %2971 = vmatmul.mubr.f32.gmra.mrb[0].mxu0 %v2970
        %v2972 = vpop.f32.mrb[0].mxu0
        %v2973 = vadd.f32 %v2888, %v2972
        %v2974 = vpop.f32.mrb[0].mxu0
        %2975 = vdwg.mxu0
        %2976 = vmatprep.subr.mxu0 0.0
        %v2977 = vand.u32 %v351, 4294901760
        %v2978 = vsub.f32 %v351, %v2977
        %v2979 = vand.u32 %v2978, 4294901760
        %v2980 = vsub.f32 %v2978, %v2979
        %v2981 = vand.u32 %v2980, 4294901760
        %2982 = vmatpush1.msra.mxu0 %v2981
        %2983 = vmatprep.subr.mxu0 0.0
        %v2984 = vand.u32 %v352, 4294901760
        %v2985 = vsub.f32 %v352, %v2984
        %v2986 = vand.u32 %v2985, 4294901760
        %v2987 = vsub.f32 %v2985, %v2986
        %v2988 = vand.u32 %v2987, 4294901760
        %2989 = vmatpush1.msra.mxu0 %v2988
        %2990 = vmatprep.subr.mxu0 0.0
        %v2991 = vand.u32 %v353, 4294901760
        %v2992 = vsub.f32 %v353, %v2991
        %v2993 = vand.u32 %v2992, 4294901760
        %v2994 = vsub.f32 %v2992, %v2993
        %v2995 = vand.u32 %v2994, 4294901760
        %2996 = vmatpush1.msra.mxu0 %v2995
        %2997 = vmatprep.subr.mxu0 0.0
        %v2998 = vand.u32 %v354, 4294901760
        %v2999 = vsub.f32 %v354, %v2998
        %v3000 = vand.u32 %v2999, 4294901760
        %v3001 = vsub.f32 %v2999, %v3000
        %v3002 = vand.u32 %v3001, 4294901760
        %3003 = vmatpush1.msra.mxu0 %v3002
        %3004 = vmatprep.subr.mxu0 0.0
        %v3005 = vand.u32 %v355, 4294901760
        %v3006 = vsub.f32 %v355, %v3005
        %v3007 = vand.u32 %v3006, 4294901760
        %v3008 = vsub.f32 %v3006, %v3007
        %v3009 = vand.u32 %v3008, 4294901760
        %3010 = vmatpush1.msra.mxu0 %v3009
        %3011 = vmatprep.subr.mxu0 0.0
        %v3012 = vand.u32 %v356, 4294901760
        %v3013 = vsub.f32 %v356, %v3012
        %v3014 = vand.u32 %v3013, 4294901760
        %v3015 = vsub.f32 %v3013, %v3014
        %v3016 = vand.u32 %v3015, 4294901760
        %3017 = vmatpush1.msra.mxu0 %v3016
        %3018 = vmatprep.subr.mxu0 0.0
        %v3019 = vand.u32 %v357, 4294901760
        %v3020 = vsub.f32 %v357, %v3019
        %v3021 = vand.u32 %v3020, 4294901760
        %v3022 = vsub.f32 %v3020, %v3021
        %v3023 = vand.u32 %v3022, 4294901760
        %3024 = vmatpush1.msra.mxu0 %v3023
        %3025 = vmatprep.subr.mxu0 0.0
        %v3026 = vand.u32 %v358, 4294901760
        %v3027 = vsub.f32 %v358, %v3026
        %v3028 = vand.u32 %v3027, 4294901760
        %v3029 = vsub.f32 %v3027, %v3028
        %v3030 = vand.u32 %v3029, 4294901760
        %3031 = vmatpush1.msra.mxu0 %v3030
        %3032 = vmatprep.subr.mxu0 0.0
        %3033 = vmatpush1.msra.mxu0 0.0
        %3034 = vmatprep.subr.mxu0 0.0
        %3035 = vmatpush1.msra.mxu0 0.0
        %3036 = vmatprep.subr.mxu0 0.0
        %3037 = vmatpush1.msra.mxu0 0.0
        %3038 = vmatprep.subr.mxu0 0.0
        %3039 = vmatpush1.msra.mxu0 0.0
        %3040 = vmatprep.subr.mxu0 0.0
        %3041 = vmatpush1.msra.mxu0 0.0
        %3042 = vmatprep.subr.mxu0 0.0
        %3043 = vmatpush1.msra.mxu0 0.0
        %3044 = vmatprep.subr.mxu0 0.0
        %3045 = vmatpush1.msra.mxu0 0.0
        %3046 = vmatprep.subr.mxu0 0.0
        %3047 = vmatpush1.msra.mxu0 0.0
        %3048 = vmatprep.subr.mxu0 0.0
        %3049 = vmatpush1.msra.mxu0 0.0
        %3050 = vmatprep.subr.mxu0 0.0
        %3051 = vmatpush1.msra.mxu0 0.0
        %3052 = vmatprep.subr.mxu0 0.0
        %3053 = vmatpush1.msra.mxu0 0.0
        %3054 = vmatprep.subr.mxu0 0.0
        %3055 = vmatpush1.msra.mxu0 0.0
        %3056 = vmatprep.subr.mxu0 0.0
        %3057 = vmatpush1.msra.mxu0 0.0
        %3058 = vmatprep.subr.mxu0 0.0
        %3059 = vmatpush1.msra.mxu0 0.0
        %3060 = vmatprep.subr.mxu0 0.0
        %3061 = vmatpush1.msra.mxu0 0.0
        %3062 = vmatprep.subr.mxu0 0.0
        %3063 = vmatpush1.msra.mxu0 0.0
        %3064 = vmatprep.subr.mxu0 0.0
        %3065 = vmatpush1.msra.mxu0 0.0
        %3066 = vmatprep.subr.mxu0 0.0
        %3067 = vmatpush1.msra.mxu0 0.0
        %3068 = vmatprep.subr.mxu0 0.0
        %3069 = vmatpush1.msra.mxu0 0.0
        %3070 = vmatprep.subr.mxu0 0.0
        %3071 = vmatpush1.msra.mxu0 0.0
        %3072 = vmatprep.subr.mxu0 0.0
        %3073 = vmatpush1.msra.mxu0 0.0
        %3074 = vmatprep.subr.mxu0 0.0
        %3075 = vmatpush1.msra.mxu0 0.0
        %3076 = vmatprep.subr.mxu0 0.0
        %3077 = vmatpush1.msra.mxu0 0.0
        %3078 = vmatprep.subr.mxu0 0.0
        %3079 = vmatpush1.msra.mxu0 0.0
        %3080 = vmatprep.mubr.f32.mxu0 0.0
        %v3081 = vand.u32 %v2891, 4294901760
        %3082 = vmatmul.mubr.f32.gmra.mrb[0].mxu0 %v3081
        %v3083 = vpop.f32.mrb[0].mxu0
        %v3084 = vadd.f32 %v2973, %v3083
        %v3085 = vpop.f32.mrb[0].mxu0
        %3086 = vdwg.mxu0
        %3087 = vmatprep.subr.mxu0 0.0
        %v3088 = vand.u32 %v351, 4294901760
        %v3089 = vsub.f32 %v351, %v3088
        %3090 = vmatpush1.msra.mxu0 %v3089
        %3091 = vmatprep.subr.mxu0 0.0
        %v3092 = vand.u32 %v352, 4294901760
        %v3093 = vsub.f32 %v352, %v3092
        %3094 = vmatpush1.msra.mxu0 %v3093
        %3095 = vmatprep.subr.mxu0 0.0
        %v3096 = vand.u32 %v353, 4294901760
        %v3097 = vsub.f32 %v353, %v3096
        %3098 = vmatpush1.msra.mxu0 %v3097
        %3099 = vmatprep.subr.mxu0 0.0
        %v3100 = vand.u32 %v354, 4294901760
        %v3101 = vsub.f32 %v354, %v3100
        %3102 = vmatpush1.msra.mxu0 %v3101
        %3103 = vmatprep.subr.mxu0 0.0
        %v3104 = vand.u32 %v355, 4294901760
        %v3105 = vsub.f32 %v355, %v3104
        %3106 = vmatpush1.msra.mxu0 %v3105
        %3107 = vmatprep.subr.mxu0 0.0
        %v3108 = vand.u32 %v356, 4294901760
        %v3109 = vsub.f32 %v356, %v3108
        %3110 = vmatpush1.msra.mxu0 %v3109
        %3111 = vmatprep.subr.mxu0 0.0
        %v3112 = vand.u32 %v357, 4294901760
        %v3113 = vsub.f32 %v357, %v3112
        %3114 = vmatpush1.msra.mxu0 %v3113
        %3115 = vmatprep.subr.mxu0 0.0
        %v3116 = vand.u32 %v358, 4294901760
        %v3117 = vsub.f32 %v358, %v3116
        %3118 = vmatpush1.msra.mxu0 %v3117
        %3119 = vmatprep.subr.mxu0 0.0
        %3120 = vmatpush1.msra.mxu0 0.0
        %3121 = vmatprep.subr.mxu0 0.0
        %3122 = vmatpush1.msra.mxu0 0.0
        %3123 = vmatprep.subr.mxu0 0.0
        %3124 = vmatpush1.msra.mxu0 0.0
        %3125 = vmatprep.subr.mxu0 0.0
        %3126 = vmatpush1.msra.mxu0 0.0
        %3127 = vmatprep.subr.mxu0 0.0
        %3128 = vmatpush1.msra.mxu0 0.0
        %3129 = vmatprep.subr.mxu0 0.0
        %3130 = vmatpush1.msra.mxu0 0.0
        %3131 = vmatprep.subr.mxu0 0.0
        %3132 = vmatpush1.msra.mxu0 0.0
        %3133 = vmatprep.subr.mxu0 0.0
        %3134 = vmatpush1.msra.mxu0 0.0
        %3135 = vmatprep.subr.mxu0 0.0
        %3136 = vmatpush1.msra.mxu0 0.0
        %3137 = vmatprep.subr.mxu0 0.0
        %3138 = vmatpush1.msra.mxu0 0.0
        %3139 = vmatprep.subr.mxu0 0.0
        %3140 = vmatpush1.msra.mxu0 0.0
        %3141 = vmatprep.subr.mxu0 0.0
        %3142 = vmatpush1.msra.mxu0 0.0
        %3143 = vmatprep.subr.mxu0 0.0
        %3144 = vmatpush1.msra.mxu0 0.0
        %3145 = vmatprep.subr.mxu0 0.0
        %3146 = vmatpush1.msra.mxu0 0.0
        %3147 = vmatprep.subr.mxu0 0.0
        %3148 = vmatpush1.msra.mxu0 0.0
        %3149 = vmatprep.subr.mxu0 0.0
        %3150 = vmatpush1.msra.mxu0 0.0
        %3151 = vmatprep.subr.mxu0 0.0
        %3152 = vmatpush1.msra.mxu0 0.0
        %3153 = vmatprep.subr.mxu0 0.0
        %3154 = vmatpush1.msra.mxu0 0.0
        %3155 = vmatprep.subr.mxu0 0.0
        %3156 = vmatpush1.msra.mxu0 0.0
        %3157 = vmatprep.subr.mxu0 0.0
        %3158 = vmatpush1.msra.mxu0 0.0
        %3159 = vmatprep.subr.mxu0 0.0
        %3160 = vmatpush1.msra.mxu0 0.0
        %3161 = vmatprep.subr.mxu0 0.0
        %3162 = vmatpush1.msra.mxu0 0.0
        %3163 = vmatprep.subr.mxu0 0.0
        %3164 = vmatpush1.msra.mxu0 0.0
        %3165 = vmatprep.subr.mxu0 0.0
        %3166 = vmatpush1.msra.mxu0 0.0
        %3167 = vmatprep.mubr.f32.mxu0 0.0
        %v3168 = vand.u32 %v2891, 4294901760
        %v3169 = vsub.f32 %v2891, %v3168
        %3170 = vmatmul.mubr.f32.gmra.mrb[0].mxu0 %v3169
        %v3171 = vpop.f32.mrb[0].mxu0
        %v3172 = vadd.f32 %v3084, %v3171
        %v3173 = vpop.f32.mrb[0].mxu0
        %3174 = vdwg.mxu0
        %3175 = vmatprep.subr.mxu0 0.0
        %v3176 = vand.u32 %v351, 4294901760
        %3177 = vmatpush1.msra.mxu0 %v3176
        %3178 = vmatprep.subr.mxu0 0.0
        %v3179 = vand.u32 %v352, 4294901760
        %3180 = vmatpush1.msra.mxu0 %v3179
        %3181 = vmatprep.subr.mxu0 0.0
        %v3182 = vand.u32 %v353, 4294901760
        %3183 = vmatpush1.msra.mxu0 %v3182
        %3184 = vmatprep.subr.mxu0 0.0
        %v3185 = vand.u32 %v354, 4294901760
        %3186 = vmatpush1.msra.mxu0 %v3185
        %3187 = vmatprep.subr.mxu0 0.0
        %v3188 = vand.u32 %v355, 4294901760
        %3189 = vmatpush1.msra.mxu0 %v3188
        %3190 = vmatprep.subr.mxu0 0.0
        %v3191 = vand.u32 %v356, 4294901760
        %3192 = vmatpush1.msra.mxu0 %v3191
        %3193 = vmatprep.subr.mxu0 0.0
        %v3194 = vand.u32 %v357, 4294901760
        %3195 = vmatpush1.msra.mxu0 %v3194
        %3196 = vmatprep.subr.mxu0 0.0
        %v3197 = vand.u32 %v358, 4294901760
        %3198 = vmatpush1.msra.mxu0 %v3197
        %3199 = vmatprep.subr.mxu0 0.0
        %3200 = vmatpush1.msra.mxu0 0.0
        %3201 = vmatprep.subr.mxu0 0.0
        %3202 = vmatpush1.msra.mxu0 0.0
        %3203 = vmatprep.subr.mxu0 0.0
        %3204 = vmatpush1.msra.mxu0 0.0
        %3205 = vmatprep.subr.mxu0 0.0
        %3206 = vmatpush1.msra.mxu0 0.0
        %3207 = vmatprep.subr.mxu0 0.0
        %3208 = vmatpush1.msra.mxu0 0.0
        %3209 = vmatprep.subr.mxu0 0.0
        %3210 = vmatpush1.msra.mxu0 0.0
        %3211 = vmatprep.subr.mxu0 0.0
        %3212 = vmatpush1.msra.mxu0 0.0
        %3213 = vmatprep.subr.mxu0 0.0
        %3214 = vmatpush1.msra.mxu0 0.0
        %3215 = vmatprep.subr.mxu0 0.0
        %3216 = vmatpush1.msra.mxu0 0.0
        %3217 = vmatprep.subr.mxu0 0.0
        %3218 = vmatpush1.msra.mxu0 0.0
        %3219 = vmatprep.subr.mxu0 0.0
        %3220 = vmatpush1.msra.mxu0 0.0
        %3221 = vmatprep.subr.mxu0 0.0
        %3222 = vmatpush1.msra.mxu0 0.0
        %3223 = vmatprep.subr.mxu0 0.0
        %3224 = vmatpush1.msra.mxu0 0.0
        %3225 = vmatprep.subr.mxu0 0.0
        %3226 = vmatpush1.msra.mxu0 0.0
        %3227 = vmatprep.subr.mxu0 0.0
        %3228 = vmatpush1.msra.mxu0 0.0
        %3229 = vmatprep.subr.mxu0 0.0
        %3230 = vmatpush1.msra.mxu0 0.0
        %3231 = vmatprep.subr.mxu0 0.0
        %3232 = vmatpush1.msra.mxu0 0.0
        %3233 = vmatprep.subr.mxu0 0.0
        %3234 = vmatpush1.msra.mxu0 0.0
        %3235 = vmatprep.subr.mxu0 0.0
        %3236 = vmatpush1.msra.mxu0 0.0
        %3237 = vmatprep.subr.mxu0 0.0
        %3238 = vmatpush1.msra.mxu0 0.0
        %3239 = vmatprep.subr.mxu0 0.0
        %3240 = vmatpush1.msra.mxu0 0.0
        %3241 = vmatprep.subr.mxu0 0.0
        %3242 = vmatpush1.msra.mxu0 0.0
        %3243 = vmatprep.subr.mxu0 0.0
        %3244 = vmatpush1.msra.mxu0 0.0
        %3245 = vmatprep.subr.mxu0 0.0
        %3246 = vmatpush1.msra.mxu0 0.0
        %3247 = vmatprep.mubr.f32.mxu0 0.0
        %v3248 = vand.u32 %v2891, 4294901760
        %v3249 = vsub.f32 %v2891, %v3248
        %v3250 = vand.u32 %v3249, 4294901760
        %3251 = vmatmul.mubr.f32.gmra.mrb[0].mxu0 %v3250
        %v3252 = vpop.f32.mrb[0].mxu0
        %v3253 = vadd.f32 %v3172, %v3252
        %v3254 = vpop.f32.mrb[0].mxu0
        %3255 = vdwg.mxu0
        %3256 = vmatprep.subr.mxu0 0.0
        %v3257 = vand.u32 %v351, 4294901760
        %v3258 = vsub.f32 %v351, %v3257
        %v3259 = vand.u32 %v3258, 4294901760
        %3260 = vmatpush1.msra.mxu0 %v3259
        %3261 = vmatprep.subr.mxu0 0.0
        %v3262 = vand.u32 %v352, 4294901760
        %v3263 = vsub.f32 %v352, %v3262
        %v3264 = vand.u32 %v3263, 4294901760
        %3265 = vmatpush1.msra.mxu0 %v3264
        %3266 = vmatprep.subr.mxu0 0.0
        %v3267 = vand.u32 %v353, 4294901760
        %v3268 = vsub.f32 %v353, %v3267
        %v3269 = vand.u32 %v3268, 4294901760
        %3270 = vmatpush1.msra.mxu0 %v3269
        %3271 = vmatprep.subr.mxu0 0.0
        %v3272 = vand.u32 %v354, 4294901760
        %v3273 = vsub.f32 %v354, %v3272
        %v3274 = vand.u32 %v3273, 4294901760
        %3275 = vmatpush1.msra.mxu0 %v3274
        %3276 = vmatprep.subr.mxu0 0.0
        %v3277 = vand.u32 %v355, 4294901760
        %v3278 = vsub.f32 %v355, %v3277
        %v3279 = vand.u32 %v3278, 4294901760
        %3280 = vmatpush1.msra.mxu0 %v3279
        %3281 = vmatprep.subr.mxu0 0.0
        %v3282 = vand.u32 %v356, 4294901760
        %v3283 = vsub.f32 %v356, %v3282
        %v3284 = vand.u32 %v3283, 4294901760
        %3285 = vmatpush1.msra.mxu0 %v3284
        %3286 = vmatprep.subr.mxu0 0.0
        %v3287 = vand.u32 %v357, 4294901760
        %v3288 = vsub.f32 %v357, %v3287
        %v3289 = vand.u32 %v3288, 4294901760
        %3290 = vmatpush1.msra.mxu0 %v3289
        %3291 = vmatprep.subr.mxu0 0.0
        %v3292 = vand.u32 %v358, 4294901760
        %v3293 = vsub.f32 %v358, %v3292
        %v3294 = vand.u32 %v3293, 4294901760
        %3295 = vmatpush1.msra.mxu0 %v3294
        %3296 = vmatprep.subr.mxu0 0.0
        %3297 = vmatpush1.msra.mxu0 0.0
        %3298 = vmatprep.subr.mxu0 0.0
        %3299 = vmatpush1.msra.mxu0 0.0
        %3300 = vmatprep.subr.mxu0 0.0
        %3301 = vmatpush1.msra.mxu0 0.0
        %3302 = vmatprep.subr.mxu0 0.0
        %3303 = vmatpush1.msra.mxu0 0.0
        %3304 = vmatprep.subr.mxu0 0.0
        %3305 = vmatpush1.msra.mxu0 0.0
        %3306 = vmatprep.subr.mxu0 0.0
        %3307 = vmatpush1.msra.mxu0 0.0
        %3308 = vmatprep.subr.mxu0 0.0
        %3309 = vmatpush1.msra.mxu0 0.0
        %3310 = vmatprep.subr.mxu0 0.0
        %3311 = vmatpush1.msra.mxu0 0.0
        %3312 = vmatprep.subr.mxu0 0.0
        %3313 = vmatpush1.msra.mxu0 0.0
        %3314 = vmatprep.subr.mxu0 0.0
        %3315 = vmatpush1.msra.mxu0 0.0
        %3316 = vmatprep.subr.mxu0 0.0
        %3317 = vmatpush1.msra.mxu0 0.0
        %3318 = vmatprep.subr.mxu0 0.0
        %3319 = vmatpush1.msra.mxu0 0.0
        %3320 = vmatprep.subr.mxu0 0.0
        %3321 = vmatpush1.msra.mxu0 0.0
        %3322 = vmatprep.subr.mxu0 0.0
        %3323 = vmatpush1.msra.mxu0 0.0
        %3324 = vmatprep.subr.mxu0 0.0
        %3325 = vmatpush1.msra.mxu0 0.0
        %3326 = vmatprep.subr.mxu0 0.0
        %3327 = vmatpush1.msra.mxu0 0.0
        %3328 = vmatprep.subr.mxu0 0.0
        %3329 = vmatpush1.msra.mxu0 0.0
        %3330 = vmatprep.subr.mxu0 0.0
        %3331 = vmatpush1.msra.mxu0 0.0
        %3332 = vmatprep.subr.mxu0 0.0
        %3333 = vmatpush1.msra.mxu0 0.0
        %3334 = vmatprep.subr.mxu0 0.0
        %3335 = vmatpush1.msra.mxu0 0.0
        %3336 = vmatprep.subr.mxu0 0.0
        %3337 = vmatpush1.msra.mxu0 0.0
        %3338 = vmatprep.subr.mxu0 0.0
        %3339 = vmatpush1.msra.mxu0 0.0
        %3340 = vmatprep.subr.mxu0 0.0
        %3341 = vmatpush1.msra.mxu0 0.0
        %3342 = vmatprep.subr.mxu0 0.0
        %3343 = vmatpush1.msra.mxu0 0.0
        %3344 = vmatprep.mubr.f32.mxu0 0.0
        %v3345 = vand.u32 %v2891, 4294901760
        %3346 = vmatmul.mubr.f32.gmra.mrb[0].mxu0 %v3345
        %v3347 = vpop.f32.mrb[0].mxu0
        %v3348 = vadd.f32 %v3253, %v3347
        %v3349 = vpop.f32.mrb[0].mxu0
        %3350 = vdwg.mxu0
        %3351 = vmatprep.subr.mxu0 0.0
        %v3352 = vand.u32 %v351, 4294901760
        %3353 = vmatpush1.msra.mxu0 %v3352
        %3354 = vmatprep.subr.mxu0 0.0
        %v3355 = vand.u32 %v352, 4294901760
        %3356 = vmatpush1.msra.mxu0 %v3355
        %3357 = vmatprep.subr.mxu0 0.0
        %v3358 = vand.u32 %v353, 4294901760
        %3359 = vmatpush1.msra.mxu0 %v3358
        %3360 = vmatprep.subr.mxu0 0.0
        %v3361 = vand.u32 %v354, 4294901760
        %3362 = vmatpush1.msra.mxu0 %v3361
        %3363 = vmatprep.subr.mxu0 0.0
        %v3364 = vand.u32 %v355, 4294901760
        %3365 = vmatpush1.msra.mxu0 %v3364
        %3366 = vmatprep.subr.mxu0 0.0
        %v3367 = vand.u32 %v356, 4294901760
        %3368 = vmatpush1.msra.mxu0 %v3367
        %3369 = vmatprep.subr.mxu0 0.0
        %v3370 = vand.u32 %v357, 4294901760
        %3371 = vmatpush1.msra.mxu0 %v3370
        %3372 = vmatprep.subr.mxu0 0.0
        %v3373 = vand.u32 %v358, 4294901760
        %3374 = vmatpush1.msra.mxu0 %v3373
        %3375 = vmatprep.subr.mxu0 0.0
        %3376 = vmatpush1.msra.mxu0 0.0
        %3377 = vmatprep.subr.mxu0 0.0
        %3378 = vmatpush1.msra.mxu0 0.0
        %3379 = vmatprep.subr.mxu0 0.0
        %3380 = vmatpush1.msra.mxu0 0.0
        %3381 = vmatprep.subr.mxu0 0.0
        %3382 = vmatpush1.msra.mxu0 0.0
        %3383 = vmatprep.subr.mxu0 0.0
        %3384 = vmatpush1.msra.mxu0 0.0
        %3385 = vmatprep.subr.mxu0 0.0
        %3386 = vmatpush1.msra.mxu0 0.0
        %3387 = vmatprep.subr.mxu0 0.0
        %3388 = vmatpush1.msra.mxu0 0.0
        %3389 = vmatprep.subr.mxu0 0.0
        %3390 = vmatpush1.msra.mxu0 0.0
        %3391 = vmatprep.subr.mxu0 0.0
        %3392 = vmatpush1.msra.mxu0 0.0
        %3393 = vmatprep.subr.mxu0 0.0
        %3394 = vmatpush1.msra.mxu0 0.0
        %3395 = vmatprep.subr.mxu0 0.0
        %3396 = vmatpush1.msra.mxu0 0.0
        %3397 = vmatprep.subr.mxu0 0.0
        %3398 = vmatpush1.msra.mxu0 0.0
        %3399 = vmatprep.subr.mxu0 0.0
        %3400 = vmatpush1.msra.mxu0 0.0
        %3401 = vmatprep.subr.mxu0 0.0
        %3402 = vmatpush1.msra.mxu0 0.0
        %3403 = vmatprep.subr.mxu0 0.0
        %3404 = vmatpush1.msra.mxu0 0.0
        %3405 = vmatprep.subr.mxu0 0.0
        %3406 = vmatpush1.msra.mxu0 0.0
        %3407 = vmatprep.subr.mxu0 0.0
        %3408 = vmatpush1.msra.mxu0 0.0
        %3409 = vmatprep.subr.mxu0 0.0
        %3410 = vmatpush1.msra.mxu0 0.0
        %3411 = vmatprep.subr.mxu0 0.0
        %3412 = vmatpush1.msra.mxu0 0.0
        %3413 = vmatprep.subr.mxu0 0.0
        %3414 = vmatpush1.msra.mxu0 0.0
        %3415 = vmatprep.subr.mxu0 0.0
        %3416 = vmatpush1.msra.mxu0 0.0
        %3417 = vmatprep.subr.mxu0 0.0
        %3418 = vmatpush1.msra.mxu0 0.0
        %3419 = vmatprep.subr.mxu0 0.0
        %3420 = vmatpush1.msra.mxu0 0.0
        %3421 = vmatprep.subr.mxu0 0.0
        %3422 = vmatpush1.msra.mxu0 0.0
        %3423 = vmatprep.mubr.f32.mxu0 0.0
        %v3424 = vand.u32 %v2891, 4294901760
        %3425 = vmatmul.mubr.f32.gmra.mrb[0].mxu0 %v3424
        %v3426 = vpop.f32.mrb[0].mxu0
        %v3427 = vadd.f32 %v3348, %v3426
        %v3428 = vpop.f32.mrb[0].mxu0
        %3429 = vdwg.mxu0
        %v3430 = vadd.f32 %v3427, %v360
        %v3431 = vsel %vm367, %v3430, 0.0
        %3432 = vadd.xlane.f32.xlu0 %v3431
        %v3433 = vpop.xlane.xlu0 %3432
        %v3434 = vmul.f32 %v3433, %v2395
        %v3435 = vsub.f32 %v3430, %v3434
        %v3436 = vmul.f32 %v3435, %v3435
        %v3437 = vsel %vm367, %v3436, 0.0
        %3438 = vadd.xlane.f32.xlu0 %v3437
        %v3439 = vpop.xlane.xlu0 %3438
        %v3440 = vmul.f32 %v3439, %v2395
        %v3441 = vadd.f32 %v3440, 1e-05
        %v3442 = vrsqrt.pop %v3441
        %v3443 = vmul.f32 %v3435, %v3442
        %v3444 = vlaneseq
        %v3445 = vshrl.u32 %v3444, 7
        %v3446 = vsub.s32 3, %v3445
        %v3447 = vrot.slane %v359, %v3446
        %v3448 = vmul.f32 %v3443, %v3447
        %v3449 = vlaneseq
        %v3450 = vshrl.u32 %v3449, 7
        %v3451 = vsub.s32 4, %v3450
        %v3452 = vrot.slane %v359, %v3451
        %v3453 = vadd.f32 %v3448, %v3452
        %3454 = vst.msk [vmem:[%s323] sm:$0xff] %vm367, %v3453
        %s3455 = sand.u32 %s225, 1
        %s3456 = scalar_lea.sflag [#allocation3], %s3455
        %s3457 = sand.u32 %s225, 1
        %s3458 = smul.addr %s3457, 8
        %s3459 = scalar_lea.vmem [#allocation2], %s3458
        // Predicated region
        $region57: #{tpu_custom_call.1} parent=55 // pred_check
          %p3460 = pneg %p235
        $region58: #{tpu_custom_call.1} parent=55 // pred_check_branch
          %3462 = sbr.rel (%p3460) target = $region60
        $region59: #{tpu_custom_call.1} parent=55 // pred_region
          %s3464 = ssub.s32 128, 128
          %3465 = vsyncadd %s3456, %s3464
          %s3466 = smul.addr %s23, 128
          %s3467 = scalar_lea.hbm %s9, %s3466
          %s3469 = sshll.u32 %s3459, 4
          %s3470 = int_to_ptr.vmem [resolvable:$true] %s3469
          %3472 = dma.vmem_to_hbm [thread:$0]  %s3470, 128, %s3467, %s3456
        $region60: #{tpu_custom_call.1} parent=55 // pred_fallthru
          _
      $region56: #{tpu_custom_call.1} parent=5 // pred_fallthru
        _
      %p3473 = scmp.le.s32.totalorder 2, %s18
      // Predicated region
      $region61: #{tpu_custom_call.1} parent=5 // pred_check
        %p3474 = pneg %p3473
      $region62: #{tpu_custom_call.1} parent=5 // pred_check_branch
        %3476 = sbr.rel (%p3474) target = $region64
      $region63: #{tpu_custom_call.1} parent=5 // pred_region
        %s3477 = ssub.s32 %s18, 2
        // Predicated region
        $region65: #{tpu_custom_call.1} parent=63 // pred_check
          %p3478 = pneg %p241
        $region66: #{tpu_custom_call.1} parent=63 // pred_check_branch
          %3480 = sbr.rel (%p3478) target = $region68
        $region67: #{tpu_custom_call.1} parent=63 // pred_region
          %s3481 = sand.u32 %s226, 1
          %s3482 = scalar_lea.sflag [#allocation3], %s3481
          %s3483 = sand.u32 %s226, 1
          %s3484 = smul.addr %s3483, 8
          %s3485 = scalar_lea.vmem [#allocation2], %s3484
          %3486 = dma.done %s3482, 128
        $region68: #{tpu_custom_call.1} parent=63 // pred_fallthru
          _
      $region64: #{tpu_custom_call.1} parent=5 // pred_fallthru
        _
    $region6: #{tpu_custom_call.1} parent=1 // loop_footer
      %s22 = sadd.s32 1, %s18
    $region7: #{tpu_custom_call.1} parent=1 // loop_footer_branch
      %17 = sbr.rel target = $region3
    $region8: #{tpu_custom_call.1} parent=1 // loop_exit
      _
    %3487 = vsyncpa [#allocation3], 1
    %s3488 = scalar_lea.sflag [#allocation3], 1
    %3489 = vsyncpa %s3488, 1

</llo_original>
